<compile_context>
chip_gen: v5e
topology: v5e:2x2
jax: 0.10.0
libtpu: 0.0.40
codegen_flags: <defaults>
</compile_context>

<pallas_src>
import numpy as np
import jax
import jax.numpy as jnp
from jax import lax
from jax.experimental import pallas as pl
from jax.experimental.pallas import tpu as pltpu

BN_EPS = 1e-5
IN_C = 250
PAD_C = 256
BLOCK_DIMS = [(IN_C, 128), (128, 64), (64, 32), (32, 16),   # encoder e1..e4
              (16, 32), (32, 64), (64, 128), (128, IN_C)]   # decoder d1..d4
MERGE_WIDTHS = (32, 64, 128)                                 # d1/e3, d2/e2, d3/e1
P_ROWS_PER_BLOCK = 8                                         # [b1,g1,be1,b2,g2,be2,0,0]


def _pad_dim(n):
    return PAD_C if n == IN_C else n


def _make_layout():
    """Static row layout of the packed weight slab (all offsets are x16-aligned)."""
    w_offs, band_offs = [], []
    row = 0
    for (i_c, o_c) in BLOCK_DIMS:
        ip, op = _pad_dim(i_c), _pad_dim(o_c)
        w_offs.append((row, ip, op)); row += ip      # w1  (ip, op)
        w_offs.append((row, op, op)); row += op      # w2  (op, op)
    for C in MERGE_WIDTHS:
        band_offs.append((row, C)); row += C         # Bd  (C, C)
        band_offs.append((row, C)); row += C         # Bs  (C, C)
    return w_offs, band_offs, row


W_OFFS, BAND_OFFS, W_ROWS = _make_layout()


# ---------------------------------------------------------------------------
# the fused forward kernel (one instance per grid step)
# ---------------------------------------------------------------------------
def unet_kernel(x_ref, w_ref, p_ref, o_ref):
    B = x_ref.shape[1]
    x = x_ref[0]                                     # (B, 256) f32

    def linear(h, off, k, n):
        w = w_ref[off:off + k, :n]                   # static slice, bf16 (k, n)
        return jnp.dot(h.astype(jnp.bfloat16), w,
                       preferred_element_type=jnp.float32)

    def prow(r, n):
        # materialize an (B, n) broadcast of one packed param row, once
        return jnp.broadcast_to(p_ref[r:r + 1, :n], (B, n))

    def bn_relu(h, g, be):
        # BatchNorm1d (training mode), robust two-pass variance
        mean = jnp.mean(h, axis=0, keepdims=True)
        xc = h - mean
        var = jnp.mean(xc * xc, axis=0, keepdims=True)
        inv = lax.rsqrt(var + BN_EPS)                # (1, n), EUP
        return jnp.maximum(xc * inv * g + be, 0.0)

    def block(h, bi):
        w1_off, ic, oc = W_OFFS[2 * bi]
        w2_off, _, _ = W_OFFS[2 * bi + 1]
        r = P_ROWS_PER_BLOCK * bi
        h = linear(h, w1_off, ic, oc) + prow(r + 0, oc)          # mlp1 + b1
        h = bn_relu(h, prow(r + 1, oc), prow(r + 2, oc))         # bn1 + relu
        h = linear(h, w2_off, oc, oc) + prow(r + 3, oc)          # mlp2 + b2
        h = bn_relu(h, prow(r + 4, oc), prow(r + 5, oc))         # bn2 + relu
        return h

    def merge(d, skip, mi):
        # Conv1d(2, 1, k=3, padding=1, bias=False) as two banded matmuls;
        # keep the two dots adjacent & summed (MRB-friendly on v7x).
        bd_off, C = BAND_OFFS[2 * mi]
        bs_off, _ = BAND_OFFS[2 * mi + 1]
        bd = w_ref[bd_off:bd_off + C, :C]
        bs = w_ref[bs_off:bs_off + C, :C]
        return (jnp.dot(d.astype(jnp.bfloat16), bd,
                        preferred_element_type=jnp.float32)
                + jnp.dot(skip.astype(jnp.bfloat16), bs,
                          preferred_element_type=jnp.float32))

    # Encoder
    e1 = block(x, 0)
    e2 = block(e1, 1)
    e3 = block(e2, 2)
    e4 = block(e3, 3)

    # Decoder with conv-merged skip connections
    d1 = merge(block(e4, 4), e3, 0)
    d2 = merge(block(d1, 5), e2, 1)
    d3 = merge(block(d2, 6), e1, 2)
    d4 = block(d3, 7)

    # Classifier
    o_ref[0] = jax.nn.sigmoid(d4)


@jax.jit
def build_unet_forward(x, w_slab, p_slab):
    # x: (I, B, 250) — I independent forward passes (instances / microbatches).
    I, B, _ = x.shape
    x_pad = jnp.pad(x, ((0, 0), (0, 0), (0, PAD_C - IN_C)))
    vspec = pl.BlockSpec(memory_space=pltpu.MemorySpace.VMEM)     # whole array
    out = pl.pallas_call(
        unet_kernel,
        out_shape=jax.ShapeDtypeStruct((I, B, PAD_C), jnp.float32),
        grid=(I,),
        in_specs=[pl.BlockSpec((1, B, PAD_C), lambda i: (i, 0, 0)),
                  vspec,      # packed weight slab (resident, block idx constant)
                  vspec],     # packed bias/BN slab
        out_specs=pl.BlockSpec((1, B, PAD_C), lambda i: (i, 0, 0)),
        compiler_params=pltpu.CompilerParams(
            dimension_semantics=("parallel",)),
    )(x_pad, w_slab, p_slab)
    return out[:, :, :IN_C]


# ---------------------------------------------------------------------------
# parameter init (packed slabs for the kernel + unpacked reference params)
# ---------------------------------------------------------------------------
def _banded(C, taps):
    # out[:, j] = taps[0]*in[:, j-1] + taps[1]*in[:, j] + taps[2]*in[:, j+1]
    i = jnp.arange(C)[:, None]
    j = jnp.arange(C)[None, :]
    d = j - i
    return (jnp.where(d == 1, taps[0], 0.0)
            + jnp.where(d == 0, taps[1], 0.0)
            + jnp.where(d == -1, taps[2], 0.0)).astype(jnp.float32)


def _pad_cols(a, n=PAD_C):
    return jnp.pad(a, ((0, 0), (0, n - a.shape[1])))


def init_params(key):
    ref_params = []
    w_pieces, p_pieces = [], []
    for (i_c, o_c) in BLOCK_DIMS:
        key, k1, k2, k3, k4, k5, k6, k7, k8 = jax.random.split(key, 9)
        w1 = jax.random.normal(k1, (i_c, o_c), jnp.float32) / jnp.sqrt(jnp.float32(i_c))
        b1 = 0.01 * jax.random.normal(k2, (o_c,), jnp.float32)
        g1 = 1.0 + 0.1 * jax.random.normal(k3, (o_c,), jnp.float32)
        be1 = 0.05 * jax.random.normal(k4, (o_c,), jnp.float32)
        w2 = jax.random.normal(k5, (o_c, o_c), jnp.float32) / jnp.sqrt(jnp.float32(o_c))
        b2 = 0.01 * jax.random.normal(k6, (o_c,), jnp.float32)
        g2 = 1.0 + 0.1 * jax.random.normal(k7, (o_c,), jnp.float32)
        be2 = 0.05 * jax.random.normal(k8, (o_c,), jnp.float32)
        ref_params.append((w1, b1, g1, be1, w2, b2, g2, be2))

        ip, op = _pad_dim(i_c), _pad_dim(o_c)
        w1p = jnp.pad(w1, ((0, ip - i_c), (0, op - o_c)))
        w2p = jnp.pad(w2, ((0, op - o_c), (0, op - o_c)))
        w_pieces += [_pad_cols(w1p), _pad_cols(w2p)]

        rows = jnp.stack([b1, g1, be1, b2, g2, be2], axis=0)          # (6, o_c)
        rows = jnp.pad(rows, ((0, P_ROWS_PER_BLOCK - 6), (0, PAD_C - o_c)))
        p_pieces.append(rows)                                          # (8, 256), zero-padded lanes

    key, kc = jax.random.split(key)
    conv_w = 0.3 * jax.random.normal(kc, (2, 3), jnp.float32)          # (in_ch=2, k=3)
    for C in MERGE_WIDTHS:
        w_pieces += [_pad_cols(_banded(C, conv_w[0])), _pad_cols(_banded(C, conv_w[1]))]

    w_slab = jnp.concatenate(w_pieces, axis=0).astype(jnp.bfloat16)    # (1888, 256) bf16
    p_slab = jnp.concatenate(p_pieces, axis=0)                         # (64, 256) f32
    assert w_slab.shape == (W_ROWS, PAD_C)
    assert p_slab.shape == (P_ROWS_PER_BLOCK * len(BLOCK_DIMS), PAD_C)
    return key, w_slab, p_slab, ref_params, conv_w


# ---------------------------------------------------------------------------
# pure-JAX reference (mirrors the kernel's bf16 MXU operand precision)
# ---------------------------------------------------------------------------
def _ref_bn_relu(x, g, b):
    m = jnp.mean(x, axis=0, keepdims=True)
    v = jnp.mean((x - m) ** 2, axis=0, keepdims=True)
    return jnp.maximum((x - m) / jnp.sqrt(v + BN_EPS) * g + b, 0.0)


def _ref_block(x, p):
    w1, b1, g1, be1, w2, b2, g2, be2 = p
    h = jnp.dot(x.astype(jnp.bfloat16), w1.astype(jnp.bfloat16),
                preferred_element_type=jnp.float32) + b1
    h = _ref_bn_relu(h, g1, be1)
    h = jnp.dot(h.astype(jnp.bfloat16), w2.astype(jnp.bfloat16),
                preferred_element_type=jnp.float32) + b2
    return _ref_bn_relu(h, g2, be2)


def _ref_conv(d, skip, cw):
    db = d.astype(jnp.bfloat16).astype(jnp.float32)
    sb = skip.astype(jnp.bfloat16).astype(jnp.float32)
    cwb = cw.astype(jnp.bfloat16).astype(jnp.float32)

    def sh(a, dr):
        if dr == 1:
            return jnp.concatenate([jnp.zeros((a.shape[0], 1), a.dtype), a[:, :-1]], axis=1)
        return jnp.concatenate([a[:, 1:], jnp.zeros((a.shape[0], 1), a.dtype)], axis=1)

    return (cwb[0, 0] * sh(db, 1) + cwb[0, 1] * db + cwb[0, 2] * sh(db, -1)
            + cwb[1, 0] * sh(sb, 1) + cwb[1, 1] * sb + cwb[1, 2] * sh(sb, -1))


def reference_forward(x, ref_params, conv_w):
    p = ref_params
    e1 = _ref_block(x, p[0]); e2 = _ref_block(e1, p[1])
    e3 = _ref_block(e2, p[2]); e4 = _ref_block(e3, p[3])
    d1 = _ref_conv(_ref_block(e4, p[4]), e3, conv_w)
    d2 = _ref_conv(_ref_block(d1, p[5]), e2, conv_w)
    d3 = _ref_conv(_ref_block(d2, p[6]), e1, conv_w)
    d4 = _ref_block(d3, p[7])
    return jax.nn.sigmoid(d4)


if __name__ == "__main__":
    key = jax.random.PRNGKey(0)
    key, w_slab, p_slab, ref_params, conv_w = init_params(key)
    key, kx = jax.random.split(key)
    # 2 independent instances (megacore-parallel on v7x), batch=8, features=250
    x = jax.random.normal(kx, (2, 8, IN_C), jnp.float32)

    y = jax.block_until_ready(build_unet_forward(x, w_slab, p_slab))
    y_ref = jnp.stack([reference_forward(x[i], ref_params, conv_w)
                       for i in range(x.shape[0])])
    y_ref = jax.block_until_ready(y_ref)
    np.testing.assert_allclose(np.asarray(y), np.asarray(y_ref), rtol=1e-2, atol=1e-2)

    print("KERNEL_OK")
</pallas_src>

<mosaic_0001>
module attributes {stable_mosaic.version = 11 : i64} {
  func.func @unet_kernel(%arg0: i32, %arg1: memref<1x8x256xf32, #tpu.memory_space<vmem>>, %arg2: memref<1888x256xbf16, #tpu.memory_space<vmem>>, %arg3: memref<64x256xf32, #tpu.memory_space<vmem>>, %arg4: memref<1x8x256xf32, #tpu.memory_space<vmem>>) attributes {dimension_semantics = [#tpu.dimension_semantics<parallel>], iteration_bounds = array<i64: 2>, scalar_prefetch = 0 : i64, scratch_operands = 0 : i64, tpu.core_type = #tpu.core_type<tc>, window_params = [{transform_indices = @transform_0, window_bounds = array<i64: 1, 8, 256>}, {pipeline_mode = #tpu.pipeline_mode<synchronous>, transform_indices = @transform_1, window_bounds = array<i64: 1888, 256>}, {pipeline_mode = #tpu.pipeline_mode<synchronous>, transform_indices = @transform_2, window_bounds = array<i64: 64, 256>}, {transform_indices = @transform_3, window_bounds = array<i64: 1, 8, 256>}]} {
    %c0 = arith.constant 0 : index
    %c0_0 = arith.constant 0 : index
    %c0_1 = arith.constant 0 : index
    %0 = vector.load %arg1[%c0, %c0_0, %c0_1] : memref<1x8x256xf32, #tpu.memory_space<vmem>>, vector<1x8x256xf32>
    %1 = vector.shape_cast %0 : vector<1x8x256xf32> to vector<8x256xf32>
    %c0_2 = arith.constant 0 : index
    %c0_3 = arith.constant 0 : index
    %2 = vector.load %arg2[%c0_2, %c0_3] : memref<1888x256xbf16, #tpu.memory_space<vmem>>, vector<256x128xbf16>
    %3 = arith.truncf %1 : vector<8x256xf32> to vector<8x256xbf16>
    %cst = arith.constant dense<0.000000e+00> : vector<8x128xf32>
    %4 = tpu.matmul %3, %2, %cst {dimension_numbers = #tpu.dot_dimension_numbers<[1], [0], [0], [1], [0, 0, 1, 1], [], []>} : vector<8x256xbf16>, vector<256x128xbf16>, vector<8x128xf32> -> vector<8x128xf32>
    %c0_4 = arith.constant 0 : index
    %c0_5 = arith.constant 0 : index
    %5 = vector.load %arg3[%c0_4, %c0_5] : memref<64x256xf32, #tpu.memory_space<vmem>>, vector<1x128xf32>
    %6 = vector.shape_cast %5 : vector<1x128xf32> to vector<1x128xf32>
    %7 = vector.broadcast %6 : vector<1x128xf32> to vector<8x128xf32>
    %8 = arith.addf %4, %7 : vector<8x128xf32>
    %c1 = arith.constant 1 : index
    %c0_6 = arith.constant 0 : index
    %9 = vector.load %arg3[%c1, %c0_6] : memref<64x256xf32, #tpu.memory_space<vmem>>, vector<1x128xf32>
    %10 = vector.shape_cast %9 : vector<1x128xf32> to vector<1x128xf32>
    %11 = vector.broadcast %10 : vector<1x128xf32> to vector<8x128xf32>
    %c2 = arith.constant 2 : index
    %c0_7 = arith.constant 0 : index
    %12 = vector.load %arg3[%c2, %c0_7] : memref<64x256xf32, #tpu.memory_space<vmem>>, vector<1x128xf32>
    %13 = vector.shape_cast %12 : vector<1x128xf32> to vector<1x128xf32>
    %14 = vector.broadcast %13 : vector<1x128xf32> to vector<8x128xf32>
    %cst_8 = arith.constant dense<0.000000e+00> : vector<128xf32>
    %15 = vector.multi_reduction <add>, %8, %cst_8 [0] : vector<8x128xf32> to vector<128xf32>
    %16 = vector.shape_cast %15 : vector<128xf32> to vector<1x128xf32>
    %cst_9 = arith.constant 8.000000e+00 : f32
    %17 = vector.broadcast %cst_9 : f32 to vector<1x128xf32>
    %18 = arith.divf %16, %17 : vector<1x128xf32>
    %19 = vector.broadcast %18 : vector<1x128xf32> to vector<8x128xf32>
    %20 = arith.subf %8, %19 : vector<8x128xf32>
    %21 = arith.mulf %20, %20 : vector<8x128xf32>
    %cst_10 = arith.constant dense<0.000000e+00> : vector<128xf32>
    %22 = vector.multi_reduction <add>, %21, %cst_10 [0] : vector<8x128xf32> to vector<128xf32>
    %23 = vector.shape_cast %22 : vector<128xf32> to vector<1x128xf32>
    %cst_11 = arith.constant 8.000000e+00 : f32
    %24 = vector.broadcast %cst_11 : f32 to vector<1x128xf32>
    %25 = arith.divf %23, %24 : vector<1x128xf32>
    %cst_12 = arith.constant 9.99999974E-6 : f32
    %26 = vector.broadcast %cst_12 : f32 to vector<1x128xf32>
    %27 = arith.addf %25, %26 : vector<1x128xf32>
    %28 = math.rsqrt %27 : vector<1x128xf32>
    %29 = vector.broadcast %28 : vector<1x128xf32> to vector<8x128xf32>
    %30 = arith.mulf %20, %29 : vector<8x128xf32>
    %31 = arith.mulf %30, %11 : vector<8x128xf32>
    %32 = arith.addf %31, %14 : vector<8x128xf32>
    %cst_13 = arith.constant 0.000000e+00 : f32
    %33 = vector.broadcast %cst_13 : f32 to vector<8x128xf32>
    %34 = arith.maximumf %32, %33 : vector<8x128xf32>
    %c256 = arith.constant 256 : index
    %c0_14 = arith.constant 0 : index
    %35 = vector.load %arg2[%c256, %c0_14] : memref<1888x256xbf16, #tpu.memory_space<vmem>>, vector<128x128xbf16>
    %36 = arith.truncf %34 : vector<8x128xf32> to vector<8x128xbf16>
    %cst_15 = arith.constant dense<0.000000e+00> : vector<8x128xf32>
    %37 = tpu.matmul %36, %35, %cst_15 {dimension_numbers = #tpu.dot_dimension_numbers<[1], [0], [0], [1], [0, 0, 1, 1], [], []>} : vector<8x128xbf16>, vector<128x128xbf16>, vector<8x128xf32> -> vector<8x128xf32>
    %c3 = arith.constant 3 : index
    %c0_16 = arith.constant 0 : index
    %38 = vector.load %arg3[%c3, %c0_16] : memref<64x256xf32, #tpu.memory_space<vmem>>, vector<1x128xf32>
    %39 = vector.shape_cast %38 : vector<1x128xf32> to vector<1x128xf32>
    %40 = vector.broadcast %39 : vector<1x128xf32> to vector<8x128xf32>
    %41 = arith.addf %37, %40 : vector<8x128xf32>
    %c4 = arith.constant 4 : index
    %c0_17 = arith.constant 0 : index
    %42 = vector.load %arg3[%c4, %c0_17] : memref<64x256xf32, #tpu.memory_space<vmem>>, vector<1x128xf32>
    %43 = vector.shape_cast %42 : vector<1x128xf32> to vector<1x128xf32>
    %44 = vector.broadcast %43 : vector<1x128xf32> to vector<8x128xf32>
    %c5 = arith.constant 5 : index
    %c0_18 = arith.constant 0 : index
    %45 = vector.load %arg3[%c5, %c0_18] : memref<64x256xf32, #tpu.memory_space<vmem>>, vector<1x128xf32>
    %46 = vector.shape_cast %45 : vector<1x128xf32> to vector<1x128xf32>
    %47 = vector.broadcast %46 : vector<1x128xf32> to vector<8x128xf32>
    %cst_19 = arith.constant dense<0.000000e+00> : vector<128xf32>
    %48 = vector.multi_reduction <add>, %41, %cst_19 [0] : vector<8x128xf32> to vector<128xf32>
    %49 = vector.shape_cast %48 : vector<128xf32> to vector<1x128xf32>
    %cst_20 = arith.constant 8.000000e+00 : f32
    %50 = vector.broadcast %cst_20 : f32 to vector<1x128xf32>
    %51 = arith.divf %49, %50 : vector<1x128xf32>
    %52 = vector.broadcast %51 : vector<1x128xf32> to vector<8x128xf32>
    %53 = arith.subf %41, %52 : vector<8x128xf32>
    %54 = arith.mulf %53, %53 : vector<8x128xf32>
    %cst_21 = arith.constant dense<0.000000e+00> : vector<128xf32>
    %55 = vector.multi_reduction <add>, %54, %cst_21 [0] : vector<8x128xf32> to vector<128xf32>
    %56 = vector.shape_cast %55 : vector<128xf32> to vector<1x128xf32>
    %cst_22 = arith.constant 8.000000e+00 : f32
    %57 = vector.broadcast %cst_22 : f32 to vector<1x128xf32>
    %58 = arith.divf %56, %57 : vector<1x128xf32>
    %cst_23 = arith.constant 9.99999974E-6 : f32
    %59 = vector.broadcast %cst_23 : f32 to vector<1x128xf32>
    %60 = arith.addf %58, %59 : vector<1x128xf32>
    %61 = math.rsqrt %60 : vector<1x128xf32>
    %62 = vector.broadcast %61 : vector<1x128xf32> to vector<8x128xf32>
    %63 = arith.mulf %53, %62 : vector<8x128xf32>
    %64 = arith.mulf %63, %44 : vector<8x128xf32>
    %65 = arith.addf %64, %47 : vector<8x128xf32>
    %cst_24 = arith.constant 0.000000e+00 : f32
    %66 = vector.broadcast %cst_24 : f32 to vector<8x128xf32>
    %67 = arith.maximumf %65, %66 : vector<8x128xf32>
    %c384 = arith.constant 384 : index
    %c0_25 = arith.constant 0 : index
    %68 = vector.load %arg2[%c384, %c0_25] : memref<1888x256xbf16, #tpu.memory_space<vmem>>, vector<128x64xbf16>
    %69 = arith.truncf %67 : vector<8x128xf32> to vector<8x128xbf16>
    %cst_26 = arith.constant dense<0.000000e+00> : vector<8x64xf32>
    %70 = tpu.matmul %69, %68, %cst_26 {dimension_numbers = #tpu.dot_dimension_numbers<[1], [0], [0], [1], [0, 0, 1, 1], [], []>} : vector<8x128xbf16>, vector<128x64xbf16>, vector<8x64xf32> -> vector<8x64xf32>
    %c8 = arith.constant 8 : index
    %c0_27 = arith.constant 0 : index
    %71 = vector.load %arg3[%c8, %c0_27] : memref<64x256xf32, #tpu.memory_space<vmem>>, vector<1x64xf32>
    %72 = vector.shape_cast %71 : vector<1x64xf32> to vector<1x64xf32>
    %73 = vector.broadcast %72 : vector<1x64xf32> to vector<8x64xf32>
    %74 = arith.addf %70, %73 : vector<8x64xf32>
    %c9 = arith.constant 9 : index
    %c0_28 = arith.constant 0 : index
    %75 = vector.load %arg3[%c9, %c0_28] : memref<64x256xf32, #tpu.memory_space<vmem>>, vector<1x64xf32>
    %76 = vector.shape_cast %75 : vector<1x64xf32> to vector<1x64xf32>
    %77 = vector.broadcast %76 : vector<1x64xf32> to vector<8x64xf32>
    %c10 = arith.constant 10 : index
    %c0_29 = arith.constant 0 : index
    %78 = vector.load %arg3[%c10, %c0_29] : memref<64x256xf32, #tpu.memory_space<vmem>>, vector<1x64xf32>
    %79 = vector.shape_cast %78 : vector<1x64xf32> to vector<1x64xf32>
    %80 = vector.broadcast %79 : vector<1x64xf32> to vector<8x64xf32>
    %cst_30 = arith.constant dense<0.000000e+00> : vector<64xf32>
    %81 = vector.multi_reduction <add>, %74, %cst_30 [0] : vector<8x64xf32> to vector<64xf32>
    %82 = vector.shape_cast %81 : vector<64xf32> to vector<1x64xf32>
    %cst_31 = arith.constant 8.000000e+00 : f32
    %83 = vector.broadcast %cst_31 : f32 to vector<1x64xf32>
    %84 = arith.divf %82, %83 : vector<1x64xf32>
    %85 = vector.broadcast %84 : vector<1x64xf32> to vector<8x64xf32>
    %86 = arith.subf %74, %85 : vector<8x64xf32>
    %87 = arith.mulf %86, %86 : vector<8x64xf32>
    %cst_32 = arith.constant dense<0.000000e+00> : vector<64xf32>
    %88 = vector.multi_reduction <add>, %87, %cst_32 [0] : vector<8x64xf32> to vector<64xf32>
    %89 = vector.shape_cast %88 : vector<64xf32> to vector<1x64xf32>
    %cst_33 = arith.constant 8.000000e+00 : f32
    %90 = vector.broadcast %cst_33 : f32 to vector<1x64xf32>
    %91 = arith.divf %89, %90 : vector<1x64xf32>
    %cst_34 = arith.constant 9.99999974E-6 : f32
    %92 = vector.broadcast %cst_34 : f32 to vector<1x64xf32>
    %93 = arith.addf %91, %92 : vector<1x64xf32>
    %94 = math.rsqrt %93 : vector<1x64xf32>
    %95 = vector.broadcast %94 : vector<1x64xf32> to vector<8x64xf32>
    %96 = arith.mulf %86, %95 : vector<8x64xf32>
    %97 = arith.mulf %96, %77 : vector<8x64xf32>
    %98 = arith.addf %97, %80 : vector<8x64xf32>
    %cst_35 = arith.constant 0.000000e+00 : f32
    %99 = vector.broadcast %cst_35 : f32 to vector<8x64xf32>
    %100 = arith.maximumf %98, %99 : vector<8x64xf32>
    %c512 = arith.constant 512 : index
    %c0_36 = arith.constant 0 : index
    %101 = vector.load %arg2[%c512, %c0_36] : memref<1888x256xbf16, #tpu.memory_space<vmem>>, vector<64x64xbf16>
    %102 = arith.truncf %100 : vector<8x64xf32> to vector<8x64xbf16>
    %cst_37 = arith.constant dense<0.000000e+00> : vector<8x64xf32>
    %103 = tpu.matmul %102, %101, %cst_37 {dimension_numbers = #tpu.dot_dimension_numbers<[1], [0], [0], [1], [0, 0, 1, 1], [], []>} : vector<8x64xbf16>, vector<64x64xbf16>, vector<8x64xf32> -> vector<8x64xf32>
    %c11 = arith.constant 11 : index
    %c0_38 = arith.constant 0 : index
    %104 = vector.load %arg3[%c11, %c0_38] : memref<64x256xf32, #tpu.memory_space<vmem>>, vector<1x64xf32>
    %105 = vector.shape_cast %104 : vector<1x64xf32> to vector<1x64xf32>
    %106 = vector.broadcast %105 : vector<1x64xf32> to vector<8x64xf32>
    %107 = arith.addf %103, %106 : vector<8x64xf32>
    %c12 = arith.constant 12 : index
    %c0_39 = arith.constant 0 : index
    %108 = vector.load %arg3[%c12, %c0_39] : memref<64x256xf32, #tpu.memory_space<vmem>>, vector<1x64xf32>
    %109 = vector.shape_cast %108 : vector<1x64xf32> to vector<1x64xf32>
    %110 = vector.broadcast %109 : vector<1x64xf32> to vector<8x64xf32>
    %c13 = arith.constant 13 : index
    %c0_40 = arith.constant 0 : index
    %111 = vector.load %arg3[%c13, %c0_40] : memref<64x256xf32, #tpu.memory_space<vmem>>, vector<1x64xf32>
    %112 = vector.shape_cast %111 : vector<1x64xf32> to vector<1x64xf32>
    %113 = vector.broadcast %112 : vector<1x64xf32> to vector<8x64xf32>
    %cst_41 = arith.constant dense<0.000000e+00> : vector<64xf32>
    %114 = vector.multi_reduction <add>, %107, %cst_41 [0] : vector<8x64xf32> to vector<64xf32>
    %115 = vector.shape_cast %114 : vector<64xf32> to vector<1x64xf32>
    %cst_42 = arith.constant 8.000000e+00 : f32
    %116 = vector.broadcast %cst_42 : f32 to vector<1x64xf32>
    %117 = arith.divf %115, %116 : vector<1x64xf32>
    %118 = vector.broadcast %117 : vector<1x64xf32> to vector<8x64xf32>
    %119 = arith.subf %107, %118 : vector<8x64xf32>
    %120 = arith.mulf %119, %119 : vector<8x64xf32>
    %cst_43 = arith.constant dense<0.000000e+00> : vector<64xf32>
    %121 = vector.multi_reduction <add>, %120, %cst_43 [0] : vector<8x64xf32> to vector<64xf32>
    %122 = vector.shape_cast %121 : vector<64xf32> to vector<1x64xf32>
    %cst_44 = arith.constant 8.000000e+00 : f32
    %123 = vector.broadcast %cst_44 : f32 to vector<1x64xf32>
    %124 = arith.divf %122, %123 : vector<1x64xf32>
    %cst_45 = arith.constant 9.99999974E-6 : f32
    %125 = vector.broadcast %cst_45 : f32 to vector<1x64xf32>
    %126 = arith.addf %124, %125 : vector<1x64xf32>
    %127 = math.rsqrt %126 : vector<1x64xf32>
    %128 = vector.broadcast %127 : vector<1x64xf32> to vector<8x64xf32>
    %129 = arith.mulf %119, %128 : vector<8x64xf32>
    %130 = arith.mulf %129, %110 : vector<8x64xf32>
    %131 = arith.addf %130, %113 : vector<8x64xf32>
    %cst_46 = arith.constant 0.000000e+00 : f32
    %132 = vector.broadcast %cst_46 : f32 to vector<8x64xf32>
    %133 = arith.maximumf %131, %132 : vector<8x64xf32>
    %c576 = arith.constant 576 : index
    %c0_47 = arith.constant 0 : index
    %134 = vector.load %arg2[%c576, %c0_47] : memref<1888x256xbf16, #tpu.memory_space<vmem>>, vector<64x32xbf16>
    %135 = arith.truncf %133 : vector<8x64xf32> to vector<8x64xbf16>
    %cst_48 = arith.constant dense<0.000000e+00> : vector<8x32xf32>
    %136 = tpu.matmul %135, %134, %cst_48 {dimension_numbers = #tpu.dot_dimension_numbers<[1], [0], [0], [1], [0, 0, 1, 1], [], []>} : vector<8x64xbf16>, vector<64x32xbf16>, vector<8x32xf32> -> vector<8x32xf32>
    %c16 = arith.constant 16 : index
    %c0_49 = arith.constant 0 : index
    %137 = vector.load %arg3[%c16, %c0_49] : memref<64x256xf32, #tpu.memory_space<vmem>>, vector<1x32xf32>
    %138 = vector.shape_cast %137 : vector<1x32xf32> to vector<1x32xf32>
    %139 = vector.broadcast %138 : vector<1x32xf32> to vector<8x32xf32>
    %140 = arith.addf %136, %139 : vector<8x32xf32>
    %c17 = arith.constant 17 : index
    %c0_50 = arith.constant 0 : index
    %141 = vector.load %arg3[%c17, %c0_50] : memref<64x256xf32, #tpu.memory_space<vmem>>, vector<1x32xf32>
    %142 = vector.shape_cast %141 : vector<1x32xf32> to vector<1x32xf32>
    %143 = vector.broadcast %142 : vector<1x32xf32> to vector<8x32xf32>
    %c18 = arith.constant 18 : index
    %c0_51 = arith.constant 0 : index
    %144 = vector.load %arg3[%c18, %c0_51] : memref<64x256xf32, #tpu.memory_space<vmem>>, vector<1x32xf32>
    %145 = vector.shape_cast %144 : vector<1x32xf32> to vector<1x32xf32>
    %146 = vector.broadcast %145 : vector<1x32xf32> to vector<8x32xf32>
    %cst_52 = arith.constant dense<0.000000e+00> : vector<32xf32>
    %147 = vector.multi_reduction <add>, %140, %cst_52 [0] : vector<8x32xf32> to vector<32xf32>
    %148 = vector.shape_cast %147 : vector<32xf32> to vector<1x32xf32>
    %cst_53 = arith.constant 8.000000e+00 : f32
    %149 = vector.broadcast %cst_53 : f32 to vector<1x32xf32>
    %150 = arith.divf %148, %149 : vector<1x32xf32>
    %151 = vector.broadcast %150 : vector<1x32xf32> to vector<8x32xf32>
    %152 = arith.subf %140, %151 : vector<8x32xf32>
    %153 = arith.mulf %152, %152 : vector<8x32xf32>
    %cst_54 = arith.constant dense<0.000000e+00> : vector<32xf32>
    %154 = vector.multi_reduction <add>, %153, %cst_54 [0] : vector<8x32xf32> to vector<32xf32>
    %155 = vector.shape_cast %154 : vector<32xf32> to vector<1x32xf32>
    %cst_55 = arith.constant 8.000000e+00 : f32
    %156 = vector.broadcast %cst_55 : f32 to vector<1x32xf32>
    %157 = arith.divf %155, %156 : vector<1x32xf32>
    %cst_56 = arith.constant 9.99999974E-6 : f32
    %158 = vector.broadcast %cst_56 : f32 to vector<1x32xf32>
    %159 = arith.addf %157, %158 : vector<1x32xf32>
    %160 = math.rsqrt %159 : vector<1x32xf32>
    %161 = vector.broadcast %160 : vector<1x32xf32> to vector<8x32xf32>
    %162 = arith.mulf %152, %161 : vector<8x32xf32>
    %163 = arith.mulf %162, %143 : vector<8x32xf32>
    %164 = arith.addf %163, %146 : vector<8x32xf32>
    %cst_57 = arith.constant 0.000000e+00 : f32
    %165 = vector.broadcast %cst_57 : f32 to vector<8x32xf32>
    %166 = arith.maximumf %164, %165 : vector<8x32xf32>
    %c640 = arith.constant 640 : index
    %c0_58 = arith.constant 0 : index
    %167 = vector.load %arg2[%c640, %c0_58] : memref<1888x256xbf16, #tpu.memory_space<vmem>>, vector<32x32xbf16>
    %168 = arith.truncf %166 : vector<8x32xf32> to vector<8x32xbf16>
    %cst_59 = arith.constant dense<0.000000e+00> : vector<8x32xf32>
    %169 = tpu.matmul %168, %167, %cst_59 {dimension_numbers = #tpu.dot_dimension_numbers<[1], [0], [0], [1], [0, 0, 1, 1], [], []>} : vector<8x32xbf16>, vector<32x32xbf16>, vector<8x32xf32> -> vector<8x32xf32>
    %c19 = arith.constant 19 : index
    %c0_60 = arith.constant 0 : index
    %170 = vector.load %arg3[%c19, %c0_60] : memref<64x256xf32, #tpu.memory_space<vmem>>, vector<1x32xf32>
    %171 = vector.shape_cast %170 : vector<1x32xf32> to vector<1x32xf32>
    %172 = vector.broadcast %171 : vector<1x32xf32> to vector<8x32xf32>
    %173 = arith.addf %169, %172 : vector<8x32xf32>
    %c20 = arith.constant 20 : index
    %c0_61 = arith.constant 0 : index
    %174 = vector.load %arg3[%c20, %c0_61] : memref<64x256xf32, #tpu.memory_space<vmem>>, vector<1x32xf32>
    %175 = vector.shape_cast %174 : vector<1x32xf32> to vector<1x32xf32>
    %176 = vector.broadcast %175 : vector<1x32xf32> to vector<8x32xf32>
    %c21 = arith.constant 21 : index
    %c0_62 = arith.constant 0 : index
    %177 = vector.load %arg3[%c21, %c0_62] : memref<64x256xf32, #tpu.memory_space<vmem>>, vector<1x32xf32>
    %178 = vector.shape_cast %177 : vector<1x32xf32> to vector<1x32xf32>
    %179 = vector.broadcast %178 : vector<1x32xf32> to vector<8x32xf32>
    %cst_63 = arith.constant dense<0.000000e+00> : vector<32xf32>
    %180 = vector.multi_reduction <add>, %173, %cst_63 [0] : vector<8x32xf32> to vector<32xf32>
    %181 = vector.shape_cast %180 : vector<32xf32> to vector<1x32xf32>
    %cst_64 = arith.constant 8.000000e+00 : f32
    %182 = vector.broadcast %cst_64 : f32 to vector<1x32xf32>
    %183 = arith.divf %181, %182 : vector<1x32xf32>
    %184 = vector.broadcast %183 : vector<1x32xf32> to vector<8x32xf32>
    %185 = arith.subf %173, %184 : vector<8x32xf32>
    %186 = arith.mulf %185, %185 : vector<8x32xf32>
    %cst_65 = arith.constant dense<0.000000e+00> : vector<32xf32>
    %187 = vector.multi_reduction <add>, %186, %cst_65 [0] : vector<8x32xf32> to vector<32xf32>
    %188 = vector.shape_cast %187 : vector<32xf32> to vector<1x32xf32>
    %cst_66 = arith.constant 8.000000e+00 : f32
    %189 = vector.broadcast %cst_66 : f32 to vector<1x32xf32>
    %190 = arith.divf %188, %189 : vector<1x32xf32>
    %cst_67 = arith.constant 9.99999974E-6 : f32
    %191 = vector.broadcast %cst_67 : f32 to vector<1x32xf32>
    %192 = arith.addf %190, %191 : vector<1x32xf32>
    %193 = math.rsqrt %192 : vector<1x32xf32>
    %194 = vector.broadcast %193 : vector<1x32xf32> to vector<8x32xf32>
    %195 = arith.mulf %185, %194 : vector<8x32xf32>
    %196 = arith.mulf %195, %176 : vector<8x32xf32>
    %197 = arith.addf %196, %179 : vector<8x32xf32>
    %cst_68 = arith.constant 0.000000e+00 : f32
    %198 = vector.broadcast %cst_68 : f32 to vector<8x32xf32>
    %199 = arith.maximumf %197, %198 : vector<8x32xf32>
    %c672 = arith.constant 672 : index
    %c0_69 = arith.constant 0 : index
    %200 = vector.load %arg2[%c672, %c0_69] : memref<1888x256xbf16, #tpu.memory_space<vmem>>, vector<32x16xbf16>
    %201 = arith.truncf %199 : vector<8x32xf32> to vector<8x32xbf16>
    %cst_70 = arith.constant dense<0.000000e+00> : vector<8x16xf32>
    %202 = tpu.matmul %201, %200, %cst_70 {dimension_numbers = #tpu.dot_dimension_numbers<[1], [0], [0], [1], [0, 0, 1, 1], [], []>} : vector<8x32xbf16>, vector<32x16xbf16>, vector<8x16xf32> -> vector<8x16xf32>
    %c24 = arith.constant 24 : index
    %c0_71 = arith.constant 0 : index
    %203 = vector.load %arg3[%c24, %c0_71] : memref<64x256xf32, #tpu.memory_space<vmem>>, vector<1x16xf32>
    %204 = vector.shape_cast %203 : vector<1x16xf32> to vector<1x16xf32>
    %205 = vector.broadcast %204 : vector<1x16xf32> to vector<8x16xf32>
    %206 = arith.addf %202, %205 : vector<8x16xf32>
    %c25 = arith.constant 25 : index
    %c0_72 = arith.constant 0 : index
    %207 = vector.load %arg3[%c25, %c0_72] : memref<64x256xf32, #tpu.memory_space<vmem>>, vector<1x16xf32>
    %208 = vector.shape_cast %207 : vector<1x16xf32> to vector<1x16xf32>
    %209 = vector.broadcast %208 : vector<1x16xf32> to vector<8x16xf32>
    %c26 = arith.constant 26 : index
    %c0_73 = arith.constant 0 : index
    %210 = vector.load %arg3[%c26, %c0_73] : memref<64x256xf32, #tpu.memory_space<vmem>>, vector<1x16xf32>
    %211 = vector.shape_cast %210 : vector<1x16xf32> to vector<1x16xf32>
    %212 = vector.broadcast %211 : vector<1x16xf32> to vector<8x16xf32>
    %cst_74 = arith.constant dense<0.000000e+00> : vector<16xf32>
    %213 = vector.multi_reduction <add>, %206, %cst_74 [0] : vector<8x16xf32> to vector<16xf32>
    %214 = vector.shape_cast %213 : vector<16xf32> to vector<1x16xf32>
    %cst_75 = arith.constant 8.000000e+00 : f32
    %215 = vector.broadcast %cst_75 : f32 to vector<1x16xf32>
    %216 = arith.divf %214, %215 : vector<1x16xf32>
    %217 = vector.broadcast %216 : vector<1x16xf32> to vector<8x16xf32>
    %218 = arith.subf %206, %217 : vector<8x16xf32>
    %219 = arith.mulf %218, %218 : vector<8x16xf32>
    %cst_76 = arith.constant dense<0.000000e+00> : vector<16xf32>
    %220 = vector.multi_reduction <add>, %219, %cst_76 [0] : vector<8x16xf32> to vector<16xf32>
    %221 = vector.shape_cast %220 : vector<16xf32> to vector<1x16xf32>
    %cst_77 = arith.constant 8.000000e+00 : f32
    %222 = vector.broadcast %cst_77 : f32 to vector<1x16xf32>
    %223 = arith.divf %221, %222 : vector<1x16xf32>
    %cst_78 = arith.constant 9.99999974E-6 : f32
    %224 = vector.broadcast %cst_78 : f32 to vector<1x16xf32>
    %225 = arith.addf %223, %224 : vector<1x16xf32>
    %226 = math.rsqrt %225 : vector<1x16xf32>
    %227 = vector.broadcast %226 : vector<1x16xf32> to vector<8x16xf32>
    %228 = arith.mulf %218, %227 : vector<8x16xf32>
    %229 = arith.mulf %228, %209 : vector<8x16xf32>
    %230 = arith.addf %229, %212 : vector<8x16xf32>
    %cst_79 = arith.constant 0.000000e+00 : f32
    %231 = vector.broadcast %cst_79 : f32 to vector<8x16xf32>
    %232 = arith.maximumf %230, %231 : vector<8x16xf32>
    %c704 = arith.constant 704 : index
    %c0_80 = arith.constant 0 : index
    %233 = vector.load %arg2[%c704, %c0_80] : memref<1888x256xbf16, #tpu.memory_space<vmem>>, vector<16x16xbf16>
    %234 = arith.truncf %232 : vector<8x16xf32> to vector<8x16xbf16>
    %cst_81 = arith.constant dense<0.000000e+00> : vector<8x16xf32>
    %235 = tpu.matmul %234, %233, %cst_81 {dimension_numbers = #tpu.dot_dimension_numbers<[1], [0], [0], [1], [0, 0, 1, 1], [], []>} : vector<8x16xbf16>, vector<16x16xbf16>, vector<8x16xf32> -> vector<8x16xf32>
    %c27 = arith.constant 27 : index
    %c0_82 = arith.constant 0 : index
    %236 = vector.load %arg3[%c27, %c0_82] : memref<64x256xf32, #tpu.memory_space<vmem>>, vector<1x16xf32>
    %237 = vector.shape_cast %236 : vector<1x16xf32> to vector<1x16xf32>
    %238 = vector.broadcast %237 : vector<1x16xf32> to vector<8x16xf32>
    %239 = arith.addf %235, %238 : vector<8x16xf32>
    %c28 = arith.constant 28 : index
    %c0_83 = arith.constant 0 : index
    %240 = vector.load %arg3[%c28, %c0_83] : memref<64x256xf32, #tpu.memory_space<vmem>>, vector<1x16xf32>
    %241 = vector.shape_cast %240 : vector<1x16xf32> to vector<1x16xf32>
    %242 = vector.broadcast %241 : vector<1x16xf32> to vector<8x16xf32>
    %c29 = arith.constant 29 : index
    %c0_84 = arith.constant 0 : index
    %243 = vector.load %arg3[%c29, %c0_84] : memref<64x256xf32, #tpu.memory_space<vmem>>, vector<1x16xf32>
    %244 = vector.shape_cast %243 : vector<1x16xf32> to vector<1x16xf32>
    %245 = vector.broadcast %244 : vector<1x16xf32> to vector<8x16xf32>
    %cst_85 = arith.constant dense<0.000000e+00> : vector<16xf32>
    %246 = vector.multi_reduction <add>, %239, %cst_85 [0] : vector<8x16xf32> to vector<16xf32>
    %247 = vector.shape_cast %246 : vector<16xf32> to vector<1x16xf32>
    %cst_86 = arith.constant 8.000000e+00 : f32
    %248 = vector.broadcast %cst_86 : f32 to vector<1x16xf32>
    %249 = arith.divf %247, %248 : vector<1x16xf32>
    %250 = vector.broadcast %249 : vector<1x16xf32> to vector<8x16xf32>
    %251 = arith.subf %239, %250 : vector<8x16xf32>
    %252 = arith.mulf %251, %251 : vector<8x16xf32>
    %cst_87 = arith.constant dense<0.000000e+00> : vector<16xf32>
    %253 = vector.multi_reduction <add>, %252, %cst_87 [0] : vector<8x16xf32> to vector<16xf32>
    %254 = vector.shape_cast %253 : vector<16xf32> to vector<1x16xf32>
    %cst_88 = arith.constant 8.000000e+00 : f32
    %255 = vector.broadcast %cst_88 : f32 to vector<1x16xf32>
    %256 = arith.divf %254, %255 : vector<1x16xf32>
    %cst_89 = arith.constant 9.99999974E-6 : f32
    %257 = vector.broadcast %cst_89 : f32 to vector<1x16xf32>
    %258 = arith.addf %256, %257 : vector<1x16xf32>
    %259 = math.rsqrt %258 : vector<1x16xf32>
    %260 = vector.broadcast %259 : vector<1x16xf32> to vector<8x16xf32>
    %261 = arith.mulf %251, %260 : vector<8x16xf32>
    %262 = arith.mulf %261, %242 : vector<8x16xf32>
    %263 = arith.addf %262, %245 : vector<8x16xf32>
    %cst_90 = arith.constant 0.000000e+00 : f32
    %264 = vector.broadcast %cst_90 : f32 to vector<8x16xf32>
    %265 = arith.maximumf %263, %264 : vector<8x16xf32>
    %c720 = arith.constant 720 : index
    %c0_91 = arith.constant 0 : index
    %266 = vector.load %arg2[%c720, %c0_91] : memref<1888x256xbf16, #tpu.memory_space<vmem>>, vector<16x32xbf16>
    %267 = arith.truncf %265 : vector<8x16xf32> to vector<8x16xbf16>
    %cst_92 = arith.constant dense<0.000000e+00> : vector<8x32xf32>
    %268 = tpu.matmul %267, %266, %cst_92 {dimension_numbers = #tpu.dot_dimension_numbers<[1], [0], [0], [1], [0, 0, 1, 1], [], []>} : vector<8x16xbf16>, vector<16x32xbf16>, vector<8x32xf32> -> vector<8x32xf32>
    %c32 = arith.constant 32 : index
    %c0_93 = arith.constant 0 : index
    %269 = vector.load %arg3[%c32, %c0_93] : memref<64x256xf32, #tpu.memory_space<vmem>>, vector<1x32xf32>
    %270 = vector.shape_cast %269 : vector<1x32xf32> to vector<1x32xf32>
    %271 = vector.broadcast %270 : vector<1x32xf32> to vector<8x32xf32>
    %272 = arith.addf %268, %271 : vector<8x32xf32>
    %c33 = arith.constant 33 : index
    %c0_94 = arith.constant 0 : index
    %273 = vector.load %arg3[%c33, %c0_94] : memref<64x256xf32, #tpu.memory_space<vmem>>, vector<1x32xf32>
    %274 = vector.shape_cast %273 : vector<1x32xf32> to vector<1x32xf32>
    %275 = vector.broadcast %274 : vector<1x32xf32> to vector<8x32xf32>
    %c34 = arith.constant 34 : index
    %c0_95 = arith.constant 0 : index
    %276 = vector.load %arg3[%c34, %c0_95] : memref<64x256xf32, #tpu.memory_space<vmem>>, vector<1x32xf32>
    %277 = vector.shape_cast %276 : vector<1x32xf32> to vector<1x32xf32>
    %278 = vector.broadcast %277 : vector<1x32xf32> to vector<8x32xf32>
    %cst_96 = arith.constant dense<0.000000e+00> : vector<32xf32>
    %279 = vector.multi_reduction <add>, %272, %cst_96 [0] : vector<8x32xf32> to vector<32xf32>
    %280 = vector.shape_cast %279 : vector<32xf32> to vector<1x32xf32>
    %cst_97 = arith.constant 8.000000e+00 : f32
    %281 = vector.broadcast %cst_97 : f32 to vector<1x32xf32>
    %282 = arith.divf %280, %281 : vector<1x32xf32>
    %283 = vector.broadcast %282 : vector<1x32xf32> to vector<8x32xf32>
    %284 = arith.subf %272, %283 : vector<8x32xf32>
    %285 = arith.mulf %284, %284 : vector<8x32xf32>
    %cst_98 = arith.constant dense<0.000000e+00> : vector<32xf32>
    %286 = vector.multi_reduction <add>, %285, %cst_98 [0] : vector<8x32xf32> to vector<32xf32>
    %287 = vector.shape_cast %286 : vector<32xf32> to vector<1x32xf32>
    %cst_99 = arith.constant 8.000000e+00 : f32
    %288 = vector.broadcast %cst_99 : f32 to vector<1x32xf32>
    %289 = arith.divf %287, %288 : vector<1x32xf32>
    %cst_100 = arith.constant 9.99999974E-6 : f32
    %290 = vector.broadcast %cst_100 : f32 to vector<1x32xf32>
    %291 = arith.addf %289, %290 : vector<1x32xf32>
    %292 = math.rsqrt %291 : vector<1x32xf32>
    %293 = vector.broadcast %292 : vector<1x32xf32> to vector<8x32xf32>
    %294 = arith.mulf %284, %293 : vector<8x32xf32>
    %295 = arith.mulf %294, %275 : vector<8x32xf32>
    %296 = arith.addf %295, %278 : vector<8x32xf32>
    %cst_101 = arith.constant 0.000000e+00 : f32
    %297 = vector.broadcast %cst_101 : f32 to vector<8x32xf32>
    %298 = arith.maximumf %296, %297 : vector<8x32xf32>
    %c736 = arith.constant 736 : index
    %c0_102 = arith.constant 0 : index
    %299 = vector.load %arg2[%c736, %c0_102] : memref<1888x256xbf16, #tpu.memory_space<vmem>>, vector<32x32xbf16>
    %300 = arith.truncf %298 : vector<8x32xf32> to vector<8x32xbf16>
    %cst_103 = arith.constant dense<0.000000e+00> : vector<8x32xf32>
    %301 = tpu.matmul %300, %299, %cst_103 {dimension_numbers = #tpu.dot_dimension_numbers<[1], [0], [0], [1], [0, 0, 1, 1], [], []>} : vector<8x32xbf16>, vector<32x32xbf16>, vector<8x32xf32> -> vector<8x32xf32>
    %c35 = arith.constant 35 : index
    %c0_104 = arith.constant 0 : index
    %302 = vector.load %arg3[%c35, %c0_104] : memref<64x256xf32, #tpu.memory_space<vmem>>, vector<1x32xf32>
    %303 = vector.shape_cast %302 : vector<1x32xf32> to vector<1x32xf32>
    %304 = vector.broadcast %303 : vector<1x32xf32> to vector<8x32xf32>
    %305 = arith.addf %301, %304 : vector<8x32xf32>
    %c36 = arith.constant 36 : index
    %c0_105 = arith.constant 0 : index
    %306 = vector.load %arg3[%c36, %c0_105] : memref<64x256xf32, #tpu.memory_space<vmem>>, vector<1x32xf32>
    %307 = vector.shape_cast %306 : vector<1x32xf32> to vector<1x32xf32>
    %308 = vector.broadcast %307 : vector<1x32xf32> to vector<8x32xf32>
    %c37 = arith.constant 37 : index
    %c0_106 = arith.constant 0 : index
    %309 = vector.load %arg3[%c37, %c0_106] : memref<64x256xf32, #tpu.memory_space<vmem>>, vector<1x32xf32>
    %310 = vector.shape_cast %309 : vector<1x32xf32> to vector<1x32xf32>
    %311 = vector.broadcast %310 : vector<1x32xf32> to vector<8x32xf32>
    %cst_107 = arith.constant dense<0.000000e+00> : vector<32xf32>
    %312 = vector.multi_reduction <add>, %305, %cst_107 [0] : vector<8x32xf32> to vector<32xf32>
    %313 = vector.shape_cast %312 : vector<32xf32> to vector<1x32xf32>
    %cst_108 = arith.constant 8.000000e+00 : f32
    %314 = vector.broadcast %cst_108 : f32 to vector<1x32xf32>
    %315 = arith.divf %313, %314 : vector<1x32xf32>
    %316 = vector.broadcast %315 : vector<1x32xf32> to vector<8x32xf32>
    %317 = arith.subf %305, %316 : vector<8x32xf32>
    %318 = arith.mulf %317, %317 : vector<8x32xf32>
    %cst_109 = arith.constant dense<0.000000e+00> : vector<32xf32>
    %319 = vector.multi_reduction <add>, %318, %cst_109 [0] : vector<8x32xf32> to vector<32xf32>
    %320 = vector.shape_cast %319 : vector<32xf32> to vector<1x32xf32>
    %cst_110 = arith.constant 8.000000e+00 : f32
    %321 = vector.broadcast %cst_110 : f32 to vector<1x32xf32>
    %322 = arith.divf %320, %321 : vector<1x32xf32>
    %cst_111 = arith.constant 9.99999974E-6 : f32
    %323 = vector.broadcast %cst_111 : f32 to vector<1x32xf32>
    %324 = arith.addf %322, %323 : vector<1x32xf32>
    %325 = math.rsqrt %324 : vector<1x32xf32>
    %326 = vector.broadcast %325 : vector<1x32xf32> to vector<8x32xf32>
    %327 = arith.mulf %317, %326 : vector<8x32xf32>
    %328 = arith.mulf %327, %308 : vector<8x32xf32>
    %329 = arith.addf %328, %311 : vector<8x32xf32>
    %cst_112 = arith.constant 0.000000e+00 : f32
    %330 = vector.broadcast %cst_112 : f32 to vector<8x32xf32>
    %331 = arith.maximumf %329, %330 : vector<8x32xf32>
    %c1440 = arith.constant 1440 : index
    %c0_113 = arith.constant 0 : index
    %332 = vector.load %arg2[%c1440, %c0_113] : memref<1888x256xbf16, #tpu.memory_space<vmem>>, vector<32x32xbf16>
    %c1472 = arith.constant 1472 : index
    %c0_114 = arith.constant 0 : index
    %333 = vector.load %arg2[%c1472, %c0_114] : memref<1888x256xbf16, #tpu.memory_space<vmem>>, vector<32x32xbf16>
    %334 = arith.truncf %331 : vector<8x32xf32> to vector<8x32xbf16>
    %cst_115 = arith.constant dense<0.000000e+00> : vector<8x32xf32>
    %335 = tpu.matmul %334, %332, %cst_115 {dimension_numbers = #tpu.dot_dimension_numbers<[1], [0], [0], [1], [0, 0, 1, 1], [], []>} : vector<8x32xbf16>, vector<32x32xbf16>, vector<8x32xf32> -> vector<8x32xf32>
    %336 = arith.truncf %199 : vector<8x32xf32> to vector<8x32xbf16>
    %cst_116 = arith.constant dense<0.000000e+00> : vector<8x32xf32>
    %337 = tpu.matmul %336, %333, %cst_116 {dimension_numbers = #tpu.dot_dimension_numbers<[1], [0], [0], [1], [0, 0, 1, 1], [], []>} : vector<8x32xbf16>, vector<32x32xbf16>, vector<8x32xf32> -> vector<8x32xf32>
    %338 = arith.addf %335, %337 : vector<8x32xf32>
    %c768 = arith.constant 768 : index
    %c0_117 = arith.constant 0 : index
    %339 = vector.load %arg2[%c768, %c0_117] : memref<1888x256xbf16, #tpu.memory_space<vmem>>, vector<32x64xbf16>
    %340 = arith.truncf %338 : vector<8x32xf32> to vector<8x32xbf16>
    %cst_118 = arith.constant dense<0.000000e+00> : vector<8x64xf32>
    %341 = tpu.matmul %340, %339, %cst_118 {dimension_numbers = #tpu.dot_dimension_numbers<[1], [0], [0], [1], [0, 0, 1, 1], [], []>} : vector<8x32xbf16>, vector<32x64xbf16>, vector<8x64xf32> -> vector<8x64xf32>
    %c40 = arith.constant 40 : index
    %c0_119 = arith.constant 0 : index
    %342 = vector.load %arg3[%c40, %c0_119] : memref<64x256xf32, #tpu.memory_space<vmem>>, vector<1x64xf32>
    %343 = vector.shape_cast %342 : vector<1x64xf32> to vector<1x64xf32>
    %344 = vector.broadcast %343 : vector<1x64xf32> to vector<8x64xf32>
    %345 = arith.addf %341, %344 : vector<8x64xf32>
    %c41 = arith.constant 41 : index
    %c0_120 = arith.constant 0 : index
    %346 = vector.load %arg3[%c41, %c0_120] : memref<64x256xf32, #tpu.memory_space<vmem>>, vector<1x64xf32>
    %347 = vector.shape_cast %346 : vector<1x64xf32> to vector<1x64xf32>
    %348 = vector.broadcast %347 : vector<1x64xf32> to vector<8x64xf32>
    %c42 = arith.constant 42 : index
    %c0_121 = arith.constant 0 : index
    %349 = vector.load %arg3[%c42, %c0_121] : memref<64x256xf32, #tpu.memory_space<vmem>>, vector<1x64xf32>
    %350 = vector.shape_cast %349 : vector<1x64xf32> to vector<1x64xf32>
    %351 = vector.broadcast %350 : vector<1x64xf32> to vector<8x64xf32>
    %cst_122 = arith.constant dense<0.000000e+00> : vector<64xf32>
    %352 = vector.multi_reduction <add>, %345, %cst_122 [0] : vector<8x64xf32> to vector<64xf32>
    %353 = vector.shape_cast %352 : vector<64xf32> to vector<1x64xf32>
    %cst_123 = arith.constant 8.000000e+00 : f32
    %354 = vector.broadcast %cst_123 : f32 to vector<1x64xf32>
    %355 = arith.divf %353, %354 : vector<1x64xf32>
    %356 = vector.broadcast %355 : vector<1x64xf32> to vector<8x64xf32>
    %357 = arith.subf %345, %356 : vector<8x64xf32>
    %358 = arith.mulf %357, %357 : vector<8x64xf32>
    %cst_124 = arith.constant dense<0.000000e+00> : vector<64xf32>
    %359 = vector.multi_reduction <add>, %358, %cst_124 [0] : vector<8x64xf32> to vector<64xf32>
    %360 = vector.shape_cast %359 : vector<64xf32> to vector<1x64xf32>
    %cst_125 = arith.constant 8.000000e+00 : f32
    %361 = vector.broadcast %cst_125 : f32 to vector<1x64xf32>
    %362 = arith.divf %360, %361 : vector<1x64xf32>
    %cst_126 = arith.constant 9.99999974E-6 : f32
    %363 = vector.broadcast %cst_126 : f32 to vector<1x64xf32>
    %364 = arith.addf %362, %363 : vector<1x64xf32>
    %365 = math.rsqrt %364 : vector<1x64xf32>
    %366 = vector.broadcast %365 : vector<1x64xf32> to vector<8x64xf32>
    %367 = arith.mulf %357, %366 : vector<8x64xf32>
    %368 = arith.mulf %367, %348 : vector<8x64xf32>
    %369 = arith.addf %368, %351 : vector<8x64xf32>
    %cst_127 = arith.constant 0.000000e+00 : f32
    %370 = vector.broadcast %cst_127 : f32 to vector<8x64xf32>
    %371 = arith.maximumf %369, %370 : vector<8x64xf32>
    %c800 = arith.constant 800 : index
    %c0_128 = arith.constant 0 : index
    %372 = vector.load %arg2[%c800, %c0_128] : memref<1888x256xbf16, #tpu.memory_space<vmem>>, vector<64x64xbf16>
    %373 = arith.truncf %371 : vector<8x64xf32> to vector<8x64xbf16>
    %cst_129 = arith.constant dense<0.000000e+00> : vector<8x64xf32>
    %374 = tpu.matmul %373, %372, %cst_129 {dimension_numbers = #tpu.dot_dimension_numbers<[1], [0], [0], [1], [0, 0, 1, 1], [], []>} : vector<8x64xbf16>, vector<64x64xbf16>, vector<8x64xf32> -> vector<8x64xf32>
    %c43 = arith.constant 43 : index
    %c0_130 = arith.constant 0 : index
    %375 = vector.load %arg3[%c43, %c0_130] : memref<64x256xf32, #tpu.memory_space<vmem>>, vector<1x64xf32>
    %376 = vector.shape_cast %375 : vector<1x64xf32> to vector<1x64xf32>
    %377 = vector.broadcast %376 : vector<1x64xf32> to vector<8x64xf32>
    %378 = arith.addf %374, %377 : vector<8x64xf32>
    %c44 = arith.constant 44 : index
    %c0_131 = arith.constant 0 : index
    %379 = vector.load %arg3[%c44, %c0_131] : memref<64x256xf32, #tpu.memory_space<vmem>>, vector<1x64xf32>
    %380 = vector.shape_cast %379 : vector<1x64xf32> to vector<1x64xf32>
    %381 = vector.broadcast %380 : vector<1x64xf32> to vector<8x64xf32>
    %c45 = arith.constant 45 : index
    %c0_132 = arith.constant 0 : index
    %382 = vector.load %arg3[%c45, %c0_132] : memref<64x256xf32, #tpu.memory_space<vmem>>, vector<1x64xf32>
    %383 = vector.shape_cast %382 : vector<1x64xf32> to vector<1x64xf32>
    %384 = vector.broadcast %383 : vector<1x64xf32> to vector<8x64xf32>
    %cst_133 = arith.constant dense<0.000000e+00> : vector<64xf32>
    %385 = vector.multi_reduction <add>, %378, %cst_133 [0] : vector<8x64xf32> to vector<64xf32>
    %386 = vector.shape_cast %385 : vector<64xf32> to vector<1x64xf32>
    %cst_134 = arith.constant 8.000000e+00 : f32
    %387 = vector.broadcast %cst_134 : f32 to vector<1x64xf32>
    %388 = arith.divf %386, %387 : vector<1x64xf32>
    %389 = vector.broadcast %388 : vector<1x64xf32> to vector<8x64xf32>
    %390 = arith.subf %378, %389 : vector<8x64xf32>
    %391 = arith.mulf %390, %390 : vector<8x64xf32>
    %cst_135 = arith.constant dense<0.000000e+00> : vector<64xf32>
    %392 = vector.multi_reduction <add>, %391, %cst_135 [0] : vector<8x64xf32> to vector<64xf32>
    %393 = vector.shape_cast %392 : vector<64xf32> to vector<1x64xf32>
    %cst_136 = arith.constant 8.000000e+00 : f32
    %394 = vector.broadcast %cst_136 : f32 to vector<1x64xf32>
    %395 = arith.divf %393, %394 : vector<1x64xf32>
    %cst_137 = arith.constant 9.99999974E-6 : f32
    %396 = vector.broadcast %cst_137 : f32 to vector<1x64xf32>
    %397 = arith.addf %395, %396 : vector<1x64xf32>
    %398 = math.rsqrt %397 : vector<1x64xf32>
    %399 = vector.broadcast %398 : vector<1x64xf32> to vector<8x64xf32>
    %400 = arith.mulf %390, %399 : vector<8x64xf32>
    %401 = arith.mulf %400, %381 : vector<8x64xf32>
    %402 = arith.addf %401, %384 : vector<8x64xf32>
    %cst_138 = arith.constant 0.000000e+00 : f32
    %403 = vector.broadcast %cst_138 : f32 to vector<8x64xf32>
    %404 = arith.maximumf %402, %403 : vector<8x64xf32>
    %c1504 = arith.constant 1504 : index
    %c0_139 = arith.constant 0 : index
    %405 = vector.load %arg2[%c1504, %c0_139] : memref<1888x256xbf16, #tpu.memory_space<vmem>>, vector<64x64xbf16>
    %c1568 = arith.constant 1568 : index
    %c0_140 = arith.constant 0 : index
    %406 = vector.load %arg2[%c1568, %c0_140] : memref<1888x256xbf16, #tpu.memory_space<vmem>>, vector<64x64xbf16>
    %407 = arith.truncf %404 : vector<8x64xf32> to vector<8x64xbf16>
    %cst_141 = arith.constant dense<0.000000e+00> : vector<8x64xf32>
    %408 = tpu.matmul %407, %405, %cst_141 {dimension_numbers = #tpu.dot_dimension_numbers<[1], [0], [0], [1], [0, 0, 1, 1], [], []>} : vector<8x64xbf16>, vector<64x64xbf16>, vector<8x64xf32> -> vector<8x64xf32>
    %409 = arith.truncf %133 : vector<8x64xf32> to vector<8x64xbf16>
    %cst_142 = arith.constant dense<0.000000e+00> : vector<8x64xf32>
    %410 = tpu.matmul %409, %406, %cst_142 {dimension_numbers = #tpu.dot_dimension_numbers<[1], [0], [0], [1], [0, 0, 1, 1], [], []>} : vector<8x64xbf16>, vector<64x64xbf16>, vector<8x64xf32> -> vector<8x64xf32>
    %411 = arith.addf %408, %410 : vector<8x64xf32>
    %c864 = arith.constant 864 : index
    %c0_143 = arith.constant 0 : index
    %412 = vector.load %arg2[%c864, %c0_143] : memref<1888x256xbf16, #tpu.memory_space<vmem>>, vector<64x128xbf16>
    %413 = arith.truncf %411 : vector<8x64xf32> to vector<8x64xbf16>
    %cst_144 = arith.constant dense<0.000000e+00> : vector<8x128xf32>
    %414 = tpu.matmul %413, %412, %cst_144 {dimension_numbers = #tpu.dot_dimension_numbers<[1], [0], [0], [1], [0, 0, 1, 1], [], []>} : vector<8x64xbf16>, vector<64x128xbf16>, vector<8x128xf32> -> vector<8x128xf32>
    %c48 = arith.constant 48 : index
    %c0_145 = arith.constant 0 : index
    %415 = vector.load %arg3[%c48, %c0_145] : memref<64x256xf32, #tpu.memory_space<vmem>>, vector<1x128xf32>
    %416 = vector.shape_cast %415 : vector<1x128xf32> to vector<1x128xf32>
    %417 = vector.broadcast %416 : vector<1x128xf32> to vector<8x128xf32>
    %418 = arith.addf %414, %417 : vector<8x128xf32>
    %c49 = arith.constant 49 : index
    %c0_146 = arith.constant 0 : index
    %419 = vector.load %arg3[%c49, %c0_146] : memref<64x256xf32, #tpu.memory_space<vmem>>, vector<1x128xf32>
    %420 = vector.shape_cast %419 : vector<1x128xf32> to vector<1x128xf32>
    %421 = vector.broadcast %420 : vector<1x128xf32> to vector<8x128xf32>
    %c50 = arith.constant 50 : index
    %c0_147 = arith.constant 0 : index
    %422 = vector.load %arg3[%c50, %c0_147] : memref<64x256xf32, #tpu.memory_space<vmem>>, vector<1x128xf32>
    %423 = vector.shape_cast %422 : vector<1x128xf32> to vector<1x128xf32>
    %424 = vector.broadcast %423 : vector<1x128xf32> to vector<8x128xf32>
    %cst_148 = arith.constant dense<0.000000e+00> : vector<128xf32>
    %425 = vector.multi_reduction <add>, %418, %cst_148 [0] : vector<8x128xf32> to vector<128xf32>
    %426 = vector.shape_cast %425 : vector<128xf32> to vector<1x128xf32>
    %cst_149 = arith.constant 8.000000e+00 : f32
    %427 = vector.broadcast %cst_149 : f32 to vector<1x128xf32>
    %428 = arith.divf %426, %427 : vector<1x128xf32>
    %429 = vector.broadcast %428 : vector<1x128xf32> to vector<8x128xf32>
    %430 = arith.subf %418, %429 : vector<8x128xf32>
    %431 = arith.mulf %430, %430 : vector<8x128xf32>
    %cst_150 = arith.constant dense<0.000000e+00> : vector<128xf32>
    %432 = vector.multi_reduction <add>, %431, %cst_150 [0] : vector<8x128xf32> to vector<128xf32>
    %433 = vector.shape_cast %432 : vector<128xf32> to vector<1x128xf32>
    %cst_151 = arith.constant 8.000000e+00 : f32
    %434 = vector.broadcast %cst_151 : f32 to vector<1x128xf32>
    %435 = arith.divf %433, %434 : vector<1x128xf32>
    %cst_152 = arith.constant 9.99999974E-6 : f32
    %436 = vector.broadcast %cst_152 : f32 to vector<1x128xf32>
    %437 = arith.addf %435, %436 : vector<1x128xf32>
    %438 = math.rsqrt %437 : vector<1x128xf32>
    %439 = vector.broadcast %438 : vector<1x128xf32> to vector<8x128xf32>
    %440 = arith.mulf %430, %439 : vector<8x128xf32>
    %441 = arith.mulf %440, %421 : vector<8x128xf32>
    %442 = arith.addf %441, %424 : vector<8x128xf32>
    %cst_153 = arith.constant 0.000000e+00 : f32
    %443 = vector.broadcast %cst_153 : f32 to vector<8x128xf32>
    %444 = arith.maximumf %442, %443 : vector<8x128xf32>
    %c928 = arith.constant 928 : index
    %c0_154 = arith.constant 0 : index
    %445 = vector.load %arg2[%c928, %c0_154] : memref<1888x256xbf16, #tpu.memory_space<vmem>>, vector<128x128xbf16>
    %446 = arith.truncf %444 : vector<8x128xf32> to vector<8x128xbf16>
    %cst_155 = arith.constant dense<0.000000e+00> : vector<8x128xf32>
    %447 = tpu.matmul %446, %445, %cst_155 {dimension_numbers = #tpu.dot_dimension_numbers<[1], [0], [0], [1], [0, 0, 1, 1], [], []>} : vector<8x128xbf16>, vector<128x128xbf16>, vector<8x128xf32> -> vector<8x128xf32>
    %c51 = arith.constant 51 : index
    %c0_156 = arith.constant 0 : index
    %448 = vector.load %arg3[%c51, %c0_156] : memref<64x256xf32, #tpu.memory_space<vmem>>, vector<1x128xf32>
    %449 = vector.shape_cast %448 : vector<1x128xf32> to vector<1x128xf32>
    %450 = vector.broadcast %449 : vector<1x128xf32> to vector<8x128xf32>
    %451 = arith.addf %447, %450 : vector<8x128xf32>
    %c52 = arith.constant 52 : index
    %c0_157 = arith.constant 0 : index
    %452 = vector.load %arg3[%c52, %c0_157] : memref<64x256xf32, #tpu.memory_space<vmem>>, vector<1x128xf32>
    %453 = vector.shape_cast %452 : vector<1x128xf32> to vector<1x128xf32>
    %454 = vector.broadcast %453 : vector<1x128xf32> to vector<8x128xf32>
    %c53 = arith.constant 53 : index
    %c0_158 = arith.constant 0 : index
    %455 = vector.load %arg3[%c53, %c0_158] : memref<64x256xf32, #tpu.memory_space<vmem>>, vector<1x128xf32>
    %456 = vector.shape_cast %455 : vector<1x128xf32> to vector<1x128xf32>
    %457 = vector.broadcast %456 : vector<1x128xf32> to vector<8x128xf32>
    %cst_159 = arith.constant dense<0.000000e+00> : vector<128xf32>
    %458 = vector.multi_reduction <add>, %451, %cst_159 [0] : vector<8x128xf32> to vector<128xf32>
    %459 = vector.shape_cast %458 : vector<128xf32> to vector<1x128xf32>
    %cst_160 = arith.constant 8.000000e+00 : f32
    %460 = vector.broadcast %cst_160 : f32 to vector<1x128xf32>
    %461 = arith.divf %459, %460 : vector<1x128xf32>
    %462 = vector.broadcast %461 : vector<1x128xf32> to vector<8x128xf32>
    %463 = arith.subf %451, %462 : vector<8x128xf32>
    %464 = arith.mulf %463, %463 : vector<8x128xf32>
    %cst_161 = arith.constant dense<0.000000e+00> : vector<128xf32>
    %465 = vector.multi_reduction <add>, %464, %cst_161 [0] : vector<8x128xf32> to vector<128xf32>
    %466 = vector.shape_cast %465 : vector<128xf32> to vector<1x128xf32>
    %cst_162 = arith.constant 8.000000e+00 : f32
    %467 = vector.broadcast %cst_162 : f32 to vector<1x128xf32>
    %468 = arith.divf %466, %467 : vector<1x128xf32>
    %cst_163 = arith.constant 9.99999974E-6 : f32
    %469 = vector.broadcast %cst_163 : f32 to vector<1x128xf32>
    %470 = arith.addf %468, %469 : vector<1x128xf32>
    %471 = math.rsqrt %470 : vector<1x128xf32>
    %472 = vector.broadcast %471 : vector<1x128xf32> to vector<8x128xf32>
    %473 = arith.mulf %463, %472 : vector<8x128xf32>
    %474 = arith.mulf %473, %454 : vector<8x128xf32>
    %475 = arith.addf %474, %457 : vector<8x128xf32>
    %cst_164 = arith.constant 0.000000e+00 : f32
    %476 = vector.broadcast %cst_164 : f32 to vector<8x128xf32>
    %477 = arith.maximumf %475, %476 : vector<8x128xf32>
    %c1632 = arith.constant 1632 : index
    %c0_165 = arith.constant 0 : index
    %478 = vector.load %arg2[%c1632, %c0_165] : memref<1888x256xbf16, #tpu.memory_space<vmem>>, vector<128x128xbf16>
    %c1760 = arith.constant 1760 : index
    %c0_166 = arith.constant 0 : index
    %479 = vector.load %arg2[%c1760, %c0_166] : memref<1888x256xbf16, #tpu.memory_space<vmem>>, vector<128x128xbf16>
    %480 = arith.truncf %477 : vector<8x128xf32> to vector<8x128xbf16>
    %cst_167 = arith.constant dense<0.000000e+00> : vector<8x128xf32>
    %481 = tpu.matmul %480, %478, %cst_167 {dimension_numbers = #tpu.dot_dimension_numbers<[1], [0], [0], [1], [0, 0, 1, 1], [], []>} : vector<8x128xbf16>, vector<128x128xbf16>, vector<8x128xf32> -> vector<8x128xf32>
    %482 = arith.truncf %67 : vector<8x128xf32> to vector<8x128xbf16>
    %cst_168 = arith.constant dense<0.000000e+00> : vector<8x128xf32>
    %483 = tpu.matmul %482, %479, %cst_168 {dimension_numbers = #tpu.dot_dimension_numbers<[1], [0], [0], [1], [0, 0, 1, 1], [], []>} : vector<8x128xbf16>, vector<128x128xbf16>, vector<8x128xf32> -> vector<8x128xf32>
    %484 = arith.addf %481, %483 : vector<8x128xf32>
    %c1056 = arith.constant 1056 : index
    %c0_169 = arith.constant 0 : index
    %485 = vector.load %arg2[%c1056, %c0_169] : memref<1888x256xbf16, #tpu.memory_space<vmem>>, vector<128x256xbf16>
    %486 = arith.truncf %484 : vector<8x128xf32> to vector<8x128xbf16>
    %cst_170 = arith.constant dense<0.000000e+00> : vector<8x256xf32>
    %487 = tpu.matmul %486, %485, %cst_170 {dimension_numbers = #tpu.dot_dimension_numbers<[1], [0], [0], [1], [0, 0, 1, 1], [], []>} : vector<8x128xbf16>, vector<128x256xbf16>, vector<8x256xf32> -> vector<8x256xf32>
    %c56 = arith.constant 56 : index
    %c0_171 = arith.constant 0 : index
    %488 = vector.load %arg3[%c56, %c0_171] : memref<64x256xf32, #tpu.memory_space<vmem>>, vector<1x256xf32>
    %489 = vector.shape_cast %488 : vector<1x256xf32> to vector<1x256xf32>
    %490 = vector.broadcast %489 : vector<1x256xf32> to vector<8x256xf32>
    %491 = arith.addf %487, %490 : vector<8x256xf32>
    %c57 = arith.constant 57 : index
    %c0_172 = arith.constant 0 : index
    %492 = vector.load %arg3[%c57, %c0_172] : memref<64x256xf32, #tpu.memory_space<vmem>>, vector<1x256xf32>
    %493 = vector.shape_cast %492 : vector<1x256xf32> to vector<1x256xf32>
    %494 = vector.broadcast %493 : vector<1x256xf32> to vector<8x256xf32>
    %c58 = arith.constant 58 : index
    %c0_173 = arith.constant 0 : index
    %495 = vector.load %arg3[%c58, %c0_173] : memref<64x256xf32, #tpu.memory_space<vmem>>, vector<1x256xf32>
    %496 = vector.shape_cast %495 : vector<1x256xf32> to vector<1x256xf32>
    %497 = vector.broadcast %496 : vector<1x256xf32> to vector<8x256xf32>
    %cst_174 = arith.constant dense<0.000000e+00> : vector<256xf32>
    %498 = vector.multi_reduction <add>, %491, %cst_174 [0] : vector<8x256xf32> to vector<256xf32>
    %499 = vector.shape_cast %498 : vector<256xf32> to vector<1x256xf32>
    %cst_175 = arith.constant 8.000000e+00 : f32
    %500 = vector.broadcast %cst_175 : f32 to vector<1x256xf32>
    %501 = arith.divf %499, %500 : vector<1x256xf32>
    %502 = vector.broadcast %501 : vector<1x256xf32> to vector<8x256xf32>
    %503 = arith.subf %491, %502 : vector<8x256xf32>
    %504 = arith.mulf %503, %503 : vector<8x256xf32>
    %cst_176 = arith.constant dense<0.000000e+00> : vector<256xf32>
    %505 = vector.multi_reduction <add>, %504, %cst_176 [0] : vector<8x256xf32> to vector<256xf32>
    %506 = vector.shape_cast %505 : vector<256xf32> to vector<1x256xf32>
    %cst_177 = arith.constant 8.000000e+00 : f32
    %507 = vector.broadcast %cst_177 : f32 to vector<1x256xf32>
    %508 = arith.divf %506, %507 : vector<1x256xf32>
    %cst_178 = arith.constant 9.99999974E-6 : f32
    %509 = vector.broadcast %cst_178 : f32 to vector<1x256xf32>
    %510 = arith.addf %508, %509 : vector<1x256xf32>
    %511 = math.rsqrt %510 : vector<1x256xf32>
    %512 = vector.broadcast %511 : vector<1x256xf32> to vector<8x256xf32>
    %513 = arith.mulf %503, %512 : vector<8x256xf32>
    %514 = arith.mulf %513, %494 : vector<8x256xf32>
    %515 = arith.addf %514, %497 : vector<8x256xf32>
    %cst_179 = arith.constant 0.000000e+00 : f32
    %516 = vector.broadcast %cst_179 : f32 to vector<8x256xf32>
    %517 = arith.maximumf %515, %516 : vector<8x256xf32>
    %c1184 = arith.constant 1184 : index
    %c0_180 = arith.constant 0 : index
    %518 = vector.load %arg2[%c1184, %c0_180] : memref<1888x256xbf16, #tpu.memory_space<vmem>>, vector<256x256xbf16>
    %519 = arith.truncf %517 : vector<8x256xf32> to vector<8x256xbf16>
    %cst_181 = arith.constant dense<0.000000e+00> : vector<8x256xf32>
    %520 = tpu.matmul %519, %518, %cst_181 {dimension_numbers = #tpu.dot_dimension_numbers<[1], [0], [0], [1], [0, 0, 1, 1], [], []>} : vector<8x256xbf16>, vector<256x256xbf16>, vector<8x256xf32> -> vector<8x256xf32>
    %c59 = arith.constant 59 : index
    %c0_182 = arith.constant 0 : index
    %521 = vector.load %arg3[%c59, %c0_182] : memref<64x256xf32, #tpu.memory_space<vmem>>, vector<1x256xf32>
    %522 = vector.shape_cast %521 : vector<1x256xf32> to vector<1x256xf32>
    %523 = vector.broadcast %522 : vector<1x256xf32> to vector<8x256xf32>
    %524 = arith.addf %520, %523 : vector<8x256xf32>
    %c60 = arith.constant 60 : index
    %c0_183 = arith.constant 0 : index
    %525 = vector.load %arg3[%c60, %c0_183] : memref<64x256xf32, #tpu.memory_space<vmem>>, vector<1x256xf32>
    %526 = vector.shape_cast %525 : vector<1x256xf32> to vector<1x256xf32>
    %527 = vector.broadcast %526 : vector<1x256xf32> to vector<8x256xf32>
    %c61 = arith.constant 61 : index
    %c0_184 = arith.constant 0 : index
    %528 = vector.load %arg3[%c61, %c0_184] : memref<64x256xf32, #tpu.memory_space<vmem>>, vector<1x256xf32>
    %529 = vector.shape_cast %528 : vector<1x256xf32> to vector<1x256xf32>
    %530 = vector.broadcast %529 : vector<1x256xf32> to vector<8x256xf32>
    %cst_185 = arith.constant dense<0.000000e+00> : vector<256xf32>
    %531 = vector.multi_reduction <add>, %524, %cst_185 [0] : vector<8x256xf32> to vector<256xf32>
    %532 = vector.shape_cast %531 : vector<256xf32> to vector<1x256xf32>
    %cst_186 = arith.constant 8.000000e+00 : f32
    %533 = vector.broadcast %cst_186 : f32 to vector<1x256xf32>
    %534 = arith.divf %532, %533 : vector<1x256xf32>
    %535 = vector.broadcast %534 : vector<1x256xf32> to vector<8x256xf32>
    %536 = arith.subf %524, %535 : vector<8x256xf32>
    %537 = arith.mulf %536, %536 : vector<8x256xf32>
    %cst_187 = arith.constant dense<0.000000e+00> : vector<256xf32>
    %538 = vector.multi_reduction <add>, %537, %cst_187 [0] : vector<8x256xf32> to vector<256xf32>
    %539 = vector.shape_cast %538 : vector<256xf32> to vector<1x256xf32>
    %cst_188 = arith.constant 8.000000e+00 : f32
    %540 = vector.broadcast %cst_188 : f32 to vector<1x256xf32>
    %541 = arith.divf %539, %540 : vector<1x256xf32>
    %cst_189 = arith.constant 9.99999974E-6 : f32
    %542 = vector.broadcast %cst_189 : f32 to vector<1x256xf32>
    %543 = arith.addf %541, %542 : vector<1x256xf32>
    %544 = math.rsqrt %543 : vector<1x256xf32>
    %545 = vector.broadcast %544 : vector<1x256xf32> to vector<8x256xf32>
    %546 = arith.mulf %536, %545 : vector<8x256xf32>
    %547 = arith.mulf %546, %527 : vector<8x256xf32>
    %548 = arith.addf %547, %530 : vector<8x256xf32>
    %cst_190 = arith.constant 0.000000e+00 : f32
    %549 = vector.broadcast %cst_190 : f32 to vector<8x256xf32>
    %550 = arith.maximumf %548, %549 : vector<8x256xf32>
    %551 = arith.negf %550 : vector<8x256xf32>
    %552 = math.exp %551 : vector<8x256xf32>
    %cst_191 = arith.constant 1.000000e+00 : f32
    %553 = vector.broadcast %cst_191 : f32 to vector<8x256xf32>
    %554 = arith.addf %553, %552 : vector<8x256xf32>
    %555 = arith.divf %553, %554 : vector<8x256xf32>
    %c0_192 = arith.constant 0 : index
    %c0_193 = arith.constant 0 : index
    %c0_194 = arith.constant 0 : index
    %556 = vector.load %arg4[%c0_192, %c0_193, %c0_194] : memref<1x8x256xf32, #tpu.memory_space<vmem>>, vector<1x8x256xf32>
    %557 = vector.shape_cast %556 : vector<1x8x256xf32> to vector<8x256xf32>
    %558 = vector.shape_cast %555 : vector<8x256xf32> to vector<1x8x256xf32>
    tpu.vector_store %arg4[%c0_192, %c0_193, %c0_194], %558 {strides = array<i32>} : memref<1x8x256xf32, #tpu.memory_space<vmem>>, vector<1x8x256xf32>,
    return
  }
  func.func @transform_0(%arg0: i32) -> (i32, i32, i32) {
    %c0_i32 = arith.constant 0 : i32
    %c0_i32_0 = arith.constant 0 : i32
    %c0_i32_1 = arith.constant 0 : i32
    return %arg0, %c0_i32, %c0_i32_0 : i32, i32, i32
  }
  func.func @transform_1(%arg0: i32) -> (i32, i32) {
    %c0_i32 = arith.constant 0 : i32
    %c0_i32_0 = arith.constant 0 : i32
    %c0_i32_1 = arith.constant 0 : i32
    return %c0_i32, %c0_i32_0 : i32, i32
  }
  func.func @transform_2(%arg0: i32) -> (i32, i32) {
    %c0_i32 = arith.constant 0 : i32
    %c0_i32_0 = arith.constant 0 : i32
    %c0_i32_1 = arith.constant 0 : i32
    return %c0_i32, %c0_i32_0 : i32, i32
  }
  func.func @transform_3(%arg0: i32) -> (i32, i32, i32) {
    %c0_i32 = arith.constant 0 : i32
    %c0_i32_0 = arith.constant 0 : i32
    %c0_i32_1 = arith.constant 0 : i32
    return %arg0, %c0_i32, %c0_i32_0 : i32, i32, i32
  }
}

</mosaic_0001>

<llo_original>
// kernel: build_unet_forward.1
$region0: #{build_unet_forward.1}
  #allocation0 [shape = 'u32[]', space=smem, size = 0x4, offset = 0x4, fixed_abs, tag = 'smem constant byte address 0x4 - core index']
  #allocation1 [shape = 'u32[72,128]{1,0:T(1,128)}', space=vmem, size = 0x9000, scoped, tag = 'internal scratch']
  %s0 = inlined_call_operand.vmem [shape: f32[2,8,256], index: 0, kind: input, shape index: {}]
  %s1 = inlined_call_operand.hbm [shape: bf16[1888,256], index: 1, kind: input, shape index: {}]
  %s2 = inlined_call_operand.hbm [shape: f32[64,256], index: 2, kind: input, shape index: {}]
  %s3 = inlined_call_operand.hbm [shape: f32[2,8,256], index: 3, kind: output, shape index: {}]
  %s4 = sld [smem:[#allocation0]]
  $region53: #{build_unet_forward.1} parent=0
    _
  %s6 = ssub.s32 1, %s4
  %s7 = scalar_select 0, %s6, %s4
  $region1: #{build_unet_forward.1} parent=0
    #allocation2 [shape = 'u8[966656]{0}', space=vmem, size = 0xec000, scoped, tag = 'input window, operand 1, single buffered']
    #allocation3 [shape = 's32[2]{0}', space=sflag, size = 0x8, scoped, tag = 'scoped memory for build_unet_forward.1']
    #allocation4 [shape = 's32[2]{0}', space=sflag, size = 0x8, scoped, tag = 'scoped memory for build_unet_forward.1']
    #allocation5 [shape = 'u8[65536]{0}', space=vmem, size = 0x10000, scoped, tag = 'input window, operand 2, single buffered']
    #allocation6 [shape = 's32[1]{0}', space=sflag, size = 0x4, scoped, tag = 'scoped memory for build_unet_forward.1']
    #allocation7 [shape = 'u8[16384]{0}', space=vmem, size = 0x4000, scoped, tag = 'output window, operand 0']
    %8 = vsyncpa [#allocation3], 0
    %9 = vsyncpa [#allocation6], 0
    %10 = vsyncpa [#allocation4], 0
    %s11 = scalar_lea.sflag [#allocation4], 1
    %12 = vsyncpa %s11, 0
    loop: start=0, step=1, limit=4
    $region2: #{build_unet_forward.1} parent=1 // loop_pre_header
      _
    $region3: #{build_unet_forward.1} parent=1 // loop_header
      %s14 = sphi 0, %s18
      %p15 = scmp.ge.s32.totalorder %s14, 4
      %s24 = sphi 0, %s26
      %s27 = sphi 0, %s24
      %s28 = sphi 0, %s27
      %s44 = sphi 0, %s28
      %s48 = sphi 0, %s48
      %s50 = sphi 0, %s48
      %s51 = sphi 0, %s50
      %s65 = sphi 0, %s51
      %s69 = sphi 0, %s69
      %s71 = sphi 0, %s69
      %s72 = sphi 0, %s71
      %s86 = sphi 0, %s72
      %s92 = sphi 0, %s94
      %s95 = sphi 0, %s92
      %s96 = sphi 0, %s95
      %s112 = sphi 0, %s96
    $region4: #{build_unet_forward.1} parent=1 // loop_header_branch
      %17 = sbr.rel (%p15) target = $region8
    $region5: #{build_unet_forward.1} parent=1 // loop_body
      %s19 = ssub.s32 %s14, 1
      %s20 = ssub.s32 %s14, 2
      %s21 = sadd.s32 %s14, 1
      %s22 = ssub.s32 %s14, %s21
      %p23 = scmp.eq.s32.totalorder %s22, 0
      %s25 = sadd.s32 %s24, 1
      %s26 = scalar_select %p23, %s24, %s25
      %p29 = pneg %p23
      %p30 = scmp.eq.s32.totalorder %s14, 1
      %p31 = por %p29, %p30
      %p32 = scmp.ne.s32.totalorder %s24, %s27
      %p33 = scmp.eq.s32.totalorder %s14, 0
      %p34 = por %p32, %p33
      %p35 = scmp.ne.s32.totalorder %s24, %s27
      %p36 = scmp.eq.s32.totalorder %s19, 1
      %p37 = por %p35, %p36
      %p38 = scmp.ne.s32.totalorder %s27, %s28
      %p39 = scmp.eq.s32.totalorder %s19, 0
      %p40 = por %p38, %p39
      %p41 = scmp.ne.s32.totalorder %s27, %s28
      %p42 = scmp.eq.s32.totalorder %s20, 1
      %p43 = por %p41, %p42
      %p45 = scmp.ne.s32.totalorder %s28, %s44
      %p46 = scmp.eq.s32.totalorder %s20, 0
      %p47 = por %p45, %p46
      %s49 = sadd.s32 %s48, 1
      %p52 = scmp.eq.s32.totalorder %s14, 1
      %p53 = scmp.ne.s32.totalorder %s48, %s50
      %p54 = scmp.eq.s32.totalorder %s14, 0
      %p55 = por %p53, %p54
      %p56 = scmp.ne.s32.totalorder %s48, %s50
      %p57 = scmp.eq.s32.totalorder %s19, 1
      %p58 = por %p56, %p57
      %p59 = scmp.ne.s32.totalorder %s50, %s51
      %p60 = scmp.eq.s32.totalorder %s19, 0
      %p61 = por %p59, %p60
      %p62 = scmp.ne.s32.totalorder %s50, %s51
      %p63 = scmp.eq.s32.totalorder %s20, 1
      %p64 = por %p62, %p63
      %p66 = scmp.ne.s32.totalorder %s51, %s65
      %p67 = scmp.eq.s32.totalorder %s20, 0
      %p68 = por %p66, %p67
      %s70 = sadd.s32 %s69, 1
      %p73 = scmp.eq.s32.totalorder %s14, 1
      %p74 = scmp.ne.s32.totalorder %s69, %s71
      %p75 = scmp.eq.s32.totalorder %s14, 0
      %p76 = por %p74, %p75
      %p77 = scmp.ne.s32.totalorder %s69, %s71
      %p78 = scmp.eq.s32.totalorder %s19, 1
      %p79 = por %p77, %p78
      %p80 = scmp.ne.s32.totalorder %s71, %s72
      %p81 = scmp.eq.s32.totalorder %s19, 0
      %p82 = por %p80, %p81
      %p83 = scmp.ne.s32.totalorder %s71, %s72
      %p84 = scmp.eq.s32.totalorder %s20, 1
      %p85 = por %p83, %p84
      %p87 = scmp.ne.s32.totalorder %s72, %s86
      %p88 = scmp.eq.s32.totalorder %s20, 0
      %p89 = por %p87, %p88
      %s90 = ssub.s32 %s14, %s21
      %p91 = scmp.eq.s32.totalorder %s90, 0
      %s93 = sadd.s32 %s92, 1
      %s94 = scalar_select %p91, %s92, %s93
      %p97 = pneg %p91
      %p98 = scmp.eq.s32.totalorder %s14, 1
      %p99 = por %p97, %p98
      %p100 = scmp.ne.s32.totalorder %s92, %s95
      %p101 = scmp.eq.s32.totalorder %s14, 0
      %p102 = por %p100, %p101
      %p103 = scmp.ne.s32.totalorder %s92, %s95
      %p104 = scmp.eq.s32.totalorder %s19, 1
      %p105 = por %p103, %p104
      %p106 = scmp.ne.s32.totalorder %s95, %s96
      %p107 = scmp.eq.s32.totalorder %s19, 0
      %p108 = por %p106, %p107
      %p109 = scmp.ne.s32.totalorder %s95, %s96
      %p110 = scmp.eq.s32.totalorder %s20, 1
      %p111 = por %p109, %p110
      %p113 = scmp.ne.s32.totalorder %s96, %s112
      %p114 = scmp.eq.s32.totalorder %s20, 0
      %p115 = por %p113, %p114
      %p116 = scmp.le.s32.totalorder 1, %s14
      %p117 = scmp.lt.s32.totalorder %s14, 3
      %p118 = pnand %p116, %p117
      %p119 = pneg %p118
      // Predicated region
      $region9: #{build_unet_forward.1} parent=5 // pred_check
        _
      $region10: #{build_unet_forward.1} parent=5 // pred_check_branch
        %121 = sbr.rel (%p118) target = $region12
      $region11: #{build_unet_forward.1} parent=5 // pred_region
        %s122 = ssub.s32 %s14, 1
        // Predicated region
        $region13: #{build_unet_forward.1} parent=11 // pred_check
          %p123 = pneg %p61
        $region14: #{build_unet_forward.1} parent=11 // pred_check_branch
          %125 = sbr.rel (%p123) target = $region16
        $region15: #{build_unet_forward.1} parent=11 // pred_region
          %127 = vsyncadd [#allocation3], 0
          %s128 = sshll.u32 %s1, 4
          %s129 = int_to_ptr.hbm [resolvable:$true] %s128
          %s130 = sshll.u32 [#allocation2], 4
          %s131 = int_to_ptr.vmem [resolvable:$true] %s130
          %136 = dma.hbm_to_vmem [thread:$0]  %s129, 30208, %s131, [#allocation3], 128, 128, 8
        $region16: #{build_unet_forward.1} parent=11 // pred_fallthru
          _
        // Predicated region
        $region17: #{build_unet_forward.1} parent=11 // pred_check
          %p137 = pneg %p82
        $region18: #{build_unet_forward.1} parent=11 // pred_check_branch
          %139 = sbr.rel (%p137) target = $region20
        $region19: #{build_unet_forward.1} parent=11 // pred_region
          %141 = vsyncadd [#allocation6], 0
          %s142 = sshll.u32 %s2, 4
          %s143 = int_to_ptr.hbm [resolvable:$true] %s142
          %s144 = sshll.u32 [#allocation5], 4
          %s145 = int_to_ptr.vmem [resolvable:$true] %s144
          %150 = dma.hbm_to_vmem [thread:$0]  %s143, 2048, %s145, [#allocation6], 256, 256, 16
        $region20: #{build_unet_forward.1} parent=11 // pred_fallthru
          _
      $region12: #{build_unet_forward.1} parent=5 // pred_fallthru
        _
      %p151 = scmp.lt.s32.totalorder %s14, 2
      // Predicated region
      $region21: #{build_unet_forward.1} parent=5 // pred_check
        %p152 = pneg %p151
      $region22: #{build_unet_forward.1} parent=5 // pred_check_branch
        %154 = sbr.rel (%p152) target = $region24
      $region23: #{build_unet_forward.1} parent=5 // pred_region
        // Predicated region
        $region25: #{build_unet_forward.1} parent=23 // pred_check
          %p155 = pneg %p34
        $region26: #{build_unet_forward.1} parent=23 // pred_check_branch
          %157 = sbr.rel (%p155) target = $region28
        $region27: #{build_unet_forward.1} parent=23 // pred_region
          %p158 = scmp.lt.s32.totalorder %s14, 1
          %s159 = scalar_select %p158, %s14, 1
          %s160 = smul.addr %s159, 2
          %s161 = smul.addr %s160, 8
          %s162 = scalar_lea.vmem %s0, %s161
        $region28: #{build_unet_forward.1} parent=23 // pred_fallthru
          _
      $region24: #{build_unet_forward.1} parent=5 // pred_fallthru
        _
      %p163 = scmp.le.s32.totalorder 1, %s14
      %p164 = scmp.lt.s32.totalorder %s14, 3
      %p165 = pnand %p163, %p164
      %p166 = pneg %p165
      // Predicated region
      $region29: #{build_unet_forward.1} parent=5 // pred_check
        _
      $region30: #{build_unet_forward.1} parent=5 // pred_check_branch
        %168 = sbr.rel (%p165) target = $region32
      $region31: #{build_unet_forward.1} parent=5 // pred_region
        %s169 = ssub.s32 %s14, 1
        // Predicated region
        $region33: #{build_unet_forward.1} parent=31 // pred_check
          %p170 = pneg %p61
        $region34: #{build_unet_forward.1} parent=31 // pred_check_branch
          %172 = sbr.rel (%p170) target = $region36
        $region35: #{build_unet_forward.1} parent=31 // pred_region
          %174 = dma.done [#allocation3], 30208
        $region36: #{build_unet_forward.1} parent=31 // pred_fallthru
          _
        // Predicated region
        $region37: #{build_unet_forward.1} parent=31 // pred_check
          %p175 = pneg %p82
        $region38: #{build_unet_forward.1} parent=31 // pred_check_branch
          %177 = sbr.rel (%p175) target = $region40
        $region39: #{build_unet_forward.1} parent=31 // pred_region
          %179 = dma.done [#allocation6], 2048
        $region40: #{build_unet_forward.1} parent=31 // pred_fallthru
          _
        %p180 = scmp.lt.s32.totalorder %s19, 1
        %s181 = scalar_select %p180, %s19, 1
        %s182 = smul.addr %s181, 2
        %s183 = smul.addr %s182, 8
        %s184 = scalar_lea.vmem %s0, %s183
        %p185 = pneg %p40
        %p186 = pneg %p37
        %p187 = pneg %p61
        %p188 = pneg %p58
        %p189 = pneg %p82
        %p190 = pneg %p79
        %p191 = pneg %p108
        %p192 = pneg %p105
        %s193 = sand.u32 %s95, 1
        %s194 = scalar_lea.sflag [#allocation4], %s193
        %s195 = sand.u32 %s95, 1
        %s196 = smul.addr %s195, 16
        %s197 = scalar_lea.vmem [#allocation7], %s196
        %p198 = scmp.lt.s32.totalorder %s19, 1
        %s199 = scalar_select %p198, %s19, 1
        %s200 = smul.addr %s199, 2
        %s201 = smul.addr %s200, 8
        %s202 = scalar_lea.vmem %s0, %s201
        %v204 = vld [vmem:[%s202] sm:$0xff]
        %v205 = vld [vmem:[%s202 + $0x8] sm:$0xff]
        %v206 = vld [vmem:[#allocation2] sm:$0xf]
        %v207 = vld [vmem:[#allocation2 + $0x8] sm:$0xf]
        %v208 = vld [vmem:[#allocation2 + $0x10] sm:$0xf]
        %v209 = vld [vmem:[#allocation2 + $0x18] sm:$0xf]
        %v210 = vld [vmem:[#allocation2 + $0x20] sm:$0xf]
        %v211 = vld [vmem:[#allocation2 + $0x28] sm:$0xf]
        %v212 = vld [vmem:[#allocation2 + $0x30] sm:$0xf]
        %v213 = vld [vmem:[#allocation2 + $0x38] sm:$0xf]
        %v214 = vld [vmem:[#allocation2 + $0x40] sm:$0xf]
        %v215 = vld [vmem:[#allocation2 + $0x48] sm:$0xf]
        %v216 = vld [vmem:[#allocation2 + $0x50] sm:$0xf]
        %v217 = vld [vmem:[#allocation2 + $0x58] sm:$0xf]
        %v218 = vld [vmem:[#allocation2 + $0x60] sm:$0xf]
        %v219 = vld [vmem:[#allocation2 + $0x68] sm:$0xf]
        %v220 = vld [vmem:[#allocation2 + $0x70] sm:$0xf]
        %v221 = vld [vmem:[#allocation2 + $0x78] sm:$0xf]
        %v222 = vld [vmem:[#allocation2 + $0x80] sm:$0xf]
        %v223 = vld [vmem:[#allocation2 + $0x88] sm:$0xf]
        %v224 = vld [vmem:[#allocation2 + $0x90] sm:$0xf]
        %v225 = vld [vmem:[#allocation2 + $0x98] sm:$0xf]
        %v226 = vld [vmem:[#allocation2 + $0xa0] sm:$0xf]
        %v227 = vld [vmem:[#allocation2 + $0xa8] sm:$0xf]
        %v228 = vld [vmem:[#allocation2 + $0xb0] sm:$0xf]
        %v229 = vld [vmem:[#allocation2 + $0xb8] sm:$0xf]
        %v230 = vld [vmem:[#allocation2 + $0xc0] sm:$0xf]
        %v231 = vld [vmem:[#allocation2 + $0xc8] sm:$0xf]
        %v232 = vld [vmem:[#allocation2 + $0xd0] sm:$0xf]
        %v233 = vld [vmem:[#allocation2 + $0xd8] sm:$0xf]
        %v234 = vld [vmem:[#allocation2 + $0xe0] sm:$0xf]
        %v235 = vld [vmem:[#allocation2 + $0xe8] sm:$0xf]
        %v236 = vld [vmem:[#allocation2 + $0xf0] sm:$0xf]
        %v237 = vld [vmem:[#allocation2 + $0xf8] sm:$0xf]
        %v238 = vpack.c.bf16 %v204, %v204
        %v239 = vpack.c.bf16 %v205, %v205
        %v240 = vld [vmem:[#allocation5] ss:$0 sm:$0xff]
        %v273 = vunpack.c.l.b16 %v206
        %v274 = vunpack.c.l.b16 %v207
        %v275 = vunpack.c.l.b16 %v208
        %v276 = vunpack.c.l.b16 %v209
        %v277 = vunpack.c.l.b16 %v210
        %v278 = vunpack.c.l.b16 %v211
        %v279 = vunpack.c.l.b16 %v212
        %v280 = vunpack.c.l.b16 %v213
        %v281 = vunpack.c.l.b16 %v214
        %v282 = vunpack.c.l.b16 %v215
        %v283 = vunpack.c.l.b16 %v216
        %v284 = vunpack.c.l.b16 %v217
        %v285 = vunpack.c.l.b16 %v218
        %v286 = vunpack.c.l.b16 %v219
        %v287 = vunpack.c.l.b16 %v220
        %v288 = vunpack.c.l.b16 %v221
        %v289 = vunpack.c.l.b16 %v222
        %v290 = vunpack.c.l.b16 %v223
        %v291 = vunpack.c.l.b16 %v224
        %v292 = vunpack.c.l.b16 %v225
        %v293 = vunpack.c.l.b16 %v226
        %v294 = vunpack.c.l.b16 %v227
        %v295 = vunpack.c.l.b16 %v228
        %v296 = vunpack.c.l.b16 %v229
        %v297 = vunpack.c.l.b16 %v230
        %v298 = vunpack.c.l.b16 %v231
        %v299 = vunpack.c.l.b16 %v232
        %v300 = vunpack.c.l.b16 %v233
        %v301 = vunpack.c.l.b16 %v234
        %v302 = vunpack.c.l.b16 %v235
        %v303 = vunpack.c.l.b16 %v236
        %v304 = vunpack.c.l.b16 %v237
        %v305 = vpack.c.b16 %v274, %v273
        %v306 = vpack.c.b16 %v276, %v275
        %v307 = vpack.c.b16 %v278, %v277
        %v308 = vpack.c.b16 %v280, %v279
        %v309 = vpack.c.b16 %v282, %v281
        %v310 = vpack.c.b16 %v284, %v283
        %v311 = vpack.c.b16 %v286, %v285
        %v312 = vpack.c.b16 %v288, %v287
        %v313 = vpack.c.b16 %v290, %v289
        %v314 = vpack.c.b16 %v292, %v291
        %v315 = vpack.c.b16 %v294, %v293
        %v316 = vpack.c.b16 %v296, %v295
        %v317 = vpack.c.b16 %v298, %v297
        %v318 = vpack.c.b16 %v300, %v299
        %v319 = vpack.c.b16 %v302, %v301
        %v320 = vpack.c.b16 %v304, %v303
        %337 = vmatpush.bf16.msra.mxu0 %v312
        %338 = vmatpush.bf16.msra.mxu0 %v311
        %339 = vmatpush.bf16.msra.mxu0 %v310
        %340 = vmatpush.bf16.msra.mxu0 %v309
        %341 = vmatpush.bf16.msra.mxu0 %v308
        %342 = vmatpush.bf16.msra.mxu0 %v307
        %343 = vmatpush.bf16.msra.mxu0 %v306
        %344 = vmatpush.bf16.msra.mxu0 %v305
        %345 = vmatmul.bf16.gmra.mxu0 %v238
        %v346 = vpop.f32.mrf.mxu0
        %v347 = vadd.f32 %v240, %v346
        %v348 = vpop.f32.mrf.mxu0
        %349 = vdwg.mxu0
        %350 = vmatpush.bf16.msra.mxu0 %v320
        %351 = vmatpush.bf16.msra.mxu0 %v319
        %352 = vmatpush.bf16.msra.mxu0 %v318
        %353 = vmatpush.bf16.msra.mxu0 %v317
        %354 = vmatpush.bf16.msra.mxu0 %v316
        %355 = vmatpush.bf16.msra.mxu0 %v315
        %356 = vmatpush.bf16.msra.mxu0 %v314
        %357 = vmatpush.bf16.msra.mxu0 %v313
        %358 = vmatmul.bf16.gmra.mxu0 %v239
        %v359 = vpop.f32.mrf.mxu0
        %v360 = vadd.f32 %v347, %v359
        %v361 = vpop.f32.mrf.mxu0
        %362 = vdwg.mxu0
        %v363 = vld [vmem:[#allocation5 + $0x1] ss:$0 sm:$0xff]
        %v364 = vld [vmem:[#allocation5 + $0x2] ss:$0 sm:$0xff]
        %v365 = vrot.slane %v360, 4
        %v366 = vadd.f32 %v360, %v365
        %v367 = vrot.slane %v366, 2
        %v368 = vadd.f32 %v366, %v367
        %v369 = vrot.slane %v368, 1
        %v370 = vadd.f32 %v368, %v369
        %v371 = vrcp.pop 8.0
        %v372 = vmul.f32 8.0, %v371
        %v373 = vsub.f32 1.0, %v372
        %v374 = vmul.f32 %v371, %v373
        %v375 = vadd.f32 %v371, %v374
        %vm376 = vweird.f32 %v371
        %v377 = vsel %vm376, %v371, %v375
        %v378 = vmul.f32 %v370, %v377
        %v379 = vsub.f32 %v360, %v378
        %v380 = vmul.f32 %v379, %v379
        %v381 = vrot.slane %v380, 4
        %v382 = vadd.f32 %v380, %v381
        %v383 = vrot.slane %v382, 2
        %v384 = vadd.f32 %v382, %v383
        %v385 = vrot.slane %v384, 1
        %v386 = vadd.f32 %v384, %v385
        %v387 = vmul.f32 %v386, %v377
        %v388 = vadd.f32 %v387, 1e-05
        %v389 = vrsqrt.pop %v388
        %v390 = vmul.f32 %v389, %v388
        %v391 = vmul.f32 %v390, %v389
        %v392 = vmul.f32 0.5, %v391
        %v393 = vsub.f32 1.5, %v392
        %v394 = vmul.f32 %v389, %v393
        %vm395 = vweird.f32 %v388
        %vm396 = vweird.f32 %v389
        %vm397 = vmor %vm395, %vm396
        %v398 = vsel %vm397, %v389, %v394
        %v399 = vmul.f32 %v379, %v398
        %v400 = vmul.f32 %v399, %v363
        %v401 = vadd.f32 %v400, %v364
        %v402 = vmax.f32 %v401, 0.0
        %v403 = vld [vmem:[#allocation2 + $0x100] sm:$0xf]
        %v404 = vld [vmem:[#allocation2 + $0x108] sm:$0xf]
        %v405 = vld [vmem:[#allocation2 + $0x110] sm:$0xf]
        %v406 = vld [vmem:[#allocation2 + $0x118] sm:$0xf]
        %v407 = vld [vmem:[#allocation2 + $0x120] sm:$0xf]
        %v408 = vld [vmem:[#allocation2 + $0x128] sm:$0xf]
        %v409 = vld [vmem:[#allocation2 + $0x130] sm:$0xf]
        %v410 = vld [vmem:[#allocation2 + $0x138] sm:$0xf]
        %v411 = vld [vmem:[#allocation2 + $0x140] sm:$0xf]
        %v412 = vld [vmem:[#allocation2 + $0x148] sm:$0xf]
        %v413 = vld [vmem:[#allocation2 + $0x150] sm:$0xf]
        %v414 = vld [vmem:[#allocation2 + $0x158] sm:$0xf]
        %v415 = vld [vmem:[#allocation2 + $0x160] sm:$0xf]
        %v416 = vld [vmem:[#allocation2 + $0x168] sm:$0xf]
        %v417 = vld [vmem:[#allocation2 + $0x170] sm:$0xf]
        %v418 = vld [vmem:[#allocation2 + $0x178] sm:$0xf]
        %v419 = vpack.c.bf16 %v402, %v402
        %v420 = vld [vmem:[#allocation5 + $0x3] ss:$0 sm:$0xff]
        %v437 = vunpack.c.l.b16 %v403
        %v438 = vunpack.c.l.b16 %v404
        %v439 = vunpack.c.l.b16 %v405
        %v440 = vunpack.c.l.b16 %v406
        %v441 = vunpack.c.l.b16 %v407
        %v442 = vunpack.c.l.b16 %v408
        %v443 = vunpack.c.l.b16 %v409
        %v444 = vunpack.c.l.b16 %v410
        %v445 = vunpack.c.l.b16 %v411
        %v446 = vunpack.c.l.b16 %v412
        %v447 = vunpack.c.l.b16 %v413
        %v448 = vunpack.c.l.b16 %v414
        %v449 = vunpack.c.l.b16 %v415
        %v450 = vunpack.c.l.b16 %v416
        %v451 = vunpack.c.l.b16 %v417
        %v452 = vunpack.c.l.b16 %v418
        %v453 = vpack.c.b16 %v438, %v437
        %v454 = vpack.c.b16 %v440, %v439
        %v455 = vpack.c.b16 %v442, %v441
        %v456 = vpack.c.b16 %v444, %v443
        %v457 = vpack.c.b16 %v446, %v445
        %v458 = vpack.c.b16 %v448, %v447
        %v459 = vpack.c.b16 %v450, %v449
        %v460 = vpack.c.b16 %v452, %v451
        %469 = vmatpush.bf16.msra.mxu0 %v460
        %470 = vmatpush.bf16.msra.mxu0 %v459
        %471 = vmatpush.bf16.msra.mxu0 %v458
        %472 = vmatpush.bf16.msra.mxu0 %v457
        %473 = vmatpush.bf16.msra.mxu0 %v456
        %474 = vmatpush.bf16.msra.mxu0 %v455
        %475 = vmatpush.bf16.msra.mxu0 %v454
        %476 = vmatpush.bf16.msra.mxu0 %v453
        %477 = vmatmul.bf16.gmra.mxu0 %v419
        %v478 = vpop.f32.mrf.mxu0
        %v479 = vadd.f32 %v420, %v478
        %v480 = vpop.f32.mrf.mxu0
        %481 = vdwg.mxu0
        %v482 = vld [vmem:[#allocation5 + $0x4] ss:$0 sm:$0xff]
        %v483 = vld [vmem:[#allocation5 + $0x5] ss:$0 sm:$0xff]
        %v484 = vrot.slane %v479, 4
        %v485 = vadd.f32 %v479, %v484
        %v486 = vrot.slane %v485, 2
        %v487 = vadd.f32 %v485, %v486
        %v488 = vrot.slane %v487, 1
        %v489 = vadd.f32 %v487, %v488
        %v490 = vmul.f32 %v489, %v377
        %v491 = vsub.f32 %v479, %v490
        %v492 = vmul.f32 %v491, %v491
        %v493 = vrot.slane %v492, 4
        %v494 = vadd.f32 %v492, %v493
        %v495 = vrot.slane %v494, 2
        %v496 = vadd.f32 %v494, %v495
        %v497 = vrot.slane %v496, 1
        %v498 = vadd.f32 %v496, %v497
        %v499 = vmul.f32 %v498, %v377
        %v500 = vadd.f32 %v499, 1e-05
        %v501 = vrsqrt.pop %v500
        %v502 = vmul.f32 %v501, %v500
        %v503 = vmul.f32 %v502, %v501
        %v504 = vmul.f32 0.5, %v503
        %v505 = vsub.f32 1.5, %v504
        %v506 = vmul.f32 %v501, %v505
        %vm507 = vweird.f32 %v500
        %vm508 = vweird.f32 %v501
        %vm509 = vmor %vm507, %vm508
        %v510 = vsel %vm509, %v501, %v506
        %v511 = vmul.f32 %v491, %v510
        %v512 = vmul.f32 %v511, %v482
        %v513 = vadd.f32 %v512, %v483
        %v514 = vmax.f32 %v513, 0.0
        %v515 = vld [vmem:[#allocation2 + $0x180] sm:$0xf]
        %v516 = vld [vmem:[#allocation2 + $0x188] sm:$0xf]
        %v517 = vld [vmem:[#allocation2 + $0x190] sm:$0xf]
        %v518 = vld [vmem:[#allocation2 + $0x198] sm:$0xf]
        %v519 = vld [vmem:[#allocation2 + $0x1a0] sm:$0xf]
        %v520 = vld [vmem:[#allocation2 + $0x1a8] sm:$0xf]
        %v521 = vld [vmem:[#allocation2 + $0x1b0] sm:$0xf]
        %v522 = vld [vmem:[#allocation2 + $0x1b8] sm:$0xf]
        %v523 = vld [vmem:[#allocation2 + $0x1c0] sm:$0xf]
        %v524 = vld [vmem:[#allocation2 + $0x1c8] sm:$0xf]
        %v525 = vld [vmem:[#allocation2 + $0x1d0] sm:$0xf]
        %v526 = vld [vmem:[#allocation2 + $0x1d8] sm:$0xf]
        %v527 = vld [vmem:[#allocation2 + $0x1e0] sm:$0xf]
        %v528 = vld [vmem:[#allocation2 + $0x1e8] sm:$0xf]
        %v529 = vld [vmem:[#allocation2 + $0x1f0] sm:$0xf]
        %v530 = vld [vmem:[#allocation2 + $0x1f8] sm:$0xf]
        %v531 = vpack.c.bf16 %v514, %v514
        %v532 = vld [vmem:[#allocation5 + $0x10] ss:$0 sm:$0xff]
        %v549 = vunpack.c.l.b16 %v515
        %v550 = vunpack.c.l.b16 %v516
        %v551 = vunpack.c.l.b16 %v517
        %v552 = vunpack.c.l.b16 %v518
        %v553 = vunpack.c.l.b16 %v519
        %v554 = vunpack.c.l.b16 %v520
        %v555 = vunpack.c.l.b16 %v521
        %v556 = vunpack.c.l.b16 %v522
        %v557 = vunpack.c.l.b16 %v523
        %v558 = vunpack.c.l.b16 %v524
        %v559 = vunpack.c.l.b16 %v525
        %v560 = vunpack.c.l.b16 %v526
        %v561 = vunpack.c.l.b16 %v527
        %v562 = vunpack.c.l.b16 %v528
        %v563 = vunpack.c.l.b16 %v529
        %v564 = vunpack.c.l.b16 %v530
        %v565 = vpack.c.b16 %v550, %v549
        %v566 = vpack.c.b16 %v552, %v551
        %v567 = vpack.c.b16 %v554, %v553
        %v568 = vpack.c.b16 %v556, %v555
        %v569 = vpack.c.b16 %v558, %v557
        %v570 = vpack.c.b16 %v560, %v559
        %v571 = vpack.c.b16 %v562, %v561
        %v572 = vpack.c.b16 %v564, %v563
        %581 = vmatpush.bf16.msra.mxu0 %v572
        %582 = vmatpush.bf16.msra.mxu0 %v571
        %583 = vmatpush.bf16.msra.mxu0 %v570
        %584 = vmatpush.bf16.msra.mxu0 %v569
        %585 = vmatpush.bf16.msra.mxu0 %v568
        %586 = vmatpush.bf16.msra.mxu0 %v567
        %587 = vmatpush.bf16.msra.mxu0 %v566
        %588 = vmatpush.bf16.msra.mxu0 %v565
        %589 = vmatmul.bf16.gmra.mxu0 %v531
        %v590 = vpop.f32.mrf.mxu0
        %v591 = vadd.f32 %v532, %v590
        %v592 = vpop.f32.mrf.mxu0
        %593 = vdwg.mxu0
        %v594 = vld [vmem:[#allocation5 + $0x11] ss:$0 sm:$0xff]
        %v595 = vld [vmem:[#allocation5 + $0x12] ss:$0 sm:$0xff]
        %vm596 = vcmask 523264
        %v597 = vsel %vm596, %v591, 0.0
        %v598 = vrot.slane %v597, 4
        %v599 = vadd.f32 %v597, %v598
        %v600 = vrot.slane %v599, 2
        %v601 = vadd.f32 %v599, %v600
        %v602 = vrot.slane %v601, 1
        %v603 = vadd.f32 %v601, %v602
        %v604 = vmul.f32 %v603, %v377
        %v605 = vsub.f32 %v591, %v604
        %v606 = vmul.f32 %v605, %v605
        %v607 = vsel %vm596, %v606, 0.0
        %v608 = vrot.slane %v607, 4
        %v609 = vadd.f32 %v607, %v608
        %v610 = vrot.slane %v609, 2
        %v611 = vadd.f32 %v609, %v610
        %v612 = vrot.slane %v611, 1
        %v613 = vadd.f32 %v611, %v612
        %v614 = vmul.f32 %v613, %v377
        %v615 = vadd.f32 %v614, 1e-05
        %v616 = vrsqrt.pop %v615
        %v617 = vmul.f32 %v616, %v615
        %v618 = vmul.f32 %v617, %v616
        %v619 = vmul.f32 0.5, %v618
        %v620 = vsub.f32 1.5, %v619
        %v621 = vmul.f32 %v616, %v620
        %vm622 = vweird.f32 %v615
        %vm623 = vweird.f32 %v616
        %vm624 = vmor %vm622, %vm623
        %v625 = vsel %vm624, %v616, %v621
        %v626 = vmul.f32 %v605, %v625
        %v627 = vmul.f32 %v626, %v594
        %v628 = vadd.f32 %v627, %v595
        %v629 = vmax.f32 %v628, 0.0
        %v630 = vld [vmem:[#allocation2 + $0x200] sm:$0xf]
        %v631 = vld [vmem:[#allocation2 + $0x208] sm:$0xf]
        %v632 = vld [vmem:[#allocation2 + $0x210] sm:$0xf]
        %v633 = vld [vmem:[#allocation2 + $0x218] sm:$0xf]
        %v634 = vld [vmem:[#allocation2 + $0x220] sm:$0xf]
        %v635 = vld [vmem:[#allocation2 + $0x228] sm:$0xf]
        %v636 = vld [vmem:[#allocation2 + $0x230] sm:$0xf]
        %v637 = vld [vmem:[#allocation2 + $0x238] sm:$0xf]
        %v638 = vpack.c.bf16 %v629, %v629
        %v639 = vld [vmem:[#allocation5 + $0x13] ss:$0 sm:$0xff]
        %v648 = vunpack.c.l.b16 %v630
        %v649 = vunpack.c.l.b16 %v631
        %v650 = vunpack.c.l.b16 %v632
        %v651 = vunpack.c.l.b16 %v633
        %v652 = vunpack.c.l.b16 %v634
        %v653 = vunpack.c.l.b16 %v635
        %v654 = vunpack.c.l.b16 %v636
        %v655 = vunpack.c.l.b16 %v637
        %v656 = vpack.c.b16 %v649, %v648
        %v657 = vpack.c.b16 %v651, %v650
        %v658 = vpack.c.b16 %v653, %v652
        %v659 = vpack.c.b16 %v655, %v654
        %v665 = vsel %vm596, %v638, 0
        %667 = vmatpush.bf16.msra.mxu0 0
        %668 = vmatpush.bf16.msra.mxu0 0
        %669 = vmatpush.bf16.msra.mxu0 0
        %670 = vmatpush.bf16.msra.mxu0 0
        %671 = vmatpush.bf16.msra.mxu0 %v659
        %672 = vmatpush.bf16.msra.mxu0 %v658
        %673 = vmatpush.bf16.msra.mxu0 %v657
        %674 = vmatpush.bf16.msra.mxu0 %v656
        %675 = vmatmul.bf16.gmra.mxu0 %v665
        %v676 = vpop.f32.mrf.mxu0
        %v677 = vadd.f32 %v639, %v676
        %v678 = vpop.f32.mrf.mxu0
        %679 = vdwg.mxu0
        %v680 = vld [vmem:[#allocation5 + $0x14] ss:$0 sm:$0xff]
        %v681 = vld [vmem:[#allocation5 + $0x15] ss:$0 sm:$0xff]
        %v682 = vsel %vm596, %v677, 0.0
        %v683 = vrot.slane %v682, 4
        %v684 = vadd.f32 %v682, %v683
        %v685 = vrot.slane %v684, 2
        %v686 = vadd.f32 %v684, %v685
        %v687 = vrot.slane %v686, 1
        %v688 = vadd.f32 %v686, %v687
        %v689 = vmul.f32 %v688, %v377
        %v690 = vsub.f32 %v677, %v689
        %v691 = vmul.f32 %v690, %v690
        %v692 = vsel %vm596, %v691, 0.0
        %v693 = vrot.slane %v692, 4
        %v694 = vadd.f32 %v692, %v693
        %v695 = vrot.slane %v694, 2
        %v696 = vadd.f32 %v694, %v695
        %v697 = vrot.slane %v696, 1
        %v698 = vadd.f32 %v696, %v697
        %v699 = vmul.f32 %v698, %v377
        %v700 = vadd.f32 %v699, 1e-05
        %v701 = vrsqrt.pop %v700
        %v702 = vmul.f32 %v701, %v700
        %v703 = vmul.f32 %v702, %v701
        %v704 = vmul.f32 0.5, %v703
        %v705 = vsub.f32 1.5, %v704
        %v706 = vmul.f32 %v701, %v705
        %vm707 = vweird.f32 %v700
        %vm708 = vweird.f32 %v701
        %vm709 = vmor %vm707, %vm708
        %v710 = vsel %vm709, %v701, %v706
        %v711 = vmul.f32 %v690, %v710
        %v712 = vmul.f32 %v711, %v680
        %v713 = vadd.f32 %v712, %v681
        %v714 = vmax.f32 %v713, 0.0
        %v715 = vld [vmem:[#allocation2 + $0x240] sm:$0xf]
        %v716 = vld [vmem:[#allocation2 + $0x248] sm:$0xf]
        %v717 = vld [vmem:[#allocation2 + $0x250] sm:$0xf]
        %v718 = vld [vmem:[#allocation2 + $0x258] sm:$0xf]
        %v719 = vld [vmem:[#allocation2 + $0x260] sm:$0xf]
        %v720 = vld [vmem:[#allocation2 + $0x268] sm:$0xf]
        %v721 = vld [vmem:[#allocation2 + $0x270] sm:$0xf]
        %v722 = vld [vmem:[#allocation2 + $0x278] sm:$0xf]
        %v723 = vpack.c.bf16 %v714, %v714
        %v724 = vld [vmem:[#allocation5 + $0x20] ss:$0 sm:$0xff]
        %v733 = vunpack.c.l.b16 %v715
        %v734 = vunpack.c.l.b16 %v716
        %v735 = vunpack.c.l.b16 %v717
        %v736 = vunpack.c.l.b16 %v718
        %v737 = vunpack.c.l.b16 %v719
        %v738 = vunpack.c.l.b16 %v720
        %v739 = vunpack.c.l.b16 %v721
        %v740 = vunpack.c.l.b16 %v722
        %v741 = vpack.c.b16 %v734, %v733
        %v742 = vpack.c.b16 %v736, %v735
        %v743 = vpack.c.b16 %v738, %v737
        %v744 = vpack.c.b16 %v740, %v739
        %v750 = vsel %vm596, %v723, 0
        %752 = vmatpush.bf16.msra.mxu0 0
        %753 = vmatpush.bf16.msra.mxu0 0
        %754 = vmatpush.bf16.msra.mxu0 0
        %755 = vmatpush.bf16.msra.mxu0 0
        %756 = vmatpush.bf16.msra.mxu0 %v744
        %757 = vmatpush.bf16.msra.mxu0 %v743
        %758 = vmatpush.bf16.msra.mxu0 %v742
        %759 = vmatpush.bf16.msra.mxu0 %v741
        %760 = vmatmul.bf16.gmra.mxu0 %v750
        %v761 = vpop.f32.mrf.mxu0
        %v762 = vadd.f32 %v724, %v761
        %v763 = vpop.f32.mrf.mxu0
        %764 = vdwg.mxu0
        %v765 = vld [vmem:[#allocation5 + $0x21] ss:$0 sm:$0xff]
        %v766 = vld [vmem:[#allocation5 + $0x22] ss:$0 sm:$0xff]
        %vm767 = vcmask 261120
        %v768 = vsel %vm767, %v762, 0.0
        %v769 = vrot.slane %v768, 4
        %v770 = vadd.f32 %v768, %v769
        %v771 = vrot.slane %v770, 2
        %v772 = vadd.f32 %v770, %v771
        %v773 = vrot.slane %v772, 1
        %v774 = vadd.f32 %v772, %v773
        %v775 = vmul.f32 %v774, %v377
        %v776 = vsub.f32 %v762, %v775
        %v777 = vmul.f32 %v776, %v776
        %v778 = vsel %vm767, %v777, 0.0
        %v779 = vrot.slane %v778, 4
        %v780 = vadd.f32 %v778, %v779
        %v781 = vrot.slane %v780, 2
        %v782 = vadd.f32 %v780, %v781
        %v783 = vrot.slane %v782, 1
        %v784 = vadd.f32 %v782, %v783
        %v785 = vmul.f32 %v784, %v377
        %v786 = vadd.f32 %v785, 1e-05
        %v787 = vrsqrt.pop %v786
        %v788 = vmul.f32 %v787, %v786
        %v789 = vmul.f32 %v788, %v787
        %v790 = vmul.f32 0.5, %v789
        %v791 = vsub.f32 1.5, %v790
        %v792 = vmul.f32 %v787, %v791
        %vm793 = vweird.f32 %v786
        %vm794 = vweird.f32 %v787
        %vm795 = vmor %vm793, %vm794
        %v796 = vsel %vm795, %v787, %v792
        %v797 = vmul.f32 %v776, %v796
        %v798 = vmul.f32 %v797, %v765
        %v799 = vadd.f32 %v798, %v766
        %v800 = vmax.f32 %v799, 0.0
        %v801 = vld [vmem:[#allocation2 + $0x280] sm:$0xf]
        %v802 = vld [vmem:[#allocation2 + $0x288] sm:$0xf]
        %v803 = vld [vmem:[#allocation2 + $0x290] sm:$0xf]
        %v804 = vld [vmem:[#allocation2 + $0x298] sm:$0xf]
        %v805 = vpack.c.bf16 %v800, %v800
        %v806 = vld [vmem:[#allocation5 + $0x23] ss:$0 sm:$0xff]
        %v811 = vunpack.c.l.b16 %v801
        %v812 = vunpack.c.l.b16 %v802
        %v813 = vunpack.c.l.b16 %v803
        %v814 = vunpack.c.l.b16 %v804
        %v815 = vpack.c.b16 %v812, %v811
        %v816 = vpack.c.b16 %v814, %v813
        %v820 = vsel %vm767, %v805, 0
        %822 = vmatpush.bf16.msra.mxu0 0
        %823 = vmatpush.bf16.msra.mxu0 0
        %824 = vmatpush.bf16.msra.mxu0 0
        %825 = vmatpush.bf16.msra.mxu0 0
        %826 = vmatpush.bf16.msra.mxu0 0
        %827 = vmatpush.bf16.msra.mxu0 0
        %828 = vmatpush.bf16.msra.mxu0 %v816
        %829 = vmatpush.bf16.msra.mxu0 %v815
        %830 = vmatmul.bf16.gmra.mxu0 %v820
        %v831 = vpop.f32.mrf.mxu0
        %v832 = vadd.f32 %v806, %v831
        %v833 = vpop.f32.mrf.mxu0
        %834 = vdwg.mxu0
        %v835 = vld [vmem:[#allocation5 + $0x24] ss:$0 sm:$0xff]
        %v836 = vld [vmem:[#allocation5 + $0x25] ss:$0 sm:$0xff]
        %v837 = vsel %vm767, %v832, 0.0
        %v838 = vrot.slane %v837, 4
        %v839 = vadd.f32 %v837, %v838
        %v840 = vrot.slane %v839, 2
        %v841 = vadd.f32 %v839, %v840
        %v842 = vrot.slane %v841, 1
        %v843 = vadd.f32 %v841, %v842
        %v844 = vmul.f32 %v843, %v377
        %v845 = vsub.f32 %v832, %v844
        %v846 = vmul.f32 %v845, %v845
        %v847 = vsel %vm767, %v846, 0.0
        %v848 = vrot.slane %v847, 4
        %v849 = vadd.f32 %v847, %v848
        %v850 = vrot.slane %v849, 2
        %v851 = vadd.f32 %v849, %v850
        %v852 = vrot.slane %v851, 1
        %v853 = vadd.f32 %v851, %v852
        %v854 = vmul.f32 %v853, %v377
        %v855 = vadd.f32 %v854, 1e-05
        %v856 = vrsqrt.pop %v855
        %v857 = vmul.f32 %v856, %v855
        %v858 = vmul.f32 %v857, %v856
        %v859 = vmul.f32 0.5, %v858
        %v860 = vsub.f32 1.5, %v859
        %v861 = vmul.f32 %v856, %v860
        %vm862 = vweird.f32 %v855
        %vm863 = vweird.f32 %v856
        %vm864 = vmor %vm862, %vm863
        %v865 = vsel %vm864, %v856, %v861
        %v866 = vmul.f32 %v845, %v865
        %v867 = vmul.f32 %v866, %v835
        %v868 = vadd.f32 %v867, %v836
        %v869 = vmax.f32 %v868, 0.0
        %v870 = vld [vmem:[#allocation2 + $0x2a0] sm:$0xf]
        %v871 = vld [vmem:[#allocation2 + $0x2a8] sm:$0xf]
        %v872 = vld [vmem:[#allocation2 + $0x2b0] sm:$0xf]
        %v873 = vld [vmem:[#allocation2 + $0x2b8] sm:$0xf]
        %v874 = vpack.c.bf16 %v869, %v869
        %v875 = vld [vmem:[#allocation5 + $0x30] ss:$0 sm:$0xff]
        %v880 = vunpack.c.l.b16 %v870
        %v881 = vunpack.c.l.b16 %v871
        %v882 = vunpack.c.l.b16 %v872
        %v883 = vunpack.c.l.b16 %v873
        %v884 = vpack.c.b16 %v881, %v880
        %v885 = vpack.c.b16 %v883, %v882
        %v889 = vsel %vm767, %v874, 0
        %891 = vmatpush.bf16.msra.mxu0 0
        %892 = vmatpush.bf16.msra.mxu0 0
        %893 = vmatpush.bf16.msra.mxu0 0
        %894 = vmatpush.bf16.msra.mxu0 0
        %895 = vmatpush.bf16.msra.mxu0 0
        %896 = vmatpush.bf16.msra.mxu0 0
        %897 = vmatpush.bf16.msra.mxu0 %v885
        %898 = vmatpush.bf16.msra.mxu0 %v884
        %899 = vmatmul.bf16.gmra.mxu0 %v889
        %v900 = vpop.f32.mrf.mxu0
        %v901 = vadd.f32 %v875, %v900
        %v902 = vpop.f32.mrf.mxu0
        %903 = vdwg.mxu0
        %v904 = vld [vmem:[#allocation5 + $0x31] ss:$0 sm:$0xff]
        %v905 = vld [vmem:[#allocation5 + $0x32] ss:$0 sm:$0xff]
        %vm906 = vcmask 130048
        %v907 = vsel %vm906, %v901, 0.0
        %v908 = vrot.slane %v907, 4
        %v909 = vadd.f32 %v907, %v908
        %v910 = vrot.slane %v909, 2
        %v911 = vadd.f32 %v909, %v910
        %v912 = vrot.slane %v911, 1
        %v913 = vadd.f32 %v911, %v912
        %v914 = vmul.f32 %v913, %v377
        %v915 = vsub.f32 %v901, %v914
        %v916 = vmul.f32 %v915, %v915
        %v917 = vsel %vm906, %v916, 0.0
        %v918 = vrot.slane %v917, 4
        %v919 = vadd.f32 %v917, %v918
        %v920 = vrot.slane %v919, 2
        %v921 = vadd.f32 %v919, %v920
        %v922 = vrot.slane %v921, 1
        %v923 = vadd.f32 %v921, %v922
        %v924 = vmul.f32 %v923, %v377
        %v925 = vadd.f32 %v924, 1e-05
        %v926 = vrsqrt.pop %v925
        %v927 = vmul.f32 %v926, %v925
        %v928 = vmul.f32 %v927, %v926
        %v929 = vmul.f32 0.5, %v928
        %v930 = vsub.f32 1.5, %v929
        %v931 = vmul.f32 %v926, %v930
        %vm932 = vweird.f32 %v925
        %vm933 = vweird.f32 %v926
        %vm934 = vmor %vm932, %vm933
        %v935 = vsel %vm934, %v926, %v931
        %v936 = vmul.f32 %v915, %v935
        %v937 = vmul.f32 %v936, %v904
        %v938 = vadd.f32 %v937, %v905
        %v939 = vmax.f32 %v938, 0.0
        %v940 = vld [vmem:[#allocation2 + $0x2c0] sm:$0xf]
        %v941 = vld [vmem:[#allocation2 + $0x2c8] sm:$0xf]
        %v942 = vpack.c.bf16 %v939, %v939
        %v943 = vld [vmem:[#allocation5 + $0x33] ss:$0 sm:$0xff]
        %v946 = vunpack.c.l.b16 %v940
        %v947 = vunpack.c.l.b16 %v941
        %v948 = vpack.c.b16 %v947, %v946
        %v951 = vsel %vm906, %v942, 0
        %953 = vmatpush.bf16.msra.mxu0 0
        %954 = vmatpush.bf16.msra.mxu0 0
        %955 = vmatpush.bf16.msra.mxu0 0
        %956 = vmatpush.bf16.msra.mxu0 0
        %957 = vmatpush.bf16.msra.mxu0 0
        %958 = vmatpush.bf16.msra.mxu0 0
        %959 = vmatpush.bf16.msra.mxu0 0
        %960 = vmatpush.bf16.msra.mxu0 %v948
        %961 = vmatmul.bf16.gmra.mxu0 %v951
        %v962 = vpop.f32.mrf.mxu0
        %v963 = vadd.f32 %v943, %v962
        %v964 = vpop.f32.mrf.mxu0
        %965 = vdwg.mxu0
        %v966 = vld [vmem:[#allocation5 + $0x34] ss:$0 sm:$0xff]
        %v967 = vld [vmem:[#allocation5 + $0x35] ss:$0 sm:$0xff]
        %v968 = vsel %vm906, %v963, 0.0
        %v969 = vrot.slane %v968, 4
        %v970 = vadd.f32 %v968, %v969
        %v971 = vrot.slane %v970, 2
        %v972 = vadd.f32 %v970, %v971
        %v973 = vrot.slane %v972, 1
        %v974 = vadd.f32 %v972, %v973
        %v975 = vmul.f32 %v974, %v377
        %v976 = vsub.f32 %v963, %v975
        %v977 = vmul.f32 %v976, %v976
        %v978 = vsel %vm906, %v977, 0.0
        %v979 = vrot.slane %v978, 4
        %v980 = vadd.f32 %v978, %v979
        %v981 = vrot.slane %v980, 2
        %v982 = vadd.f32 %v980, %v981
        %v983 = vrot.slane %v982, 1
        %v984 = vadd.f32 %v982, %v983
        %v985 = vmul.f32 %v984, %v377
        %v986 = vadd.f32 %v985, 1e-05
        %v987 = vrsqrt.pop %v986
        %v988 = vmul.f32 %v987, %v986
        %v989 = vmul.f32 %v988, %v987
        %v990 = vmul.f32 0.5, %v989
        %v991 = vsub.f32 1.5, %v990
        %v992 = vmul.f32 %v987, %v991
        %vm993 = vweird.f32 %v986
        %vm994 = vweird.f32 %v987
        %vm995 = vmor %vm993, %vm994
        %v996 = vsel %vm995, %v987, %v992
        %v997 = vmul.f32 %v976, %v996
        %v998 = vmul.f32 %v997, %v966
        %v999 = vadd.f32 %v998, %v967
        %v1000 = vmax.f32 %v999, 0.0
        %v1001 = vld [vmem:[#allocation2 + $0x2d0] sm:$0xf]
        %v1002 = vld [vmem:[#allocation2 + $0x2d8] sm:$0xf]
        %v1003 = vpack.c.bf16 %v1000, %v1000
        %v1004 = vld [vmem:[#allocation5 + $0x40] ss:$0 sm:$0xff]
        %v1007 = vunpack.c.l.b16 %v1001
        %v1008 = vunpack.c.l.b16 %v1002
        %v1009 = vpack.c.b16 %v1008, %v1007
        %v1012 = vsel %vm906, %v1003, 0
        %1014 = vmatpush.bf16.msra.mxu0 0
        %1015 = vmatpush.bf16.msra.mxu0 0
        %1016 = vmatpush.bf16.msra.mxu0 0
        %1017 = vmatpush.bf16.msra.mxu0 0
        %1018 = vmatpush.bf16.msra.mxu0 0
        %1019 = vmatpush.bf16.msra.mxu0 0
        %1020 = vmatpush.bf16.msra.mxu0 0
        %1021 = vmatpush.bf16.msra.mxu0 %v1009
        %1022 = vmatmul.bf16.gmra.mxu0 %v1012
        %v1023 = vpop.f32.mrf.mxu0
        %v1024 = vadd.f32 %v1004, %v1023
        %v1025 = vpop.f32.mrf.mxu0
        %1026 = vdwg.mxu0
        %v1027 = vld [vmem:[#allocation5 + $0x41] ss:$0 sm:$0xff]
        %v1028 = vld [vmem:[#allocation5 + $0x42] ss:$0 sm:$0xff]
        %v1029 = vsel %vm767, %v1024, 0.0
        %v1030 = vrot.slane %v1029, 4
        %v1031 = vadd.f32 %v1029, %v1030
        %v1032 = vrot.slane %v1031, 2
        %v1033 = vadd.f32 %v1031, %v1032
        %v1034 = vrot.slane %v1033, 1
        %v1035 = vadd.f32 %v1033, %v1034
        %v1036 = vmul.f32 %v1035, %v377
        %v1037 = vsub.f32 %v1024, %v1036
        %v1038 = vmul.f32 %v1037, %v1037
        %v1039 = vsel %vm767, %v1038, 0.0
        %v1040 = vrot.slane %v1039, 4
        %v1041 = vadd.f32 %v1039, %v1040
        %v1042 = vrot.slane %v1041, 2
        %v1043 = vadd.f32 %v1041, %v1042
        %v1044 = vrot.slane %v1043, 1
        %v1045 = vadd.f32 %v1043, %v1044
        %v1046 = vmul.f32 %v1045, %v377
        %v1047 = vadd.f32 %v1046, 1e-05
        %v1048 = vrsqrt.pop %v1047
        %v1049 = vmul.f32 %v1048, %v1047
        %v1050 = vmul.f32 %v1049, %v1048
        %v1051 = vmul.f32 0.5, %v1050
        %v1052 = vsub.f32 1.5, %v1051
        %v1053 = vmul.f32 %v1048, %v1052
        %vm1054 = vweird.f32 %v1047
        %vm1055 = vweird.f32 %v1048
        %vm1056 = vmor %vm1054, %vm1055
        %v1057 = vsel %vm1056, %v1048, %v1053
        %v1058 = vmul.f32 %v1037, %v1057
        %v1059 = vmul.f32 %v1058, %v1027
        %v1060 = vadd.f32 %v1059, %v1028
        %v1061 = vmax.f32 %v1060, 0.0
        %v1062 = vld [vmem:[#allocation2 + $0x2e0] sm:$0xf]
        %v1063 = vld [vmem:[#allocation2 + $0x2e8] sm:$0xf]
        %v1064 = vld [vmem:[#allocation2 + $0x2f0] sm:$0xf]
        %v1065 = vld [vmem:[#allocation2 + $0x2f8] sm:$0xf]
        %v1066 = vpack.c.bf16 %v1061, %v1061
        %v1067 = vld [vmem:[#allocation5 + $0x43] ss:$0 sm:$0xff]
        %v1072 = vunpack.c.l.b16 %v1062
        %v1073 = vunpack.c.l.b16 %v1063
        %v1074 = vunpack.c.l.b16 %v1064
        %v1075 = vunpack.c.l.b16 %v1065
        %v1076 = vpack.c.b16 %v1073, %v1072
        %v1077 = vpack.c.b16 %v1075, %v1074
        %v1081 = vsel %vm767, %v1066, 0
        %1083 = vmatpush.bf16.msra.mxu0 0
        %1084 = vmatpush.bf16.msra.mxu0 0
        %1085 = vmatpush.bf16.msra.mxu0 0
        %1086 = vmatpush.bf16.msra.mxu0 0
        %1087 = vmatpush.bf16.msra.mxu0 0
        %1088 = vmatpush.bf16.msra.mxu0 0
        %1089 = vmatpush.bf16.msra.mxu0 %v1077
        %1090 = vmatpush.bf16.msra.mxu0 %v1076
        %1091 = vmatmul.bf16.gmra.mxu0 %v1081
        %v1092 = vpop.f32.mrf.mxu0
        %v1093 = vadd.f32 %v1067, %v1092
        %v1094 = vpop.f32.mrf.mxu0
        %1095 = vdwg.mxu0
        %v1096 = vld [vmem:[#allocation5 + $0x44] ss:$0 sm:$0xff]
        %v1097 = vld [vmem:[#allocation5 + $0x45] ss:$0 sm:$0xff]
        %v1098 = vsel %vm767, %v1093, 0.0
        %v1099 = vrot.slane %v1098, 4
        %v1100 = vadd.f32 %v1098, %v1099
        %v1101 = vrot.slane %v1100, 2
        %v1102 = vadd.f32 %v1100, %v1101
        %v1103 = vrot.slane %v1102, 1
        %v1104 = vadd.f32 %v1102, %v1103
        %v1105 = vmul.f32 %v1104, %v377
        %v1106 = vsub.f32 %v1093, %v1105
        %v1107 = vmul.f32 %v1106, %v1106
        %v1108 = vsel %vm767, %v1107, 0.0
        %v1109 = vrot.slane %v1108, 4
        %v1110 = vadd.f32 %v1108, %v1109
        %v1111 = vrot.slane %v1110, 2
        %v1112 = vadd.f32 %v1110, %v1111
        %v1113 = vrot.slane %v1112, 1
        %v1114 = vadd.f32 %v1112, %v1113
        %v1115 = vmul.f32 %v1114, %v377
        %v1116 = vadd.f32 %v1115, 1e-05
        %v1117 = vrsqrt.pop %v1116
        %v1118 = vmul.f32 %v1117, %v1116
        %v1119 = vmul.f32 %v1118, %v1117
        %v1120 = vmul.f32 0.5, %v1119
        %v1121 = vsub.f32 1.5, %v1120
        %v1122 = vmul.f32 %v1117, %v1121
        %vm1123 = vweird.f32 %v1116
        %vm1124 = vweird.f32 %v1117
        %vm1125 = vmor %vm1123, %vm1124
        %v1126 = vsel %vm1125, %v1117, %v1122
        %v1127 = vmul.f32 %v1106, %v1126
        %v1128 = vmul.f32 %v1127, %v1096
        %v1129 = vadd.f32 %v1128, %v1097
        %v1130 = vmax.f32 %v1129, 0.0
        %v1131 = vld [vmem:[#allocation2 + $0x5a0] sm:$0xf]
        %v1132 = vld [vmem:[#allocation2 + $0x5a8] sm:$0xf]
        %v1133 = vld [vmem:[#allocation2 + $0x5b0] sm:$0xf]
        %v1134 = vld [vmem:[#allocation2 + $0x5b8] sm:$0xf]
        %v1135 = vld [vmem:[#allocation2 + $0x5c0] sm:$0xf]
        %v1136 = vld [vmem:[#allocation2 + $0x5c8] sm:$0xf]
        %v1137 = vld [vmem:[#allocation2 + $0x5d0] sm:$0xf]
        %v1138 = vld [vmem:[#allocation2 + $0x5d8] sm:$0xf]
        %v1139 = vpack.c.bf16 %v1130, %v1130
        %v1144 = vunpack.c.l.b16 %v1135
        %v1145 = vunpack.c.l.b16 %v1136
        %v1146 = vunpack.c.l.b16 %v1137
        %v1147 = vunpack.c.l.b16 %v1138
        %v1148 = vpack.c.b16 %v1145, %v1144
        %v1149 = vpack.c.b16 %v1147, %v1146
        %1152 = vmatpush.bf16.msra.mxu0 0
        %1153 = vmatpush.bf16.msra.mxu0 0
        %1154 = vmatpush.bf16.msra.mxu0 0
        %1155 = vmatpush.bf16.msra.mxu0 0
        %1156 = vmatpush.bf16.msra.mxu0 0
        %1157 = vmatpush.bf16.msra.mxu0 0
        %1158 = vmatpush.bf16.msra.mxu0 %v1149
        %1159 = vmatpush.bf16.msra.mxu0 %v1148
        %1160 = vmatmul.bf16.gmra.mxu0 %v889
        %v1161 = vpop.f32.mrf.mxu0
        %v1162 = vadd.f32 0.0, %v1161
        %v1163 = vpop.f32.mrf.mxu0
        %1164 = vdwg.mxu0
        %v1169 = vunpack.c.l.b16 %v1131
        %v1170 = vunpack.c.l.b16 %v1132
        %v1171 = vunpack.c.l.b16 %v1133
        %v1172 = vunpack.c.l.b16 %v1134
        %v1173 = vpack.c.b16 %v1170, %v1169
        %v1174 = vpack.c.b16 %v1172, %v1171
        %v1178 = vsel %vm767, %v1139, 0
        %1180 = vmatpush.bf16.msra.mxu0 0
        %1181 = vmatpush.bf16.msra.mxu0 0
        %1182 = vmatpush.bf16.msra.mxu0 0
        %1183 = vmatpush.bf16.msra.mxu0 0
        %1184 = vmatpush.bf16.msra.mxu0 0
        %1185 = vmatpush.bf16.msra.mxu0 0
        %1186 = vmatpush.bf16.msra.mxu0 %v1174
        %1187 = vmatpush.bf16.msra.mxu0 %v1173
        %1188 = vmatmul.bf16.gmra.mxu0 %v1178
        %v1189 = vpop.f32.mrf.mxu0
        %v1190 = vadd.f32 %v1162, %v1189
        %v1191 = vpop.f32.mrf.mxu0
        %1192 = vdwg.mxu0
        %v1193 = vld [vmem:[#allocation2 + $0x300] sm:$0xf]
        %v1194 = vld [vmem:[#allocation2 + $0x308] sm:$0xf]
        %v1195 = vld [vmem:[#allocation2 + $0x310] sm:$0xf]
        %v1196 = vld [vmem:[#allocation2 + $0x318] sm:$0xf]
        %v1197 = vpack.c.bf16 %v1190, %v1190
        %v1198 = vld [vmem:[#allocation5 + $0x50] ss:$0 sm:$0xff]
        %v1203 = vunpack.c.l.b16 %v1193
        %v1204 = vunpack.c.l.b16 %v1194
        %v1205 = vunpack.c.l.b16 %v1195
        %v1206 = vunpack.c.l.b16 %v1196
        %v1207 = vpack.c.b16 %v1204, %v1203
        %v1208 = vpack.c.b16 %v1206, %v1205
        %v1212 = vsel %vm767, %v1197, 0
        %1214 = vmatpush.bf16.msra.mxu0 0
        %1215 = vmatpush.bf16.msra.mxu0 0
        %1216 = vmatpush.bf16.msra.mxu0 0
        %1217 = vmatpush.bf16.msra.mxu0 0
        %1218 = vmatpush.bf16.msra.mxu0 0
        %1219 = vmatpush.bf16.msra.mxu0 0
        %1220 = vmatpush.bf16.msra.mxu0 %v1208
        %1221 = vmatpush.bf16.msra.mxu0 %v1207
        %1222 = vmatmul.bf16.gmra.mxu0 %v1212
        %v1223 = vpop.f32.mrf.mxu0
        %v1224 = vadd.f32 %v1198, %v1223
        %v1225 = vpop.f32.mrf.mxu0
        %1226 = vdwg.mxu0
        %v1227 = vld [vmem:[#allocation5 + $0x51] ss:$0 sm:$0xff]
        %v1228 = vld [vmem:[#allocation5 + $0x52] ss:$0 sm:$0xff]
        %v1229 = vsel %vm596, %v1224, 0.0
        %v1230 = vrot.slane %v1229, 4
        %v1231 = vadd.f32 %v1229, %v1230
        %v1232 = vrot.slane %v1231, 2
        %v1233 = vadd.f32 %v1231, %v1232
        %v1234 = vrot.slane %v1233, 1
        %v1235 = vadd.f32 %v1233, %v1234
        %v1236 = vmul.f32 %v1235, %v377
        %v1237 = vsub.f32 %v1224, %v1236
        %v1238 = vmul.f32 %v1237, %v1237
        %v1239 = vsel %vm596, %v1238, 0.0
        %v1240 = vrot.slane %v1239, 4
        %v1241 = vadd.f32 %v1239, %v1240
        %v1242 = vrot.slane %v1241, 2
        %v1243 = vadd.f32 %v1241, %v1242
        %v1244 = vrot.slane %v1243, 1
        %v1245 = vadd.f32 %v1243, %v1244
        %v1246 = vmul.f32 %v1245, %v377
        %v1247 = vadd.f32 %v1246, 1e-05
        %v1248 = vrsqrt.pop %v1247
        %v1249 = vmul.f32 %v1248, %v1247
        %v1250 = vmul.f32 %v1249, %v1248
        %v1251 = vmul.f32 0.5, %v1250
        %v1252 = vsub.f32 1.5, %v1251
        %v1253 = vmul.f32 %v1248, %v1252
        %vm1254 = vweird.f32 %v1247
        %vm1255 = vweird.f32 %v1248
        %vm1256 = vmor %vm1254, %vm1255
        %v1257 = vsel %vm1256, %v1248, %v1253
        %v1258 = vmul.f32 %v1237, %v1257
        %v1259 = vmul.f32 %v1258, %v1227
        %v1260 = vadd.f32 %v1259, %v1228
        %v1261 = vmax.f32 %v1260, 0.0
        %v1262 = vld [vmem:[#allocation2 + $0x320] sm:$0xf]
        %v1263 = vld [vmem:[#allocation2 + $0x328] sm:$0xf]
        %v1264 = vld [vmem:[#allocation2 + $0x330] sm:$0xf]
        %v1265 = vld [vmem:[#allocation2 + $0x338] sm:$0xf]
        %v1266 = vld [vmem:[#allocation2 + $0x340] sm:$0xf]
        %v1267 = vld [vmem:[#allocation2 + $0x348] sm:$0xf]
        %v1268 = vld [vmem:[#allocation2 + $0x350] sm:$0xf]
        %v1269 = vld [vmem:[#allocation2 + $0x358] sm:$0xf]
        %v1270 = vpack.c.bf16 %v1261, %v1261
        %v1271 = vld [vmem:[#allocation5 + $0x53] ss:$0 sm:$0xff]
        %v1280 = vunpack.c.l.b16 %v1262
        %v1281 = vunpack.c.l.b16 %v1263
        %v1282 = vunpack.c.l.b16 %v1264
        %v1283 = vunpack.c.l.b16 %v1265
        %v1284 = vunpack.c.l.b16 %v1266
        %v1285 = vunpack.c.l.b16 %v1267
        %v1286 = vunpack.c.l.b16 %v1268
        %v1287 = vunpack.c.l.b16 %v1269
        %v1288 = vpack.c.b16 %v1281, %v1280
        %v1289 = vpack.c.b16 %v1283, %v1282
        %v1290 = vpack.c.b16 %v1285, %v1284
        %v1291 = vpack.c.b16 %v1287, %v1286
        %v1297 = vsel %vm596, %v1270, 0
        %1299 = vmatpush.bf16.msra.mxu0 0
        %1300 = vmatpush.bf16.msra.mxu0 0
        %1301 = vmatpush.bf16.msra.mxu0 0
        %1302 = vmatpush.bf16.msra.mxu0 0
        %1303 = vmatpush.bf16.msra.mxu0 %v1291
        %1304 = vmatpush.bf16.msra.mxu0 %v1290
        %1305 = vmatpush.bf16.msra.mxu0 %v1289
        %1306 = vmatpush.bf16.msra.mxu0 %v1288
        %1307 = vmatmul.bf16.gmra.mxu0 %v1297
        %v1308 = vpop.f32.mrf.mxu0
        %v1309 = vadd.f32 %v1271, %v1308
        %v1310 = vpop.f32.mrf.mxu0
        %1311 = vdwg.mxu0
        %v1312 = vld [vmem:[#allocation5 + $0x54] ss:$0 sm:$0xff]
        %v1313 = vld [vmem:[#allocation5 + $0x55] ss:$0 sm:$0xff]
        %v1314 = vsel %vm596, %v1309, 0.0
        %v1315 = vrot.slane %v1314, 4
        %v1316 = vadd.f32 %v1314, %v1315
        %v1317 = vrot.slane %v1316, 2
        %v1318 = vadd.f32 %v1316, %v1317
        %v1319 = vrot.slane %v1318, 1
        %v1320 = vadd.f32 %v1318, %v1319
        %v1321 = vmul.f32 %v1320, %v377
        %v1322 = vsub.f32 %v1309, %v1321
        %v1323 = vmul.f32 %v1322, %v1322
        %v1324 = vsel %vm596, %v1323, 0.0
        %v1325 = vrot.slane %v1324, 4
        %v1326 = vadd.f32 %v1324, %v1325
        %v1327 = vrot.slane %v1326, 2
        %v1328 = vadd.f32 %v1326, %v1327
        %v1329 = vrot.slane %v1328, 1
        %v1330 = vadd.f32 %v1328, %v1329
        %v1331 = vmul.f32 %v1330, %v377
        %v1332 = vadd.f32 %v1331, 1e-05
        %v1333 = vrsqrt.pop %v1332
        %v1334 = vmul.f32 %v1333, %v1332
        %v1335 = vmul.f32 %v1334, %v1333
        %v1336 = vmul.f32 0.5, %v1335
        %v1337 = vsub.f32 1.5, %v1336
        %v1338 = vmul.f32 %v1333, %v1337
        %vm1339 = vweird.f32 %v1332
        %vm1340 = vweird.f32 %v1333
        %vm1341 = vmor %vm1339, %vm1340
        %v1342 = vsel %vm1341, %v1333, %v1338
        %v1343 = vmul.f32 %v1322, %v1342
        %v1344 = vmul.f32 %v1343, %v1312
        %v1345 = vadd.f32 %v1344, %v1313
        %v1346 = vmax.f32 %v1345, 0.0
        %v1347 = vld [vmem:[#allocation2 + $0x5e0] sm:$0xf]
        %v1348 = vld [vmem:[#allocation2 + $0x5e8] sm:$0xf]
        %v1349 = vld [vmem:[#allocation2 + $0x5f0] sm:$0xf]
        %v1350 = vld [vmem:[#allocation2 + $0x5f8] sm:$0xf]
        %v1351 = vld [vmem:[#allocation2 + $0x600] sm:$0xf]
        %v1352 = vld [vmem:[#allocation2 + $0x608] sm:$0xf]
        %v1353 = vld [vmem:[#allocation2 + $0x610] sm:$0xf]
        %v1354 = vld [vmem:[#allocation2 + $0x618] sm:$0xf]
        %v1355 = vld [vmem:[#allocation2 + $0x620] sm:$0xf]
        %v1356 = vld [vmem:[#allocation2 + $0x628] sm:$0xf]
        %v1357 = vld [vmem:[#allocation2 + $0x630] sm:$0xf]
        %v1358 = vld [vmem:[#allocation2 + $0x638] sm:$0xf]
        %v1359 = vld [vmem:[#allocation2 + $0x640] sm:$0xf]
        %v1360 = vld [vmem:[#allocation2 + $0x648] sm:$0xf]
        %v1361 = vld [vmem:[#allocation2 + $0x650] sm:$0xf]
        %v1362 = vld [vmem:[#allocation2 + $0x658] sm:$0xf]
        %v1363 = vpack.c.bf16 %v1346, %v1346
        %v1372 = vunpack.c.l.b16 %v1355
        %v1373 = vunpack.c.l.b16 %v1356
        %v1374 = vunpack.c.l.b16 %v1357
        %v1375 = vunpack.c.l.b16 %v1358
        %v1376 = vunpack.c.l.b16 %v1359
        %v1377 = vunpack.c.l.b16 %v1360
        %v1378 = vunpack.c.l.b16 %v1361
        %v1379 = vunpack.c.l.b16 %v1362
        %v1380 = vpack.c.b16 %v1373, %v1372
        %v1381 = vpack.c.b16 %v1375, %v1374
        %v1382 = vpack.c.b16 %v1377, %v1376
        %v1383 = vpack.c.b16 %v1379, %v1378
        %1388 = vmatpush.bf16.msra.mxu0 0
        %1389 = vmatpush.bf16.msra.mxu0 0
        %1390 = vmatpush.bf16.msra.mxu0 0
        %1391 = vmatpush.bf16.msra.mxu0 0
        %1392 = vmatpush.bf16.msra.mxu0 %v1383
        %1393 = vmatpush.bf16.msra.mxu0 %v1382
        %1394 = vmatpush.bf16.msra.mxu0 %v1381
        %1395 = vmatpush.bf16.msra.mxu0 %v1380
        %1396 = vmatmul.bf16.gmra.mxu0 %v750
        %v1397 = vpop.f32.mrf.mxu0
        %v1398 = vadd.f32 0.0, %v1397
        %v1399 = vpop.f32.mrf.mxu0
        %1400 = vdwg.mxu0
        %v1409 = vunpack.c.l.b16 %v1347
        %v1410 = vunpack.c.l.b16 %v1348
        %v1411 = vunpack.c.l.b16 %v1349
        %v1412 = vunpack.c.l.b16 %v1350
        %v1413 = vunpack.c.l.b16 %v1351
        %v1414 = vunpack.c.l.b16 %v1352
        %v1415 = vunpack.c.l.b16 %v1353
        %v1416 = vunpack.c.l.b16 %v1354
        %v1417 = vpack.c.b16 %v1410, %v1409
        %v1418 = vpack.c.b16 %v1412, %v1411
        %v1419 = vpack.c.b16 %v1414, %v1413
        %v1420 = vpack.c.b16 %v1416, %v1415
        %v1426 = vsel %vm596, %v1363, 0
        %1428 = vmatpush.bf16.msra.mxu0 0
        %1429 = vmatpush.bf16.msra.mxu0 0
        %1430 = vmatpush.bf16.msra.mxu0 0
        %1431 = vmatpush.bf16.msra.mxu0 0
        %1432 = vmatpush.bf16.msra.mxu0 %v1420
        %1433 = vmatpush.bf16.msra.mxu0 %v1419
        %1434 = vmatpush.bf16.msra.mxu0 %v1418
        %1435 = vmatpush.bf16.msra.mxu0 %v1417
        %1436 = vmatmul.bf16.gmra.mxu0 %v1426
        %v1437 = vpop.f32.mrf.mxu0
        %v1438 = vadd.f32 %v1398, %v1437
        %v1439 = vpop.f32.mrf.mxu0
        %1440 = vdwg.mxu0
        %v1441 = vld [vmem:[#allocation2 + $0x360] sm:$0xf]
        %v1442 = vld [vmem:[#allocation2 + $0x368] sm:$0xf]
        %v1443 = vld [vmem:[#allocation2 + $0x370] sm:$0xf]
        %v1444 = vld [vmem:[#allocation2 + $0x378] sm:$0xf]
        %v1445 = vld [vmem:[#allocation2 + $0x380] sm:$0xf]
        %v1446 = vld [vmem:[#allocation2 + $0x388] sm:$0xf]
        %v1447 = vld [vmem:[#allocation2 + $0x390] sm:$0xf]
        %v1448 = vld [vmem:[#allocation2 + $0x398] sm:$0xf]
        %v1449 = vpack.c.bf16 %v1438, %v1438
        %v1450 = vld [vmem:[#allocation5 + $0x60] ss:$0 sm:$0xff]
        %v1459 = vunpack.c.l.b16 %v1441
        %v1460 = vunpack.c.l.b16 %v1442
        %v1461 = vunpack.c.l.b16 %v1443
        %v1462 = vunpack.c.l.b16 %v1444
        %v1463 = vunpack.c.l.b16 %v1445
        %v1464 = vunpack.c.l.b16 %v1446
        %v1465 = vunpack.c.l.b16 %v1447
        %v1466 = vunpack.c.l.b16 %v1448
        %v1467 = vpack.c.b16 %v1460, %v1459
        %v1468 = vpack.c.b16 %v1462, %v1461
        %v1469 = vpack.c.b16 %v1464, %v1463
        %v1470 = vpack.c.b16 %v1466, %v1465
        %v1476 = vsel %vm596, %v1449, 0
        %1478 = vmatpush.bf16.msra.mxu0 0
        %1479 = vmatpush.bf16.msra.mxu0 0
        %1480 = vmatpush.bf16.msra.mxu0 0
        %1481 = vmatpush.bf16.msra.mxu0 0
        %1482 = vmatpush.bf16.msra.mxu0 %v1470
        %1483 = vmatpush.bf16.msra.mxu0 %v1469
        %1484 = vmatpush.bf16.msra.mxu0 %v1468
        %1485 = vmatpush.bf16.msra.mxu0 %v1467
        %1486 = vmatmul.bf16.gmra.mxu0 %v1476
        %v1487 = vpop.f32.mrf.mxu0
        %v1488 = vadd.f32 %v1450, %v1487
        %v1489 = vpop.f32.mrf.mxu0
        %1490 = vdwg.mxu0
        %v1491 = vld [vmem:[#allocation5 + $0x61] ss:$0 sm:$0xff]
        %v1492 = vld [vmem:[#allocation5 + $0x62] ss:$0 sm:$0xff]
        %v1493 = vrot.slane %v1488, 4
        %v1494 = vadd.f32 %v1488, %v1493
        %v1495 = vrot.slane %v1494, 2
        %v1496 = vadd.f32 %v1494, %v1495
        %v1497 = vrot.slane %v1496, 1
        %v1498 = vadd.f32 %v1496, %v1497
        %v1499 = vmul.f32 %v1498, %v377
        %v1500 = vsub.f32 %v1488, %v1499
        %v1501 = vmul.f32 %v1500, %v1500
        %v1502 = vrot.slane %v1501, 4
        %v1503 = vadd.f32 %v1501, %v1502
        %v1504 = vrot.slane %v1503, 2
        %v1505 = vadd.f32 %v1503, %v1504
        %v1506 = vrot.slane %v1505, 1
        %v1507 = vadd.f32 %v1505, %v1506
        %v1508 = vmul.f32 %v1507, %v377
        %v1509 = vadd.f32 %v1508, 1e-05
        %v1510 = vrsqrt.pop %v1509
        %v1511 = vmul.f32 %v1510, %v1509
        %v1512 = vmul.f32 %v1511, %v1510
        %v1513 = vmul.f32 0.5, %v1512
        %v1514 = vsub.f32 1.5, %v1513
        %v1515 = vmul.f32 %v1510, %v1514
        %vm1516 = vweird.f32 %v1509
        %vm1517 = vweird.f32 %v1510
        %vm1518 = vmor %vm1516, %vm1517
        %v1519 = vsel %vm1518, %v1510, %v1515
        %v1520 = vmul.f32 %v1500, %v1519
        %v1521 = vmul.f32 %v1520, %v1491
        %v1522 = vadd.f32 %v1521, %v1492
        %v1523 = vmax.f32 %v1522, 0.0
        %v1524 = vld [vmem:[#allocation2 + $0x3a0] sm:$0xf]
        %v1525 = vld [vmem:[#allocation2 + $0x3a8] sm:$0xf]
        %v1526 = vld [vmem:[#allocation2 + $0x3b0] sm:$0xf]
        %v1527 = vld [vmem:[#allocation2 + $0x3b8] sm:$0xf]
        %v1528 = vld [vmem:[#allocation2 + $0x3c0] sm:$0xf]
        %v1529 = vld [vmem:[#allocation2 + $0x3c8] sm:$0xf]
        %v1530 = vld [vmem:[#allocation2 + $0x3d0] sm:$0xf]
        %v1531 = vld [vmem:[#allocation2 + $0x3d8] sm:$0xf]
        %v1532 = vld [vmem:[#allocation2 + $0x3e0] sm:$0xf]
        %v1533 = vld [vmem:[#allocation2 + $0x3e8] sm:$0xf]
        %v1534 = vld [vmem:[#allocation2 + $0x3f0] sm:$0xf]
        %v1535 = vld [vmem:[#allocation2 + $0x3f8] sm:$0xf]
        %v1536 = vld [vmem:[#allocation2 + $0x400] sm:$0xf]
        %v1537 = vld [vmem:[#allocation2 + $0x408] sm:$0xf]
        %v1538 = vld [vmem:[#allocation2 + $0x410] sm:$0xf]
        %v1539 = vld [vmem:[#allocation2 + $0x418] sm:$0xf]
        %v1540 = vpack.c.bf16 %v1523, %v1523
        %v1541 = vld [vmem:[#allocation5 + $0x63] ss:$0 sm:$0xff]
        %v1558 = vunpack.c.l.b16 %v1524
        %v1559 = vunpack.c.l.b16 %v1525
        %v1560 = vunpack.c.l.b16 %v1526
        %v1561 = vunpack.c.l.b16 %v1527
        %v1562 = vunpack.c.l.b16 %v1528
        %v1563 = vunpack.c.l.b16 %v1529
        %v1564 = vunpack.c.l.b16 %v1530
        %v1565 = vunpack.c.l.b16 %v1531
        %v1566 = vunpack.c.l.b16 %v1532
        %v1567 = vunpack.c.l.b16 %v1533
        %v1568 = vunpack.c.l.b16 %v1534
        %v1569 = vunpack.c.l.b16 %v1535
        %v1570 = vunpack.c.l.b16 %v1536
        %v1571 = vunpack.c.l.b16 %v1537
        %v1572 = vunpack.c.l.b16 %v1538
        %v1573 = vunpack.c.l.b16 %v1539
        %v1574 = vpack.c.b16 %v1559, %v1558
        %v1575 = vpack.c.b16 %v1561, %v1560
        %v1576 = vpack.c.b16 %v1563, %v1562
        %v1577 = vpack.c.b16 %v1565, %v1564
        %v1578 = vpack.c.b16 %v1567, %v1566
        %v1579 = vpack.c.b16 %v1569, %v1568
        %v1580 = vpack.c.b16 %v1571, %v1570
        %v1581 = vpack.c.b16 %v1573, %v1572
        %1590 = vmatpush.bf16.msra.mxu0 %v1581
        %1591 = vmatpush.bf16.msra.mxu0 %v1580
        %1592 = vmatpush.bf16.msra.mxu0 %v1579
        %1593 = vmatpush.bf16.msra.mxu0 %v1578
        %1594 = vmatpush.bf16.msra.mxu0 %v1577
        %1595 = vmatpush.bf16.msra.mxu0 %v1576
        %1596 = vmatpush.bf16.msra.mxu0 %v1575
        %1597 = vmatpush.bf16.msra.mxu0 %v1574
        %1598 = vmatmul.bf16.gmra.mxu0 %v1540
        %v1599 = vpop.f32.mrf.mxu0
        %v1600 = vadd.f32 %v1541, %v1599
        %v1601 = vpop.f32.mrf.mxu0
        %1602 = vdwg.mxu0
        %v1603 = vld [vmem:[#allocation5 + $0x64] ss:$0 sm:$0xff]
        %v1604 = vld [vmem:[#allocation5 + $0x65] ss:$0 sm:$0xff]
        %v1605 = vrot.slane %v1600, 4
        %v1606 = vadd.f32 %v1600, %v1605
        %v1607 = vrot.slane %v1606, 2
        %v1608 = vadd.f32 %v1606, %v1607
        %v1609 = vrot.slane %v1608, 1
        %v1610 = vadd.f32 %v1608, %v1609
        %v1611 = vmul.f32 %v1610, %v377
        %v1612 = vsub.f32 %v1600, %v1611
        %v1613 = vmul.f32 %v1612, %v1612
        %v1614 = vrot.slane %v1613, 4
        %v1615 = vadd.f32 %v1613, %v1614
        %v1616 = vrot.slane %v1615, 2
        %v1617 = vadd.f32 %v1615, %v1616
        %v1618 = vrot.slane %v1617, 1
        %v1619 = vadd.f32 %v1617, %v1618
        %v1620 = vmul.f32 %v1619, %v377
        %v1621 = vadd.f32 %v1620, 1e-05
        %v1622 = vrsqrt.pop %v1621
        %v1623 = vmul.f32 %v1622, %v1621
        %v1624 = vmul.f32 %v1623, %v1622
        %v1625 = vmul.f32 0.5, %v1624
        %v1626 = vsub.f32 1.5, %v1625
        %v1627 = vmul.f32 %v1622, %v1626
        %vm1628 = vweird.f32 %v1621
        %vm1629 = vweird.f32 %v1622
        %vm1630 = vmor %vm1628, %vm1629
        %v1631 = vsel %vm1630, %v1622, %v1627
        %v1632 = vmul.f32 %v1612, %v1631
        %v1633 = vmul.f32 %v1632, %v1603
        %v1634 = vadd.f32 %v1633, %v1604
        %v1635 = vmax.f32 %v1634, 0.0
        %v1636 = vld [vmem:[#allocation2 + $0x660] sm:$0xf]
        %v1637 = vld [vmem:[#allocation2 + $0x668] sm:$0xf]
        %v1638 = vld [vmem:[#allocation2 + $0x670] sm:$0xf]
        %v1639 = vld [vmem:[#allocation2 + $0x678] sm:$0xf]
        %v1640 = vld [vmem:[#allocation2 + $0x680] sm:$0xf]
        %v1641 = vld [vmem:[#allocation2 + $0x688] sm:$0xf]
        %v1642 = vld [vmem:[#allocation2 + $0x690] sm:$0xf]
        %v1643 = vld [vmem:[#allocation2 + $0x698] sm:$0xf]
        %v1644 = vld [vmem:[#allocation2 + $0x6a0] sm:$0xf]
        %v1645 = vld [vmem:[#allocation2 + $0x6a8] sm:$0xf]
        %v1646 = vld [vmem:[#allocation2 + $0x6b0] sm:$0xf]
        %v1647 = vld [vmem:[#allocation2 + $0x6b8] sm:$0xf]
        %v1648 = vld [vmem:[#allocation2 + $0x6c0] sm:$0xf]
        %v1649 = vld [vmem:[#allocation2 + $0x6c8] sm:$0xf]
        %v1650 = vld [vmem:[#allocation2 + $0x6d0] sm:$0xf]
        %v1651 = vld [vmem:[#allocation2 + $0x6d8] sm:$0xf]
        %v1652 = vld [vmem:[#allocation2 + $0x6e0] sm:$0xf]
        %v1653 = vld [vmem:[#allocation2 + $0x6e8] sm:$0xf]
        %v1654 = vld [vmem:[#allocation2 + $0x6f0] sm:$0xf]
        %v1655 = vld [vmem:[#allocation2 + $0x6f8] sm:$0xf]
        %v1656 = vld [vmem:[#allocation2 + $0x700] sm:$0xf]
        %v1657 = vld [vmem:[#allocation2 + $0x708] sm:$0xf]
        %v1658 = vld [vmem:[#allocation2 + $0x710] sm:$0xf]
        %v1659 = vld [vmem:[#allocation2 + $0x718] sm:$0xf]
        %v1660 = vld [vmem:[#allocation2 + $0x720] sm:$0xf]
        %v1661 = vld [vmem:[#allocation2 + $0x728] sm:$0xf]
        %v1662 = vld [vmem:[#allocation2 + $0x730] sm:$0xf]
        %v1663 = vld [vmem:[#allocation2 + $0x738] sm:$0xf]
        %v1664 = vld [vmem:[#allocation2 + $0x740] sm:$0xf]
        %v1665 = vld [vmem:[#allocation2 + $0x748] sm:$0xf]
        %v1666 = vld [vmem:[#allocation2 + $0x750] sm:$0xf]
        %v1667 = vld [vmem:[#allocation2 + $0x758] sm:$0xf]
        %v1668 = vpack.c.bf16 %v1635, %v1635
        %v1685 = vunpack.c.l.b16 %v1652
        %v1686 = vunpack.c.l.b16 %v1653
        %v1687 = vunpack.c.l.b16 %v1654
        %v1688 = vunpack.c.l.b16 %v1655
        %v1689 = vunpack.c.l.b16 %v1656
        %v1690 = vunpack.c.l.b16 %v1657
        %v1691 = vunpack.c.l.b16 %v1658
        %v1692 = vunpack.c.l.b16 %v1659
        %v1693 = vunpack.c.l.b16 %v1660
        %v1694 = vunpack.c.l.b16 %v1661
        %v1695 = vunpack.c.l.b16 %v1662
        %v1696 = vunpack.c.l.b16 %v1663
        %v1697 = vunpack.c.l.b16 %v1664
        %v1698 = vunpack.c.l.b16 %v1665
        %v1699 = vunpack.c.l.b16 %v1666
        %v1700 = vunpack.c.l.b16 %v1667
        %v1701 = vpack.c.b16 %v1686, %v1685
        %v1702 = vpack.c.b16 %v1688, %v1687
        %v1703 = vpack.c.b16 %v1690, %v1689
        %v1704 = vpack.c.b16 %v1692, %v1691
        %v1705 = vpack.c.b16 %v1694, %v1693
        %v1706 = vpack.c.b16 %v1696, %v1695
        %v1707 = vpack.c.b16 %v1698, %v1697
        %v1708 = vpack.c.b16 %v1700, %v1699
        %1717 = vmatpush.bf16.msra.mxu0 %v1708
        %1718 = vmatpush.bf16.msra.mxu0 %v1707
        %1719 = vmatpush.bf16.msra.mxu0 %v1706
        %1720 = vmatpush.bf16.msra.mxu0 %v1705
        %1721 = vmatpush.bf16.msra.mxu0 %v1704
        %1722 = vmatpush.bf16.msra.mxu0 %v1703
        %1723 = vmatpush.bf16.msra.mxu0 %v1702
        %1724 = vmatpush.bf16.msra.mxu0 %v1701
        %1725 = vmatmul.bf16.gmra.mxu0 %v531
        %v1726 = vpop.f32.mrf.mxu0
        %v1727 = vadd.f32 0.0, %v1726
        %v1728 = vpop.f32.mrf.mxu0
        %1729 = vdwg.mxu0
        %v1746 = vunpack.c.l.b16 %v1636
        %v1747 = vunpack.c.l.b16 %v1637
        %v1748 = vunpack.c.l.b16 %v1638
        %v1749 = vunpack.c.l.b16 %v1639
        %v1750 = vunpack.c.l.b16 %v1640
        %v1751 = vunpack.c.l.b16 %v1641
        %v1752 = vunpack.c.l.b16 %v1642
        %v1753 = vunpack.c.l.b16 %v1643
        %v1754 = vunpack.c.l.b16 %v1644
        %v1755 = vunpack.c.l.b16 %v1645
        %v1756 = vunpack.c.l.b16 %v1646
        %v1757 = vunpack.c.l.b16 %v1647
        %v1758 = vunpack.c.l.b16 %v1648
        %v1759 = vunpack.c.l.b16 %v1649
        %v1760 = vunpack.c.l.b16 %v1650
        %v1761 = vunpack.c.l.b16 %v1651
        %v1762 = vpack.c.b16 %v1747, %v1746
        %v1763 = vpack.c.b16 %v1749, %v1748
        %v1764 = vpack.c.b16 %v1751, %v1750
        %v1765 = vpack.c.b16 %v1753, %v1752
        %v1766 = vpack.c.b16 %v1755, %v1754
        %v1767 = vpack.c.b16 %v1757, %v1756
        %v1768 = vpack.c.b16 %v1759, %v1758
        %v1769 = vpack.c.b16 %v1761, %v1760
        %1778 = vmatpush.bf16.msra.mxu0 %v1769
        %1779 = vmatpush.bf16.msra.mxu0 %v1768
        %1780 = vmatpush.bf16.msra.mxu0 %v1767
        %1781 = vmatpush.bf16.msra.mxu0 %v1766
        %1782 = vmatpush.bf16.msra.mxu0 %v1765
        %1783 = vmatpush.bf16.msra.mxu0 %v1764
        %1784 = vmatpush.bf16.msra.mxu0 %v1763
        %1785 = vmatpush.bf16.msra.mxu0 %v1762
        %1786 = vmatmul.bf16.gmra.mxu0 %v1668
        %v1787 = vpop.f32.mrf.mxu0
        %v1788 = vadd.f32 %v1727, %v1787
        %v1789 = vpop.f32.mrf.mxu0
        %1790 = vdwg.mxu0
        %v1791 = vld [vmem:[#allocation2 + $0x420] sm:$0xff]
        %v1792 = vld [vmem:[#allocation2 + $0x428] sm:$0xff]
        %v1793 = vld [vmem:[#allocation2 + $0x430] sm:$0xff]
        %v1794 = vld [vmem:[#allocation2 + $0x438] sm:$0xff]
        %v1795 = vld [vmem:[#allocation2 + $0x440] sm:$0xff]
        %v1796 = vld [vmem:[#allocation2 + $0x448] sm:$0xff]
        %v1797 = vld [vmem:[#allocation2 + $0x450] sm:$0xff]
        %v1798 = vld [vmem:[#allocation2 + $0x458] sm:$0xff]
        %v1799 = vld [vmem:[#allocation2 + $0x460] sm:$0xff]
        %v1800 = vld [vmem:[#allocation2 + $0x468] sm:$0xff]
        %v1801 = vld [vmem:[#allocation2 + $0x470] sm:$0xff]
        %v1802 = vld [vmem:[#allocation2 + $0x478] sm:$0xff]
        %v1803 = vld [vmem:[#allocation2 + $0x480] sm:$0xff]
        %v1804 = vld [vmem:[#allocation2 + $0x488] sm:$0xff]
        %v1805 = vld [vmem:[#allocation2 + $0x490] sm:$0xff]
        %v1806 = vld [vmem:[#allocation2 + $0x498] sm:$0xff]
        %v1807 = vpack.c.bf16 %v1788, %v1788
        %s1808 = scalar_lea.vmem [#allocation5], 112
        %v1809 = vld [vmem:[%s1808] ss:$8 sm:$0x3]
        %v1811 = vperm.slane %v1809, 0
        %v1812 = vperm.slane %v1809, 1
        %v1831 = vunpack.c.l.b16 %v1791
        %v1832 = vunpack.c.h.b16 %v1791
        %v1833 = vunpack.c.l.b16 %v1792
        %v1834 = vunpack.c.h.b16 %v1792
        %v1835 = vunpack.c.l.b16 %v1793
        %v1836 = vunpack.c.h.b16 %v1793
        %v1837 = vunpack.c.l.b16 %v1794
        %v1838 = vunpack.c.h.b16 %v1794
        %v1839 = vunpack.c.l.b16 %v1795
        %v1840 = vunpack.c.h.b16 %v1795
        %v1841 = vunpack.c.l.b16 %v1796
        %v1842 = vunpack.c.h.b16 %v1796
        %v1843 = vunpack.c.l.b16 %v1797
        %v1844 = vunpack.c.h.b16 %v1797
        %v1845 = vunpack.c.l.b16 %v1798
        %v1846 = vunpack.c.h.b16 %v1798
        %v1847 = vunpack.c.l.b16 %v1799
        %v1848 = vunpack.c.h.b16 %v1799
        %v1849 = vunpack.c.l.b16 %v1800
        %v1850 = vunpack.c.h.b16 %v1800
        %v1851 = vunpack.c.l.b16 %v1801
        %v1852 = vunpack.c.h.b16 %v1801
        %v1853 = vunpack.c.l.b16 %v1802
        %v1854 = vunpack.c.h.b16 %v1802
        %v1855 = vunpack.c.l.b16 %v1803
        %v1856 = vunpack.c.h.b16 %v1803
        %v1857 = vunpack.c.l.b16 %v1804
        %v1858 = vunpack.c.h.b16 %v1804
        %v1859 = vunpack.c.l.b16 %v1805
        %v1860 = vunpack.c.h.b16 %v1805
        %v1861 = vunpack.c.l.b16 %v1806
        %v1862 = vunpack.c.h.b16 %v1806
        %v1863 = vpack.c.b16 %v1833, %v1831
        %v1864 = vpack.c.b16 %v1834, %v1832
        %v1865 = vpack.c.b16 %v1837, %v1835
        %v1866 = vpack.c.b16 %v1838, %v1836
        %v1867 = vpack.c.b16 %v1841, %v1839
        %v1868 = vpack.c.b16 %v1842, %v1840
        %v1869 = vpack.c.b16 %v1845, %v1843
        %v1870 = vpack.c.b16 %v1846, %v1844
        %v1871 = vpack.c.b16 %v1849, %v1847
        %v1872 = vpack.c.b16 %v1850, %v1848
        %v1873 = vpack.c.b16 %v1853, %v1851
        %v1874 = vpack.c.b16 %v1854, %v1852
        %v1875 = vpack.c.b16 %v1857, %v1855
        %v1876 = vpack.c.b16 %v1858, %v1856
        %v1877 = vpack.c.b16 %v1861, %v1859
        %v1878 = vpack.c.b16 %v1862, %v1860
        %1895 = vmatpush.bf16.msra.mxu0 %v1877
        %1896 = vmatpush.bf16.msra.mxu0 %v1875
        %1897 = vmatpush.bf16.msra.mxu0 %v1873
        %1898 = vmatpush.bf16.msra.mxu0 %v1871
        %1899 = vmatpush.bf16.msra.mxu0 %v1869
        %1900 = vmatpush.bf16.msra.mxu0 %v1867
        %1901 = vmatpush.bf16.msra.mxu0 %v1865
        %1902 = vmatpush.bf16.msra.mxu0 %v1863
        %1903 = vmatmul.bf16.gmra.mxu0 %v1807
        %v1904 = vpop.f32.mrf.mxu0
        %v1905 = vadd.f32 %v1811, %v1904
        %v1906 = vpop.f32.mrf.mxu0
        %1907 = vdwg.mxu0
        %1908 = vmatpush.bf16.msra.mxu0 %v1878
        %1909 = vmatpush.bf16.msra.mxu0 %v1876
        %1910 = vmatpush.bf16.msra.mxu0 %v1874
        %1911 = vmatpush.bf16.msra.mxu0 %v1872
        %1912 = vmatpush.bf16.msra.mxu0 %v1870
        %1913 = vmatpush.bf16.msra.mxu0 %v1868
        %1914 = vmatpush.bf16.msra.mxu0 %v1866
        %1915 = vmatpush.bf16.msra.mxu0 %v1864
        %1916 = vmatmul.bf16.gmra.mxu0 %v1807
        %v1917 = vpop.f32.mrf.mxu0
        %v1918 = vadd.f32 %v1812, %v1917
        %v1919 = vpop.f32.mrf.mxu0
        %1920 = vdwg.mxu0
        %s1921 = scalar_lea.vmem [#allocation5], 113
        %v1922 = vld [vmem:[%s1921] ss:$8 sm:$0x3]
        %v1924 = vperm.slane %v1922, 0
        %v1925 = vperm.slane %v1922, 1
        %s1928 = scalar_lea.vmem [#allocation5], 114
        %v1929 = vld [vmem:[%s1928] ss:$8 sm:$0x3]
        %v1931 = vperm.slane %v1929, 0
        %v1932 = vperm.slane %v1929, 1
        %v1935 = vrot.slane %v1905, 4
        %v1936 = vadd.f32 %v1905, %v1935
        %v1937 = vrot.slane %v1936, 2
        %v1938 = vadd.f32 %v1936, %v1937
        %v1939 = vrot.slane %v1938, 1
        %v1940 = vadd.f32 %v1938, %v1939
        %v1941 = vrot.slane %v1918, 4
        %v1942 = vadd.f32 %v1918, %v1941
        %v1943 = vrot.slane %v1942, 2
        %v1944 = vadd.f32 %v1942, %v1943
        %v1945 = vrot.slane %v1944, 1
        %v1946 = vadd.f32 %v1944, %v1945
        %v1947 = vmul.f32 %v1940, %v377
        %v1948 = vmul.f32 %v1946, %v377
        %v1949 = vsub.f32 %v1905, %v1947
        %v1950 = vsub.f32 %v1918, %v1948
        %v1951 = vmul.f32 %v1949, %v1949
        %v1952 = vmul.f32 %v1950, %v1950
        %v1953 = vrot.slane %v1951, 4
        %v1954 = vadd.f32 %v1951, %v1953
        %v1955 = vrot.slane %v1954, 2
        %v1956 = vadd.f32 %v1954, %v1955
        %v1957 = vrot.slane %v1956, 1
        %v1958 = vadd.f32 %v1956, %v1957
        %v1959 = vrot.slane %v1952, 4
        %v1960 = vadd.f32 %v1952, %v1959
        %v1961 = vrot.slane %v1960, 2
        %v1962 = vadd.f32 %v1960, %v1961
        %v1963 = vrot.slane %v1962, 1
        %v1964 = vadd.f32 %v1962, %v1963
        %v1965 = vmul.f32 %v1958, %v377
        %v1966 = vmul.f32 %v1964, %v377
        %v1967 = vadd.f32 %v1965, 1e-05
        %v1968 = vadd.f32 %v1966, 1e-05
        %v1969 = vrsqrt.pop %v1967
        %v1970 = vmul.f32 %v1969, %v1967
        %v1971 = vmul.f32 %v1970, %v1969
        %v1972 = vmul.f32 0.5, %v1971
        %v1973 = vsub.f32 1.5, %v1972
        %v1974 = vmul.f32 %v1969, %v1973
        %vm1975 = vweird.f32 %v1967
        %vm1976 = vweird.f32 %v1969
        %vm1977 = vmor %vm1975, %vm1976
        %v1978 = vsel %vm1977, %v1969, %v1974
        %v1979 = vrsqrt.pop %v1968
        %v1980 = vmul.f32 %v1979, %v1968
        %v1981 = vmul.f32 %v1980, %v1979
        %v1982 = vmul.f32 0.5, %v1981
        %v1983 = vsub.f32 1.5, %v1982
        %v1984 = vmul.f32 %v1979, %v1983
        %vm1985 = vweird.f32 %v1968
        %vm1986 = vweird.f32 %v1979
        %vm1987 = vmor %vm1985, %vm1986
        %v1988 = vsel %vm1987, %v1979, %v1984
        %v1989 = vmul.f32 %v1949, %v1978
        %v1990 = vmul.f32 %v1950, %v1988
        %v1991 = vmul.f32 %v1989, %v1924
        %v1992 = vmul.f32 %v1990, %v1925
        %v1993 = vadd.f32 %v1991, %v1931
        %v1994 = vadd.f32 %v1992, %v1932
        %v1995 = vmax.f32 %v1993, 0.0
        %v1996 = vmax.f32 %v1994, 0.0
        %v1997 = vld [vmem:[#allocation2 + $0x4a0] sm:$0xff]
        %v1998 = vld [vmem:[#allocation2 + $0x4a8] sm:$0xff]
        %v1999 = vld [vmem:[#allocation2 + $0x4b0] sm:$0xff]
        %v2000 = vld [vmem:[#allocation2 + $0x4b8] sm:$0xff]
        %v2001 = vld [vmem:[#allocation2 + $0x4c0] sm:$0xff]
        %v2002 = vld [vmem:[#allocation2 + $0x4c8] sm:$0xff]
        %v2003 = vld [vmem:[#allocation2 + $0x4d0] sm:$0xff]
        %v2004 = vld [vmem:[#allocation2 + $0x4d8] sm:$0xff]
        %v2005 = vld [vmem:[#allocation2 + $0x4e0] sm:$0xff]
        %v2006 = vld [vmem:[#allocation2 + $0x4e8] sm:$0xff]
        %v2007 = vld [vmem:[#allocation2 + $0x4f0] sm:$0xff]
        %v2008 = vld [vmem:[#allocation2 + $0x4f8] sm:$0xff]
        %v2009 = vld [vmem:[#allocation2 + $0x500] sm:$0xff]
        %v2010 = vld [vmem:[#allocation2 + $0x508] sm:$0xff]
        %v2011 = vld [vmem:[#allocation2 + $0x510] sm:$0xff]
        %v2012 = vld [vmem:[#allocation2 + $0x518] sm:$0xff]
        %v2013 = vld [vmem:[#allocation2 + $0x520] sm:$0xff]
        %v2014 = vld [vmem:[#allocation2 + $0x528] sm:$0xff]
        %v2015 = vld [vmem:[#allocation2 + $0x530] sm:$0xff]
        %v2016 = vld [vmem:[#allocation2 + $0x538] sm:$0xff]
        %v2017 = vld [vmem:[#allocation2 + $0x540] sm:$0xff]
        %v2018 = vld [vmem:[#allocation2 + $0x548] sm:$0xff]
        %v2019 = vld [vmem:[#allocation2 + $0x550] sm:$0xff]
        %v2020 = vld [vmem:[#allocation2 + $0x558] sm:$0xff]
        %v2021 = vld [vmem:[#allocation2 + $0x560] sm:$0xff]
        %v2022 = vld [vmem:[#allocation2 + $0x568] sm:$0xff]
        %v2023 = vld [vmem:[#allocation2 + $0x570] sm:$0xff]
        %v2024 = vld [vmem:[#allocation2 + $0x578] sm:$0xff]
        %v2025 = vld [vmem:[#allocation2 + $0x580] sm:$0xff]
        %v2026 = vld [vmem:[#allocation2 + $0x588] sm:$0xff]
        %v2027 = vld [vmem:[#allocation2 + $0x590] sm:$0xff]
        %v2028 = vld [vmem:[#allocation2 + $0x598] sm:$0xff]
        %v2029 = vpack.c.bf16 %v1995, %v1995
        %v2030 = vpack.c.bf16 %v1996, %v1996
        %s2031 = scalar_lea.vmem [#allocation5], 115
        %v2032 = vld [vmem:[%s2031] ss:$8 sm:$0x3]
        %v2034 = vperm.slane %v2032, 0
        %v2035 = vperm.slane %v2032, 1
        %v2070 = vunpack.c.l.b16 %v1997
        %v2071 = vunpack.c.h.b16 %v1997
        %v2072 = vunpack.c.l.b16 %v1998
        %v2073 = vunpack.c.h.b16 %v1998
        %v2074 = vunpack.c.l.b16 %v1999
        %v2075 = vunpack.c.h.b16 %v1999
        %v2076 = vunpack.c.l.b16 %v2000
        %v2077 = vunpack.c.h.b16 %v2000
        %v2078 = vunpack.c.l.b16 %v2001
        %v2079 = vunpack.c.h.b16 %v2001
        %v2080 = vunpack.c.l.b16 %v2002
        %v2081 = vunpack.c.h.b16 %v2002
        %v2082 = vunpack.c.l.b16 %v2003
        %v2083 = vunpack.c.h.b16 %v2003
        %v2084 = vunpack.c.l.b16 %v2004
        %v2085 = vunpack.c.h.b16 %v2004
        %v2086 = vunpack.c.l.b16 %v2005
        %v2087 = vunpack.c.h.b16 %v2005
        %v2088 = vunpack.c.l.b16 %v2006
        %v2089 = vunpack.c.h.b16 %v2006
        %v2090 = vunpack.c.l.b16 %v2007
        %v2091 = vunpack.c.h.b16 %v2007
        %v2092 = vunpack.c.l.b16 %v2008
        %v2093 = vunpack.c.h.b16 %v2008
        %v2094 = vunpack.c.l.b16 %v2009
        %v2095 = vunpack.c.h.b16 %v2009
        %v2096 = vunpack.c.l.b16 %v2010
        %v2097 = vunpack.c.h.b16 %v2010
        %v2098 = vunpack.c.l.b16 %v2011
        %v2099 = vunpack.c.h.b16 %v2011
        %v2100 = vunpack.c.l.b16 %v2012
        %v2101 = vunpack.c.h.b16 %v2012
        %v2102 = vunpack.c.l.b16 %v2013
        %v2103 = vunpack.c.h.b16 %v2013
        %v2104 = vunpack.c.l.b16 %v2014
        %v2105 = vunpack.c.h.b16 %v2014
        %v2106 = vunpack.c.l.b16 %v2015
        %v2107 = vunpack.c.h.b16 %v2015
        %v2108 = vunpack.c.l.b16 %v2016
        %v2109 = vunpack.c.h.b16 %v2016
        %v2110 = vunpack.c.l.b16 %v2017
        %v2111 = vunpack.c.h.b16 %v2017
        %v2112 = vunpack.c.l.b16 %v2018
        %v2113 = vunpack.c.h.b16 %v2018
        %v2114 = vunpack.c.l.b16 %v2019
        %v2115 = vunpack.c.h.b16 %v2019
        %v2116 = vunpack.c.l.b16 %v2020
        %v2117 = vunpack.c.h.b16 %v2020
        %v2118 = vunpack.c.l.b16 %v2021
        %v2119 = vunpack.c.h.b16 %v2021
        %v2120 = vunpack.c.l.b16 %v2022
        %v2121 = vunpack.c.h.b16 %v2022
        %v2122 = vunpack.c.l.b16 %v2023
        %v2123 = vunpack.c.h.b16 %v2023
        %v2124 = vunpack.c.l.b16 %v2024
        %v2125 = vunpack.c.h.b16 %v2024
        %v2126 = vunpack.c.l.b16 %v2025
        %v2127 = vunpack.c.h.b16 %v2025
        %v2128 = vunpack.c.l.b16 %v2026
        %v2129 = vunpack.c.h.b16 %v2026
        %v2130 = vunpack.c.l.b16 %v2027
        %v2131 = vunpack.c.h.b16 %v2027
        %v2132 = vunpack.c.l.b16 %v2028
        %v2133 = vunpack.c.h.b16 %v2028
        %v2134 = vpack.c.b16 %v2072, %v2070
        %v2135 = vpack.c.b16 %v2073, %v2071
        %v2136 = vpack.c.b16 %v2076, %v2074
        %v2137 = vpack.c.b16 %v2077, %v2075
        %v2138 = vpack.c.b16 %v2080, %v2078
        %v2139 = vpack.c.b16 %v2081, %v2079
        %v2140 = vpack.c.b16 %v2084, %v2082
        %v2141 = vpack.c.b16 %v2085, %v2083
        %v2142 = vpack.c.b16 %v2088, %v2086
        %v2143 = vpack.c.b16 %v2089, %v2087
        %v2144 = vpack.c.b16 %v2092, %v2090
        %v2145 = vpack.c.b16 %v2093, %v2091
        %v2146 = vpack.c.b16 %v2096, %v2094
        %v2147 = vpack.c.b16 %v2097, %v2095
        %v2148 = vpack.c.b16 %v2100, %v2098
        %v2149 = vpack.c.b16 %v2101, %v2099
        %v2150 = vpack.c.b16 %v2104, %v2102
        %v2151 = vpack.c.b16 %v2105, %v2103
        %v2152 = vpack.c.b16 %v2108, %v2106
        %v2153 = vpack.c.b16 %v2109, %v2107
        %v2154 = vpack.c.b16 %v2112, %v2110
        %v2155 = vpack.c.b16 %v2113, %v2111
        %v2156 = vpack.c.b16 %v2116, %v2114
        %v2157 = vpack.c.b16 %v2117, %v2115
        %v2158 = vpack.c.b16 %v2120, %v2118
        %v2159 = vpack.c.b16 %v2121, %v2119
        %v2160 = vpack.c.b16 %v2124, %v2122
        %v2161 = vpack.c.b16 %v2125, %v2123
        %v2162 = vpack.c.b16 %v2128, %v2126
        %v2163 = vpack.c.b16 %v2129, %v2127
        %v2164 = vpack.c.b16 %v2132, %v2130
        %v2165 = vpack.c.b16 %v2133, %v2131
        %2198 = vmatpush.bf16.msra.mxu0 %v2148
        %2199 = vmatpush.bf16.msra.mxu0 %v2146
        %2200 = vmatpush.bf16.msra.mxu0 %v2144
        %2201 = vmatpush.bf16.msra.mxu0 %v2142
        %2202 = vmatpush.bf16.msra.mxu0 %v2140
        %2203 = vmatpush.bf16.msra.mxu0 %v2138
        %2204 = vmatpush.bf16.msra.mxu0 %v2136
        %2205 = vmatpush.bf16.msra.mxu0 %v2134
        %2206 = vmatmul.bf16.gmra.mxu0 %v2029
        %v2207 = vpop.f32.mrf.mxu0
        %v2208 = vadd.f32 %v2034, %v2207
        %v2209 = vpop.f32.mrf.mxu0
        %2210 = vdwg.mxu0
        %2211 = vmatpush.bf16.msra.mxu0 %v2164
        %2212 = vmatpush.bf16.msra.mxu0 %v2162
        %2213 = vmatpush.bf16.msra.mxu0 %v2160
        %2214 = vmatpush.bf16.msra.mxu0 %v2158
        %2215 = vmatpush.bf16.msra.mxu0 %v2156
        %2216 = vmatpush.bf16.msra.mxu0 %v2154
        %2217 = vmatpush.bf16.msra.mxu0 %v2152
        %2218 = vmatpush.bf16.msra.mxu0 %v2150
        %2219 = vmatmul.bf16.gmra.mxu0 %v2030
        %v2220 = vpop.f32.mrf.mxu0
        %v2221 = vadd.f32 %v2208, %v2220
        %v2222 = vpop.f32.mrf.mxu0
        %2223 = vdwg.mxu0
        %2224 = vmatpush.bf16.msra.mxu0 %v2149
        %2225 = vmatpush.bf16.msra.mxu0 %v2147
        %2226 = vmatpush.bf16.msra.mxu0 %v2145
        %2227 = vmatpush.bf16.msra.mxu0 %v2143
        %2228 = vmatpush.bf16.msra.mxu0 %v2141
        %2229 = vmatpush.bf16.msra.mxu0 %v2139
        %2230 = vmatpush.bf16.msra.mxu0 %v2137
        %2231 = vmatpush.bf16.msra.mxu0 %v2135
        %2232 = vmatmul.bf16.gmra.mxu0 %v2029
        %v2233 = vpop.f32.mrf.mxu0
        %v2234 = vadd.f32 %v2035, %v2233
        %v2235 = vpop.f32.mrf.mxu0
        %2236 = vdwg.mxu0
        %2237 = vmatpush.bf16.msra.mxu0 %v2165
        %2238 = vmatpush.bf16.msra.mxu0 %v2163
        %2239 = vmatpush.bf16.msra.mxu0 %v2161
        %2240 = vmatpush.bf16.msra.mxu0 %v2159
        %2241 = vmatpush.bf16.msra.mxu0 %v2157
        %2242 = vmatpush.bf16.msra.mxu0 %v2155
        %2243 = vmatpush.bf16.msra.mxu0 %v2153
        %2244 = vmatpush.bf16.msra.mxu0 %v2151
        %2245 = vmatmul.bf16.gmra.mxu0 %v2030
        %v2246 = vpop.f32.mrf.mxu0
        %v2247 = vadd.f32 %v2234, %v2246
        %v2248 = vpop.f32.mrf.mxu0
        %2249 = vdwg.mxu0
        %s2250 = scalar_lea.vmem [#allocation5], 116
        %v2251 = vld [vmem:[%s2250] ss:$8 sm:$0x3]
        %v2253 = vperm.slane %v2251, 0
        %v2254 = vperm.slane %v2251, 1
        %s2257 = scalar_lea.vmem [#allocation5], 117
        %v2258 = vld [vmem:[%s2257] ss:$8 sm:$0x3]
        %v2260 = vperm.slane %v2258, 0
        %v2261 = vperm.slane %v2258, 1
        %v2264 = vrot.slane %v2221, 4
        %v2265 = vadd.f32 %v2221, %v2264
        %v2266 = vrot.slane %v2265, 2
        %v2267 = vadd.f32 %v2265, %v2266
        %v2268 = vrot.slane %v2267, 1
        %v2269 = vadd.f32 %v2267, %v2268
        %v2270 = vrot.slane %v2247, 4
        %v2271 = vadd.f32 %v2247, %v2270
        %v2272 = vrot.slane %v2271, 2
        %v2273 = vadd.f32 %v2271, %v2272
        %v2274 = vrot.slane %v2273, 1
        %v2275 = vadd.f32 %v2273, %v2274
        %v2276 = vmul.f32 %v2269, %v377
        %v2277 = vmul.f32 %v2275, %v377
        %v2278 = vsub.f32 %v2221, %v2276
        %v2279 = vsub.f32 %v2247, %v2277
        %v2280 = vmul.f32 %v2278, %v2278
        %v2281 = vmul.f32 %v2279, %v2279
        %v2282 = vrot.slane %v2280, 4
        %v2283 = vadd.f32 %v2280, %v2282
        %v2284 = vrot.slane %v2283, 2
        %v2285 = vadd.f32 %v2283, %v2284
        %v2286 = vrot.slane %v2285, 1
        %v2287 = vadd.f32 %v2285, %v2286
        %v2288 = vrot.slane %v2281, 4
        %v2289 = vadd.f32 %v2281, %v2288
        %v2290 = vrot.slane %v2289, 2
        %v2291 = vadd.f32 %v2289, %v2290
        %v2292 = vrot.slane %v2291, 1
        %v2293 = vadd.f32 %v2291, %v2292
        %v2294 = vmul.f32 %v2287, %v377
        %v2295 = vmul.f32 %v2293, %v377
        %v2296 = vadd.f32 %v2294, 1e-05
        %v2297 = vadd.f32 %v2295, 1e-05
        %v2298 = vrsqrt.pop %v2296
        %v2299 = vmul.f32 %v2298, %v2296
        %v2300 = vmul.f32 %v2299, %v2298
        %v2301 = vmul.f32 0.5, %v2300
        %v2302 = vsub.f32 1.5, %v2301
        %v2303 = vmul.f32 %v2298, %v2302
        %vm2304 = vweird.f32 %v2296
        %vm2305 = vweird.f32 %v2298
        %vm2306 = vmor %vm2304, %vm2305
        %v2307 = vsel %vm2306, %v2298, %v2303
        %v2308 = vrsqrt.pop %v2297
        %v2309 = vmul.f32 %v2308, %v2297
        %v2310 = vmul.f32 %v2309, %v2308
        %v2311 = vmul.f32 0.5, %v2310
        %v2312 = vsub.f32 1.5, %v2311
        %v2313 = vmul.f32 %v2308, %v2312
        %vm2314 = vweird.f32 %v2297
        %vm2315 = vweird.f32 %v2308
        %vm2316 = vmor %vm2314, %vm2315
        %v2317 = vsel %vm2316, %v2308, %v2313
        %v2318 = vmul.f32 %v2278, %v2307
        %v2319 = vmul.f32 %v2279, %v2317
        %v2320 = vmul.f32 %v2318, %v2253
        %v2321 = vmul.f32 %v2319, %v2254
        %v2322 = vadd.f32 %v2320, %v2260
        %v2323 = vadd.f32 %v2321, %v2261
        %v2324 = vmax.f32 %v2322, 0.0
        %v2325 = vmax.f32 %v2323, 0.0
        %v2326 = vxor.u32 %v2324, 2147483648
        %v2327 = vxor.u32 %v2325, 2147483648
        %v2328 = vmul.f32 %v2326, 1.442695
        %v2329 = vpow.pop %v2328
        %v2330 = vmul.f32 %v2327, 1.442695
        %v2331 = vpow.pop %v2330
        %v2332 = vadd.f32 %v2329, 1.0
        %v2333 = vadd.f32 %v2331, 1.0
        %v2334 = vrcp.pop %v2332
        %v2335 = vmul.f32 %v2332, %v2334
        %v2336 = vsub.f32 1.0, %v2335
        %v2337 = vmul.f32 %v2334, %v2336
        %v2338 = vadd.f32 %v2334, %v2337
        %vm2339 = vweird.f32 %v2332
        %vm2340 = vweird.f32 %v2334
        %vm2341 = vmor %vm2339, %vm2340
        %v2342 = vsel %vm2341, %v2334, %v2338
        %v2343 = vand.u32 2147483647, %v2332
        %vm2344 = vcmp.eq.f32.partialorder %v2343, 8.507059e+37
        %v2345 = vand.u32 %v2332, 2147483648
        %v2346 = vor.u32 1.1754944e-38, %v2345
        %v2347 = vsel %vm2344, %v2346, %v2342
        %v2348 = vmul.f32 1.0, %v2347
        %v2349 = vrcp.pop %v2333
        %v2350 = vmul.f32 %v2333, %v2349
        %v2351 = vsub.f32 1.0, %v2350
        %v2352 = vmul.f32 %v2349, %v2351
        %v2353 = vadd.f32 %v2349, %v2352
        %vm2354 = vweird.f32 %v2333
        %vm2355 = vweird.f32 %v2349
        %vm2356 = vmor %vm2354, %vm2355
        %v2357 = vsel %vm2356, %v2349, %v2353
        %v2358 = vand.u32 2147483647, %v2333
        %vm2359 = vcmp.eq.f32.partialorder %v2358, 8.507059e+37
        %v2360 = vand.u32 %v2333, 2147483648
        %v2361 = vor.u32 1.1754944e-38, %v2360
        %v2362 = vsel %vm2359, %v2361, %v2357
        %v2363 = vmul.f32 1.0, %v2362
        %2364 = vst [vmem:[%s197] sm:$0xff] %v2348
        %2365 = vst [vmem:[%s197 + $0x8] sm:$0xff] %v2363
        %s2366 = sand.u32 %s95, 1
        %s2367 = scalar_lea.sflag [#allocation4], %s2366
        %s2368 = sand.u32 %s95, 1
        %s2369 = smul.addr %s2368, 16
        %s2370 = scalar_lea.vmem [#allocation7], %s2369
        // Predicated region
        $region41: #{build_unet_forward.1} parent=31 // pred_check
          %p2371 = pneg %p105
        $region42: #{build_unet_forward.1} parent=31 // pred_check_branch
          %2373 = sbr.rel (%p2371) target = $region44
        $region43: #{build_unet_forward.1} parent=31 // pred_region
          %2375 = vsyncadd %s2367, 0
          %s2376 = smul.addr %s19, 2
          %s2377 = smul.addr %s2376, 8
          %s2378 = scalar_lea.hbm %s3, %s2377
          %s2380 = sshll.u32 %s2370, 4
          %s2381 = int_to_ptr.vmem [resolvable:$true] %s2380
          %s2382 = sshll.u32 %s2378, 4
          %s2383 = int_to_ptr.hbm [resolvable:$true] %s2382
          %2385 = dma.vmem_to_hbm [thread:$0]  %s2381, 256, %s2383, %s2367
        $region44: #{build_unet_forward.1} parent=31 // pred_fallthru
          _
      $region32: #{build_unet_forward.1} parent=5 // pred_fallthru
        _
      %p2386 = scmp.le.s32.totalorder 2, %s14
      // Predicated region
      $region45: #{build_unet_forward.1} parent=5 // pred_check
        %p2387 = pneg %p2386
      $region46: #{build_unet_forward.1} parent=5 // pred_check_branch
        %2389 = sbr.rel (%p2387) target = $region48
      $region47: #{build_unet_forward.1} parent=5 // pred_region
        %s2390 = ssub.s32 %s14, 2
        // Predicated region
        $region49: #{build_unet_forward.1} parent=47 // pred_check
          %p2391 = pneg %p111
        $region50: #{build_unet_forward.1} parent=47 // pred_check_branch
          %2393 = sbr.rel (%p2391) target = $region52
        $region51: #{build_unet_forward.1} parent=47 // pred_region
          %s2394 = sand.u32 %s96, 1
          %s2395 = scalar_lea.sflag [#allocation4], %s2394
          %s2396 = sand.u32 %s96, 1
          %s2397 = smul.addr %s2396, 16
          %s2398 = scalar_lea.vmem [#allocation7], %s2397
          %2400 = dma.done %s2395, 256
        $region52: #{build_unet_forward.1} parent=47 // pred_fallthru
          _
      $region48: #{build_unet_forward.1} parent=5 // pred_fallthru
        _
    $region6: #{build_unet_forward.1} parent=1 // loop_footer
      %s18 = sadd.s32 1, %s14
    $region7: #{build_unet_forward.1} parent=1 // loop_footer_branch
      %13 = sbr.rel target = $region3
    $region8: #{build_unet_forward.1} parent=1 // loop_exit
      _
    %2401 = vsyncpa [#allocation3], 1
    %s2402 = scalar_lea.sflag [#allocation3], 1
    %2403 = vsyncpa %s2402, 1
    %2404 = vsyncpa [#allocation6], 1
    %2405 = vsyncpa [#allocation4], 1
    %s2406 = scalar_lea.sflag [#allocation4], 1
    %2407 = vsyncpa %s2406, 1

</llo_original>
